<compile_context>
chip_gen: v6e
topology: v6e:2x2x1
jax: 0.10.0
libtpu: 0.0.40
codegen_flags: <defaults>
</compile_context>

<pallas_src>
import numpy as np
import jax
import jax.numpy as jnp
from jax import lax
from jax.experimental import pallas as pl
from jax.experimental.pallas import tpu as pltpu

# ---- model hyper-parameters (module defaults) ----
INPUT_DIM = 19
HIDDEN = 16
OUTPUT_DIM = 1
NITERS = 2
EDGE_FEATURE_DIM = 12
EDGE_HIDDEN = 16
NEG_SLOPE = 0.01      # nn.LeakyReLU default
EPS = 1e-4
EN_IN = 2 * HIDDEN + EDGE_HIDDEN + EDGE_FEATURE_DIM   # 60

# ---- packed-weight layout (static, computed at import time) ----
WEIGHT_SPECS = [
    ("in_w1", (INPUT_DIM, HIDDEN)), ("in_b1", (1, HIDDEN)),
    ("in_w2", (HIDDEN, HIDDEN)), ("in_b2", (1, HIDDEN)),
    ("ein_w1", (EDGE_FEATURE_DIM, EDGE_HIDDEN)), ("ein_b1", (1, EDGE_HIDDEN)),
    ("ein_w2", (EDGE_HIDDEN, EDGE_HIDDEN)), ("ein_b2", (1, EDGE_HIDDEN)),
    ("att_w1", (EDGE_HIDDEN, 2 * EDGE_HIDDEN)), ("att_b1", (1, 2 * EDGE_HIDDEN)),
    ("att_w2", (2 * EDGE_HIDDEN, 2)), ("att_b2", (1, 2)),
]
for _i in range(NITERS):
    WEIGHT_SPECS += [
        (f"c{_i}_w1", (2 * HIDDEN, 2 * HIDDEN)), (f"c{_i}_b1", (1, 2 * HIDDEN)),
        (f"c{_i}_w2", (2 * HIDDEN, HIDDEN)), (f"c{_i}_b2", (1, HIDDEN)),
    ]
WEIGHT_SPECS += [
    ("en_w1", (EN_IN, HIDDEN)), ("en_b1", (1, HIDDEN)),
    ("en_w2", (HIDDEN, OUTPUT_DIM)), ("en_b2", (1, OUTPUT_DIM)),
]

PACK_COLS = max(c for _, (_r, c) in WEIGHT_SPECS)   # 32


def _build_layout():
    layout = {}
    off = 0
    for name, (r, c) in WEIGHT_SPECS:
        layout[name] = (off, r, c)
        off += ((r + 7) // 8) * 8          # keep every block sublane-aligned
    return layout, off


LAYOUT, PACK_ROWS = _build_layout()        # (424, 32) f32 buffer


# ---- elementwise helpers (kept in f32; cheap at these sizes, safe on v5e) ----
def _leaky(x):
    return jnp.where(x >= 0, x, NEG_SLOPE * x)


def _sigmoid(x):
    # numerically stable: only exponentiates non-positive arguments
    z = jnp.exp(-jnp.abs(x))
    return jnp.where(x >= 0, 1.0, z) / (1.0 + z)


def _normalize(a):
    # (a - mean) / (population_std + 1e-4) per column, matching torch.std(unbiased=False)
    mean = jnp.mean(a, axis=0, keepdims=True)
    var = jnp.mean((a - mean) ** 2, axis=0, keepdims=True)
    return (a - mean) / (jnp.sqrt(var) + EPS)


# ---- the fused kernel ----
def gnn_kernel(x_ref, ef_ref, idx_r_ref, idx_c_ref, w_ref, out_ref):
    def W(name):
        off, r, c = LAYOUT[name]
        return w_ref[off:off + r, 0:c]      # static slice of the packed weight buffer

    X = x_ref[...]              # (N, INPUT_DIM)
    ef = ef_ref[...]            # (E, EDGE_FEATURE_DIM)
    N = X.shape[0]
    E = ef.shape[0]
    H = HIDDEN

    # ---- feature normalization ----
    X_norm = _normalize(X)
    ef_norm = _normalize(ef)

    # ---- edge input network ----
    h = _leaky(ef_norm @ W("ein_w1") + W("ein_b1"))
    ef_nn = _leaky(h @ W("ein_w2") + W("ein_b2"))            # (E, EDGE_HIDDEN)

    # ---- fused attention heads (direct | reverse) ----
    a = _leaky(ef_nn @ W("att_w1") + W("att_b1"))            # (E, 32)
    alphas = _sigmoid(a @ W("att_w2") + W("att_b2"))         # (E, 2)
    alpha_dir = alphas[:, 0:1]
    alpha_rev = alphas[:, 1:2]

    # ---- node input network ----
    h = _leaky(X_norm @ W("in_w1") + W("in_b1"))
    node = _leaky(h @ W("in_w2") + W("in_b2"))               # (N, HIDDEN)

    # ---- one-hot gather / scatter matrices ----
    src_r = idx_r_ref[0:1, :]   # (1, E)
    dst_r = idx_r_ref[1:2, :]
    src_c = idx_c_ref[:, 0:1]   # (E, 1)
    dst_c = idx_c_ref[:, 1:2]
    iota_en = lax.broadcasted_iota(jnp.int32, (E, N), 1)
    iota_ne = lax.broadcasted_iota(jnp.int32, (N, E), 0)
    oh_src = (iota_en == src_c).astype(jnp.float32)          # (E, N) gather matrices
    oh_dst = (iota_en == dst_c).astype(jnp.float32)
    oh_srcT = (iota_ne == src_r).astype(jnp.float32)         # (N, E) scatter matrices
    oh_dstT = (iota_ne == dst_r).astype(jnp.float32)

    zeros_node = jnp.zeros_like(node)                        # x_j - x_i == 0 on self-loops

    # ---- graph convolutions ----
    for i in range(NITERS):
        w1, b1 = W(f"c{i}_w1"), W(f"c{i}_b1")
        w2, b2 = W(f"c{i}_w2"), W(f"c{i}_b2")
        x_src = oh_src @ node                                # node_emb[src]  (E, H)
        x_dst = oh_dst @ node                                # node_emb[dst]  (E, H)
        # row-stack the self / direct / reverse message MLP calls into one evaluation
        xa = jnp.concatenate([node, x_src, x_dst], axis=0)                     # (N+2E, H)
        xb = jnp.concatenate([zeros_node, x_dst - x_src, x_src - x_dst], axis=0)
        m = _leaky(jnp.concatenate([xa, xb], axis=1) @ w1 + b1)                # (N+2E, 2H)
        m = _leaky(m @ w2 + b2)                                                # (N+2E, H)
        m_self, m_dir, m_rev = m[:N], m[N:N + E], m[N + E:]
        # alpha-weighted scatter; the degree denominator rides along as an extra column
        pay_dir = jnp.concatenate([alpha_dir * m_dir, alpha_dir], axis=1)      # (E, H+1)
        pay_rev = jnp.concatenate([alpha_rev * m_rev, alpha_rev], axis=1)
        scat = oh_srcT @ pay_dir + oh_dstT @ pay_rev                           # (N, H+1)
        num = m_self + scat[:, 0:H]
        den = 1.0 + scat[:, H:H + 1]
        agg = num * pl.reciprocal(den, approx=True)
        node = _leaky(agg + node)   # residual shortcut (in_feat == out_feats[-1])

    # ---- edge classifier (single K=60 matmul over the concatenated edge embedding) ----
    n_src = oh_src @ node
    n_dst = oh_dst @ node
    edge_emb = jnp.concatenate([n_src, n_dst, ef_nn, ef_norm], axis=1)         # (E, 60)
    h = _leaky(edge_emb @ W("en_w1") + W("en_b1"))
    pred = _sigmoid(h @ W("en_w2") + W("en_b2"))                               # (E, 1)
    # TODO(synk): at large E emit a lane-dense (1, E) output instead of (E, 1).
    out_ref[...] = pred


# ---- parameter construction (mimics nn.Linear default init), fusion & packing ----
def _linear_params(key, in_dim, out_dim):
    k1, k2 = jax.random.split(key)
    lim = 1.0 / np.sqrt(in_dim)
    Wt = jax.random.uniform(k1, (in_dim, out_dim), jnp.float32, -lim, lim)   # stored transposed
    b = jax.random.uniform(k2, (1, out_dim), jnp.float32, -lim, lim)
    return Wt, b


def init_params(seed=42):
    keys = jax.random.split(jax.random.PRNGKey(seed), 14)
    p = {}
    p["in_w1"], p["in_b1"] = _linear_params(keys[0], INPUT_DIM, HIDDEN)
    p["in_w2"], p["in_b2"] = _linear_params(keys[1], HIDDEN, HIDDEN)
    p["ein_w1"], p["ein_b1"] = _linear_params(keys[2], EDGE_FEATURE_DIM, EDGE_HIDDEN)
    p["ein_w2"], p["ein_b2"] = _linear_params(keys[3], EDGE_HIDDEN, EDGE_HIDDEN)
    p["ad_w1"], p["ad_b1"] = _linear_params(keys[4], EDGE_HIDDEN, EDGE_HIDDEN)
    p["ad_w2"], p["ad_b2"] = _linear_params(keys[5], EDGE_HIDDEN, 1)
    p["ar_w1"], p["ar_b1"] = _linear_params(keys[6], EDGE_HIDDEN, EDGE_HIDDEN)
    p["ar_w2"], p["ar_b2"] = _linear_params(keys[7], EDGE_HIDDEN, 1)
    for i in range(NITERS):
        p[f"c{i}_w1"], p[f"c{i}_b1"] = _linear_params(keys[8 + 2 * i], 2 * HIDDEN, 2 * HIDDEN)
        p[f"c{i}_w2"], p[f"c{i}_b2"] = _linear_params(keys[9 + 2 * i], 2 * HIDDEN, HIDDEN)
    p["en_w1"], p["en_b1"] = _linear_params(keys[12], EN_IN, HIDDEN)
    p["en_w2"], p["en_b2"] = _linear_params(keys[13], HIDDEN, OUTPUT_DIM)
    return p


def pack_params(p):
    """Fuse the two attention heads and pack all weights into one (PACK_ROWS, PACK_COLS) buffer."""
    fused = dict(p)
    fused["att_w1"] = jnp.concatenate([p["ad_w1"], p["ar_w1"]], axis=1)        # (16, 32)
    fused["att_b1"] = jnp.concatenate([p["ad_b1"], p["ar_b1"]], axis=1)        # (1, 32)
    w2 = jnp.zeros((2 * EDGE_HIDDEN, 2), jnp.float32)                          # block-diag (32, 2)
    w2 = w2.at[:EDGE_HIDDEN, 0:1].set(p["ad_w2"])
    w2 = w2.at[EDGE_HIDDEN:, 1:2].set(p["ar_w2"])
    fused["att_w2"] = w2
    fused["att_b2"] = jnp.concatenate([p["ad_b2"], p["ar_b2"]], axis=1)        # (1, 2)

    buf = jnp.zeros((PACK_ROWS, PACK_COLS), jnp.float32)
    for name, (off, r, c) in LAYOUT.items():
        buf = buf.at[off:off + r, 0:c].set(fused[name].astype(jnp.float32).reshape(r, c))
    return buf


def _vmem_limit_bytes(N, E):
    f32 = 4
    onehots = 4 * E * N * f32
    feats = 2 * (N * INPUT_DIM + E * EDGE_FEATURE_DIM) * f32
    acts = ((N + 2 * E) * 4 * HIDDEN + 8 * E * EDGE_HIDDEN + 6 * N * HIDDEN) * f32
    weights = PACK_ROWS * 128 * f32        # lanes pad to 128 in VMEM
    est = 2 * (onehots + feats + acts + weights) + (2 << 20)
    return int(min(max(est, 8 << 20), 64 << 20))


def gnn_track_linking_forward(X, edge_index, edge_features, packed_w):
    """Forward pass of GNN_TrackLinkingNet (inference).  Returns pred of shape (E,)."""
    if edge_index.shape[1] != edge_features.shape[0]:
        return None
    # prepare_network_input_data: nan_to_num + float cast (feature-key selection is external)
    X = jnp.nan_to_num(X.astype(jnp.float32), nan=0.0)
    edge_features = jnp.nan_to_num(edge_features.astype(jnp.float32), nan=0.0)

    N = X.shape[0]
    E = edge_features.shape[0]
    src = edge_index[0].astype(jnp.int32)
    dst = edge_index[1].astype(jnp.int32)
    idx_r = jnp.stack([src, dst], axis=0)            # (2, E)
    idx_c = jnp.stack([src, dst], axis=1)            # (E, 2)

    vmem = pl.BlockSpec(memory_space=pltpu.MemorySpace.VMEM)
    # TODO(synk): for realistic graph sizes on v7x, tile E with grid=(cdiv(E,TE),) and
    #             dimension_semantics=("parallel",) after hoisting normalization + degree sums.
    pred = pl.pallas_call(
        gnn_kernel,
        out_shape=jax.ShapeDtypeStruct((E, 1), jnp.float32),
        in_specs=[vmem] * 5,
        out_specs=vmem,
        compiler_params=pltpu.CompilerParams(vmem_limit_bytes=_vmem_limit_bytes(N, E)),
    )(X, edge_features, idx_r, idx_c, packed_w)
    return pred[:, 0]


if __name__ == "__main__":
    N_NODES = 32
    N_EDGES = 64

    key = jax.random.PRNGKey(0)
    kx, ke, ki = jax.random.split(key, 3)
    X = jax.random.normal(kx, (N_NODES, INPUT_DIM), jnp.float32)
    edge_features = jax.random.normal(ke, (N_EDGES, EDGE_FEATURE_DIM), jnp.float32)
    edge_index = jax.random.randint(ki, (2, N_EDGES), 0, N_NODES, jnp.int32)

    packed_w = pack_params(init_params(seed=42))

    pred = gnn_track_linking_forward(X, edge_index, edge_features, packed_w)
    pred = jax.block_until_ready(pred)
    assert pred.shape == (N_EDGES,)
    assert bool(jnp.all(jnp.isfinite(pred)))
    print("KERNEL_OK")
</pallas_src>

<mosaic_0001>
module attributes {stable_mosaic.version = 11 : i64} {
  func.func @gnn_kernel(%arg0: memref<32x19xf32, #tpu.memory_space<vmem>>, %arg1: memref<64x12xf32, #tpu.memory_space<vmem>>, %arg2: memref<2x64xi32, #tpu.memory_space<vmem>>, %arg3: memref<64x2xi32, #tpu.memory_space<vmem>>, %arg4: memref<424x32xf32, #tpu.memory_space<vmem>>, %arg5: memref<64x1xf32, #tpu.memory_space<vmem>>) attributes {dimension_semantics = [], scalar_prefetch = 0 : i64, scratch_operands = 0 : i64, tpu.core_type = #tpu.core_type<tc>} {
    %c0 = arith.constant 0 : index
    %c0_0 = arith.constant 0 : index
    %0 = vector.load %arg0[%c0, %c0_0] : memref<32x19xf32, #tpu.memory_space<vmem>>, vector<32x19xf32>
    %c0_1 = arith.constant 0 : index
    %c0_2 = arith.constant 0 : index
    %1 = vector.load %arg1[%c0_1, %c0_2] : memref<64x12xf32, #tpu.memory_space<vmem>>, vector<64x12xf32>
    %cst = arith.constant dense<0.000000e+00> : vector<19xf32>
    %2 = vector.multi_reduction <add>, %0, %cst [0] : vector<32x19xf32> to vector<19xf32>
    %3 = vector.shape_cast %2 : vector<19xf32> to vector<1x19xf32>
    %cst_3 = arith.constant 3.200000e+01 : f32
    %4 = vector.broadcast %cst_3 : f32 to vector<1x19xf32>
    %5 = arith.divf %3, %4 : vector<1x19xf32>
    %6 = vector.broadcast %5 : vector<1x19xf32> to vector<32x19xf32>
    %7 = arith.subf %0, %6 : vector<32x19xf32>
    %8 = arith.mulf %7, %7 : vector<32x19xf32>
    %cst_4 = arith.constant dense<0.000000e+00> : vector<19xf32>
    %9 = vector.multi_reduction <add>, %8, %cst_4 [0] : vector<32x19xf32> to vector<19xf32>
    %10 = vector.shape_cast %9 : vector<19xf32> to vector<1x19xf32>
    %cst_5 = arith.constant 3.200000e+01 : f32
    %11 = vector.broadcast %cst_5 : f32 to vector<1x19xf32>
    %12 = arith.divf %10, %11 : vector<1x19xf32>
    %13 = vector.broadcast %5 : vector<1x19xf32> to vector<32x19xf32>
    %14 = arith.subf %0, %13 : vector<32x19xf32>
    %15 = math.sqrt %12 : vector<1x19xf32>
    %cst_6 = arith.constant 9.99999974E-5 : f32
    %16 = vector.broadcast %cst_6 : f32 to vector<1x19xf32>
    %17 = arith.addf %15, %16 : vector<1x19xf32>
    %18 = vector.broadcast %17 : vector<1x19xf32> to vector<32x19xf32>
    %19 = arith.divf %14, %18 : vector<32x19xf32>
    %cst_7 = arith.constant dense<0.000000e+00> : vector<12xf32>
    %20 = vector.multi_reduction <add>, %1, %cst_7 [0] : vector<64x12xf32> to vector<12xf32>
    %21 = vector.shape_cast %20 : vector<12xf32> to vector<1x12xf32>
    %cst_8 = arith.constant 6.400000e+01 : f32
    %22 = vector.broadcast %cst_8 : f32 to vector<1x12xf32>
    %23 = arith.divf %21, %22 : vector<1x12xf32>
    %24 = vector.broadcast %23 : vector<1x12xf32> to vector<64x12xf32>
    %25 = arith.subf %1, %24 : vector<64x12xf32>
    %26 = arith.mulf %25, %25 : vector<64x12xf32>
    %cst_9 = arith.constant dense<0.000000e+00> : vector<12xf32>
    %27 = vector.multi_reduction <add>, %26, %cst_9 [0] : vector<64x12xf32> to vector<12xf32>
    %28 = vector.shape_cast %27 : vector<12xf32> to vector<1x12xf32>
    %cst_10 = arith.constant 6.400000e+01 : f32
    %29 = vector.broadcast %cst_10 : f32 to vector<1x12xf32>
    %30 = arith.divf %28, %29 : vector<1x12xf32>
    %31 = vector.broadcast %23 : vector<1x12xf32> to vector<64x12xf32>
    %32 = arith.subf %1, %31 : vector<64x12xf32>
    %33 = math.sqrt %30 : vector<1x12xf32>
    %cst_11 = arith.constant 9.99999974E-5 : f32
    %34 = vector.broadcast %cst_11 : f32 to vector<1x12xf32>
    %35 = arith.addf %33, %34 : vector<1x12xf32>
    %36 = vector.broadcast %35 : vector<1x12xf32> to vector<64x12xf32>
    %37 = arith.divf %32, %36 : vector<64x12xf32>
    %c56 = arith.constant 56 : index
    %c0_12 = arith.constant 0 : index
    %38 = vector.load %arg4[%c56, %c0_12] : memref<424x32xf32, #tpu.memory_space<vmem>>, vector<12x16xf32>
    %cst_13 = arith.constant dense<0.000000e+00> : vector<64x16xf32>
    %39 = tpu.matmul %37, %38, %cst_13 {dimension_numbers = #tpu.dot_dimension_numbers<[1], [0], [0], [1], [0, 0, 1, 1], [], []>} : vector<64x12xf32>, vector<12x16xf32>, vector<64x16xf32> -> vector<64x16xf32>
    %c72 = arith.constant 72 : index
    %c0_14 = arith.constant 0 : index
    %40 = vector.load %arg4[%c72, %c0_14] : memref<424x32xf32, #tpu.memory_space<vmem>>, vector<1x16xf32>
    %41 = vector.broadcast %40 : vector<1x16xf32> to vector<64x16xf32>
    %42 = arith.addf %39, %41 : vector<64x16xf32>
    %cst_15 = arith.constant 0.000000e+00 : f32
    %43 = vector.broadcast %cst_15 : f32 to vector<64x16xf32>
    %44 = arith.cmpf oge, %42, %43 : vector<64x16xf32>
    %cst_16 = arith.constant 0.00999999977 : f32
    %45 = vector.broadcast %cst_16 : f32 to vector<64x16xf32>
    %46 = arith.mulf %45, %42 : vector<64x16xf32>
    %47 = arith.select %44, %42, %46 : vector<64x16xi1>, vector<64x16xf32>
    %c80 = arith.constant 80 : index
    %c0_17 = arith.constant 0 : index
    %48 = vector.load %arg4[%c80, %c0_17] : memref<424x32xf32, #tpu.memory_space<vmem>>, vector<16x16xf32>
    %cst_18 = arith.constant dense<0.000000e+00> : vector<64x16xf32>
    %49 = tpu.matmul %47, %48, %cst_18 {dimension_numbers = #tpu.dot_dimension_numbers<[1], [0], [0], [1], [0, 0, 1, 1], [], []>} : vector<64x16xf32>, vector<16x16xf32>, vector<64x16xf32> -> vector<64x16xf32>
    %c96 = arith.constant 96 : index
    %c0_19 = arith.constant 0 : index
    %50 = vector.load %arg4[%c96, %c0_19] : memref<424x32xf32, #tpu.memory_space<vmem>>, vector<1x16xf32>
    %51 = vector.broadcast %50 : vector<1x16xf32> to vector<64x16xf32>
    %52 = arith.addf %49, %51 : vector<64x16xf32>
    %cst_20 = arith.constant 0.000000e+00 : f32
    %53 = vector.broadcast %cst_20 : f32 to vector<64x16xf32>
    %54 = arith.cmpf oge, %52, %53 : vector<64x16xf32>
    %cst_21 = arith.constant 0.00999999977 : f32
    %55 = vector.broadcast %cst_21 : f32 to vector<64x16xf32>
    %56 = arith.mulf %55, %52 : vector<64x16xf32>
    %57 = arith.select %54, %52, %56 : vector<64x16xi1>, vector<64x16xf32>
    %c104 = arith.constant 104 : index
    %c0_22 = arith.constant 0 : index
    %58 = vector.load %arg4[%c104, %c0_22] : memref<424x32xf32, #tpu.memory_space<vmem>>, vector<16x32xf32>
    %cst_23 = arith.constant dense<0.000000e+00> : vector<64x32xf32>
    %59 = tpu.matmul %57, %58, %cst_23 {dimension_numbers = #tpu.dot_dimension_numbers<[1], [0], [0], [1], [0, 0, 1, 1], [], []>} : vector<64x16xf32>, vector<16x32xf32>, vector<64x32xf32> -> vector<64x32xf32>
    %c120 = arith.constant 120 : index
    %c0_24 = arith.constant 0 : index
    %60 = vector.load %arg4[%c120, %c0_24] : memref<424x32xf32, #tpu.memory_space<vmem>>, vector<1x32xf32>
    %61 = vector.broadcast %60 : vector<1x32xf32> to vector<64x32xf32>
    %62 = arith.addf %59, %61 : vector<64x32xf32>
    %cst_25 = arith.constant 0.000000e+00 : f32
    %63 = vector.broadcast %cst_25 : f32 to vector<64x32xf32>
    %64 = arith.cmpf oge, %62, %63 : vector<64x32xf32>
    %cst_26 = arith.constant 0.00999999977 : f32
    %65 = vector.broadcast %cst_26 : f32 to vector<64x32xf32>
    %66 = arith.mulf %65, %62 : vector<64x32xf32>
    %67 = arith.select %64, %62, %66 : vector<64x32xi1>, vector<64x32xf32>
    %c128 = arith.constant 128 : index
    %c0_27 = arith.constant 0 : index
    %68 = vector.load %arg4[%c128, %c0_27] : memref<424x32xf32, #tpu.memory_space<vmem>>, vector<32x2xf32>
    %cst_28 = arith.constant dense<0.000000e+00> : vector<64x2xf32>
    %69 = tpu.matmul %67, %68, %cst_28 {dimension_numbers = #tpu.dot_dimension_numbers<[1], [0], [0], [1], [0, 0, 1, 1], [], []>} : vector<64x32xf32>, vector<32x2xf32>, vector<64x2xf32> -> vector<64x2xf32>
    %c160 = arith.constant 160 : index
    %c0_29 = arith.constant 0 : index
    %70 = vector.load %arg4[%c160, %c0_29] : memref<424x32xf32, #tpu.memory_space<vmem>>, vector<1x2xf32>
    %71 = vector.broadcast %70 : vector<1x2xf32> to vector<64x2xf32>
    %72 = arith.addf %69, %71 : vector<64x2xf32>
    %73 = math.absf %72 : vector<64x2xf32>
    %cst_30 = arith.constant 0.000000e+00 : f32
    %74 = vector.broadcast %cst_30 : f32 to vector<64x2xf32>
    %75 = arith.subf %74, %73 : vector<64x2xf32>
    %76 = math.exp %75 : vector<64x2xf32>
    %cst_31 = arith.constant 0.000000e+00 : f32
    %77 = vector.broadcast %cst_31 : f32 to vector<64x2xf32>
    %78 = arith.cmpf oge, %72, %77 : vector<64x2xf32>
    %cst_32 = arith.constant 1.000000e+00 : f32
    %79 = vector.broadcast %cst_32 : f32 to vector<64x2xf32>
    %80 = arith.select %78, %79, %76 : vector<64x2xi1>, vector<64x2xf32>
    %cst_33 = arith.constant 1.000000e+00 : f32
    %81 = vector.broadcast %cst_33 : f32 to vector<64x2xf32>
    %82 = arith.addf %81, %76 : vector<64x2xf32>
    %83 = arith.divf %80, %82 : vector<64x2xf32>
    %84 = vector.extract_strided_slice %83 {offsets = [0, 0], sizes = [64, 1], strides = [1, 1]} : vector<64x2xf32> to vector<64x1xf32>
    %85 = vector.extract_strided_slice %83 {offsets = [0, 1], sizes = [64, 1], strides = [1, 1]} : vector<64x2xf32> to vector<64x1xf32>
    %c0_34 = arith.constant 0 : index
    %c0_35 = arith.constant 0 : index
    %86 = vector.load %arg4[%c0_34, %c0_35] : memref<424x32xf32, #tpu.memory_space<vmem>>, vector<19x16xf32>
    %cst_36 = arith.constant dense<0.000000e+00> : vector<32x16xf32>
    %87 = tpu.matmul %19, %86, %cst_36 {dimension_numbers = #tpu.dot_dimension_numbers<[1], [0], [0], [1], [0, 0, 1, 1], [], []>} : vector<32x19xf32>, vector<19x16xf32>, vector<32x16xf32> -> vector<32x16xf32>
    %c24 = arith.constant 24 : index
    %c0_37 = arith.constant 0 : index
    %88 = vector.load %arg4[%c24, %c0_37] : memref<424x32xf32, #tpu.memory_space<vmem>>, vector<1x16xf32>
    %89 = vector.broadcast %88 : vector<1x16xf32> to vector<32x16xf32>
    %90 = arith.addf %87, %89 : vector<32x16xf32>
    %cst_38 = arith.constant 0.000000e+00 : f32
    %91 = vector.broadcast %cst_38 : f32 to vector<32x16xf32>
    %92 = arith.cmpf oge, %90, %91 : vector<32x16xf32>
    %cst_39 = arith.constant 0.00999999977 : f32
    %93 = vector.broadcast %cst_39 : f32 to vector<32x16xf32>
    %94 = arith.mulf %93, %90 : vector<32x16xf32>
    %95 = arith.select %92, %90, %94 : vector<32x16xi1>, vector<32x16xf32>
    %c32 = arith.constant 32 : index
    %c0_40 = arith.constant 0 : index
    %96 = vector.load %arg4[%c32, %c0_40] : memref<424x32xf32, #tpu.memory_space<vmem>>, vector<16x16xf32>
    %cst_41 = arith.constant dense<0.000000e+00> : vector<32x16xf32>
    %97 = tpu.matmul %95, %96, %cst_41 {dimension_numbers = #tpu.dot_dimension_numbers<[1], [0], [0], [1], [0, 0, 1, 1], [], []>} : vector<32x16xf32>, vector<16x16xf32>, vector<32x16xf32> -> vector<32x16xf32>
    %c48 = arith.constant 48 : index
    %c0_42 = arith.constant 0 : index
    %98 = vector.load %arg4[%c48, %c0_42] : memref<424x32xf32, #tpu.memory_space<vmem>>, vector<1x16xf32>
    %99 = vector.broadcast %98 : vector<1x16xf32> to vector<32x16xf32>
    %100 = arith.addf %97, %99 : vector<32x16xf32>
    %cst_43 = arith.constant 0.000000e+00 : f32
    %101 = vector.broadcast %cst_43 : f32 to vector<32x16xf32>
    %102 = arith.cmpf oge, %100, %101 : vector<32x16xf32>
    %cst_44 = arith.constant 0.00999999977 : f32
    %103 = vector.broadcast %cst_44 : f32 to vector<32x16xf32>
    %104 = arith.mulf %103, %100 : vector<32x16xf32>
    %105 = arith.select %102, %100, %104 : vector<32x16xi1>, vector<32x16xf32>
    %c0_45 = arith.constant 0 : index
    %c0_46 = arith.constant 0 : index
    %106 = vector.load %arg2[%c0_45, %c0_46] : memref<2x64xi32, #tpu.memory_space<vmem>>, vector<1x64xi32>
    %c1 = arith.constant 1 : index
    %c0_47 = arith.constant 0 : index
    %107 = vector.load %arg2[%c1, %c0_47] : memref<2x64xi32, #tpu.memory_space<vmem>>, vector<1x64xi32>
    %c0_48 = arith.constant 0 : index
    %c0_49 = arith.constant 0 : index
    %108 = vector.load %arg3[%c0_48, %c0_49] : memref<64x2xi32, #tpu.memory_space<vmem>>, vector<64x1xi32>
    %c0_50 = arith.constant 0 : index
    %c1_51 = arith.constant 1 : index
    %109 = vector.load %arg3[%c0_50, %c1_51] : memref<64x2xi32, #tpu.memory_space<vmem>>, vector<64x1xi32>
    %110 = tpu.iota {dimensions = array<i32: 1>} : vector<64x32xi32>
    %111 = tpu.iota {dimensions = array<i32: 0>} : vector<32x64xi32>
    %112 = vector.broadcast %108 : vector<64x1xi32> to vector<64x32xi32>
    %113 = arith.cmpi eq, %110, %112 : vector<64x32xi32>
    %114 = arith.extui %113 : vector<64x32xi1> to vector<64x32xi32>
    %115 = arith.sitofp %114 : vector<64x32xi32> to vector<64x32xf32>
    %116 = vector.broadcast %109 : vector<64x1xi32> to vector<64x32xi32>
    %117 = arith.cmpi eq, %110, %116 : vector<64x32xi32>
    %118 = arith.extui %117 : vector<64x32xi1> to vector<64x32xi32>
    %119 = arith.sitofp %118 : vector<64x32xi32> to vector<64x32xf32>
    %120 = vector.broadcast %106 : vector<1x64xi32> to vector<32x64xi32>
    %121 = arith.cmpi eq, %111, %120 : vector<32x64xi32>
    %122 = arith.extui %121 : vector<32x64xi1> to vector<32x64xi32>
    %123 = arith.sitofp %122 : vector<32x64xi32> to vector<32x64xf32>
    %124 = vector.broadcast %107 : vector<1x64xi32> to vector<32x64xi32>
    %125 = arith.cmpi eq, %111, %124 : vector<32x64xi32>
    %126 = arith.extui %125 : vector<32x64xi1> to vector<32x64xi32>
    %127 = arith.sitofp %126 : vector<32x64xi32> to vector<32x64xf32>
    %cst_52 = arith.constant 0.000000e+00 : f32
    %128 = vector.broadcast %cst_52 : f32 to vector<32x16xf32>
    %c168 = arith.constant 168 : index
    %c0_53 = arith.constant 0 : index
    %129 = vector.load %arg4[%c168, %c0_53] : memref<424x32xf32, #tpu.memory_space<vmem>>, vector<32x32xf32>
    %c200 = arith.constant 200 : index
    %c0_54 = arith.constant 0 : index
    %130 = vector.load %arg4[%c200, %c0_54] : memref<424x32xf32, #tpu.memory_space<vmem>>, vector<1x32xf32>
    %c208 = arith.constant 208 : index
    %c0_55 = arith.constant 0 : index
    %131 = vector.load %arg4[%c208, %c0_55] : memref<424x32xf32, #tpu.memory_space<vmem>>, vector<32x16xf32>
    %c240 = arith.constant 240 : index
    %c0_56 = arith.constant 0 : index
    %132 = vector.load %arg4[%c240, %c0_56] : memref<424x32xf32, #tpu.memory_space<vmem>>, vector<1x16xf32>
    %cst_57 = arith.constant dense<0.000000e+00> : vector<64x16xf32>
    %133 = tpu.matmul %115, %105, %cst_57 {dimension_numbers = #tpu.dot_dimension_numbers<[1], [0], [0], [1], [0, 0, 1, 1], [], []>} : vector<64x32xf32>, vector<32x16xf32>, vector<64x16xf32> -> vector<64x16xf32>
    %cst_58 = arith.constant dense<0.000000e+00> : vector<64x16xf32>
    %134 = tpu.matmul %119, %105, %cst_58 {dimension_numbers = #tpu.dot_dimension_numbers<[1], [0], [0], [1], [0, 0, 1, 1], [], []>} : vector<64x32xf32>, vector<32x16xf32>, vector<64x16xf32> -> vector<64x16xf32>
    %135 = tpu.concatenate %105, %133, %134 in 0 : vector<32x16xf32>, vector<64x16xf32>, vector<64x16xf32> -> vector<160x16xf32>
    %136 = arith.subf %134, %133 : vector<64x16xf32>
    %137 = arith.subf %133, %134 : vector<64x16xf32>
    %138 = tpu.concatenate %128, %136, %137 in 0 : vector<32x16xf32>, vector<64x16xf32>, vector<64x16xf32> -> vector<160x16xf32>
    %139 = tpu.concatenate %135, %138 in 1 : vector<160x16xf32>, vector<160x16xf32> -> vector<160x32xf32>
    %cst_59 = arith.constant dense<0.000000e+00> : vector<160x32xf32>
    %140 = tpu.matmul %139, %129, %cst_59 {dimension_numbers = #tpu.dot_dimension_numbers<[1], [0], [0], [1], [0, 0, 1, 1], [], []>} : vector<160x32xf32>, vector<32x32xf32>, vector<160x32xf32> -> vector<160x32xf32>
    %141 = vector.broadcast %130 : vector<1x32xf32> to vector<160x32xf32>
    %142 = arith.addf %140, %141 : vector<160x32xf32>
    %cst_60 = arith.constant 0.000000e+00 : f32
    %143 = vector.broadcast %cst_60 : f32 to vector<160x32xf32>
    %144 = arith.cmpf oge, %142, %143 : vector<160x32xf32>
    %cst_61 = arith.constant 0.00999999977 : f32
    %145 = vector.broadcast %cst_61 : f32 to vector<160x32xf32>
    %146 = arith.mulf %145, %142 : vector<160x32xf32>
    %147 = arith.select %144, %142, %146 : vector<160x32xi1>, vector<160x32xf32>
    %cst_62 = arith.constant dense<0.000000e+00> : vector<160x16xf32>
    %148 = tpu.matmul %147, %131, %cst_62 {dimension_numbers = #tpu.dot_dimension_numbers<[1], [0], [0], [1], [0, 0, 1, 1], [], []>} : vector<160x32xf32>, vector<32x16xf32>, vector<160x16xf32> -> vector<160x16xf32>
    %149 = vector.broadcast %132 : vector<1x16xf32> to vector<160x16xf32>
    %150 = arith.addf %148, %149 : vector<160x16xf32>
    %cst_63 = arith.constant 0.000000e+00 : f32
    %151 = vector.broadcast %cst_63 : f32 to vector<160x16xf32>
    %152 = arith.cmpf oge, %150, %151 : vector<160x16xf32>
    %cst_64 = arith.constant 0.00999999977 : f32
    %153 = vector.broadcast %cst_64 : f32 to vector<160x16xf32>
    %154 = arith.mulf %153, %150 : vector<160x16xf32>
    %155 = arith.select %152, %150, %154 : vector<160x16xi1>, vector<160x16xf32>
    %156 = vector.extract_strided_slice %155 {offsets = [0, 0], sizes = [32, 16], strides = [1, 1]} : vector<160x16xf32> to vector<32x16xf32>
    %157 = vector.extract_strided_slice %155 {offsets = [32, 0], sizes = [64, 16], strides = [1, 1]} : vector<160x16xf32> to vector<64x16xf32>
    %158 = vector.extract_strided_slice %155 {offsets = [96, 0], sizes = [64, 16], strides = [1, 1]} : vector<160x16xf32> to vector<64x16xf32>
    %159 = vector.broadcast %84 : vector<64x1xf32> to vector<64x16xf32>
    %160 = arith.mulf %159, %157 : vector<64x16xf32>
    %161 = tpu.concatenate %160, %84 in 1 : vector<64x16xf32>, vector<64x1xf32> -> vector<64x17xf32>
    %162 = vector.broadcast %85 : vector<64x1xf32> to vector<64x16xf32>
    %163 = arith.mulf %162, %158 : vector<64x16xf32>
    %164 = tpu.concatenate %163, %85 in 1 : vector<64x16xf32>, vector<64x1xf32> -> vector<64x17xf32>
    %cst_65 = arith.constant dense<0.000000e+00> : vector<32x17xf32>
    %165 = tpu.matmul %123, %161, %cst_65 {dimension_numbers = #tpu.dot_dimension_numbers<[1], [0], [0], [1], [0, 0, 1, 1], [], []>} : vector<32x64xf32>, vector<64x17xf32>, vector<32x17xf32> -> vector<32x17xf32>
    %cst_66 = arith.constant dense<0.000000e+00> : vector<32x17xf32>
    %166 = tpu.matmul %127, %164, %cst_66 {dimension_numbers = #tpu.dot_dimension_numbers<[1], [0], [0], [1], [0, 0, 1, 1], [], []>} : vector<32x64xf32>, vector<64x17xf32>, vector<32x17xf32> -> vector<32x17xf32>
    %167 = arith.addf %165, %166 : vector<32x17xf32>
    %168 = vector.extract_strided_slice %167 {offsets = [0, 0], sizes = [32, 16], strides = [1, 1]} : vector<32x17xf32> to vector<32x16xf32>
    %169 = arith.addf %156, %168 : vector<32x16xf32>
    %170 = vector.extract_strided_slice %167 {offsets = [0, 16], sizes = [32, 1], strides = [1, 1]} : vector<32x17xf32> to vector<32x1xf32>
    %cst_67 = arith.constant 1.000000e+00 : f32
    %171 = vector.broadcast %cst_67 : f32 to vector<32x1xf32>
    %172 = arith.addf %171, %170 : vector<32x1xf32>
    %173 = tpu.reciprocal %172 {approx = true} : vector<32x1xf32> -> vector<32x1xf32>
    %174 = vector.broadcast %173 : vector<32x1xf32> to vector<32x16xf32>
    %175 = arith.mulf %169, %174 : vector<32x16xf32>
    %176 = arith.addf %175, %105 : vector<32x16xf32>
    %cst_68 = arith.constant 0.000000e+00 : f32
    %177 = vector.broadcast %cst_68 : f32 to vector<32x16xf32>
    %178 = arith.cmpf oge, %176, %177 : vector<32x16xf32>
    %cst_69 = arith.constant 0.00999999977 : f32
    %179 = vector.broadcast %cst_69 : f32 to vector<32x16xf32>
    %180 = arith.mulf %179, %176 : vector<32x16xf32>
    %181 = arith.select %178, %176, %180 : vector<32x16xi1>, vector<32x16xf32>
    %c248 = arith.constant 248 : index
    %c0_70 = arith.constant 0 : index
    %182 = vector.load %arg4[%c248, %c0_70] : memref<424x32xf32, #tpu.memory_space<vmem>>, vector<32x32xf32>
    %c280 = arith.constant 280 : index
    %c0_71 = arith.constant 0 : index
    %183 = vector.load %arg4[%c280, %c0_71] : memref<424x32xf32, #tpu.memory_space<vmem>>, vector<1x32xf32>
    %c288 = arith.constant 288 : index
    %c0_72 = arith.constant 0 : index
    %184 = vector.load %arg4[%c288, %c0_72] : memref<424x32xf32, #tpu.memory_space<vmem>>, vector<32x16xf32>
    %c320 = arith.constant 320 : index
    %c0_73 = arith.constant 0 : index
    %185 = vector.load %arg4[%c320, %c0_73] : memref<424x32xf32, #tpu.memory_space<vmem>>, vector<1x16xf32>
    %cst_74 = arith.constant dense<0.000000e+00> : vector<64x16xf32>
    %186 = tpu.matmul %115, %181, %cst_74 {dimension_numbers = #tpu.dot_dimension_numbers<[1], [0], [0], [1], [0, 0, 1, 1], [], []>} : vector<64x32xf32>, vector<32x16xf32>, vector<64x16xf32> -> vector<64x16xf32>
    %cst_75 = arith.constant dense<0.000000e+00> : vector<64x16xf32>
    %187 = tpu.matmul %119, %181, %cst_75 {dimension_numbers = #tpu.dot_dimension_numbers<[1], [0], [0], [1], [0, 0, 1, 1], [], []>} : vector<64x32xf32>, vector<32x16xf32>, vector<64x16xf32> -> vector<64x16xf32>
    %188 = tpu.concatenate %181, %186, %187 in 0 : vector<32x16xf32>, vector<64x16xf32>, vector<64x16xf32> -> vector<160x16xf32>
    %189 = arith.subf %187, %186 : vector<64x16xf32>
    %190 = arith.subf %186, %187 : vector<64x16xf32>
    %191 = tpu.concatenate %128, %189, %190 in 0 : vector<32x16xf32>, vector<64x16xf32>, vector<64x16xf32> -> vector<160x16xf32>
    %192 = tpu.concatenate %188, %191 in 1 : vector<160x16xf32>, vector<160x16xf32> -> vector<160x32xf32>
    %cst_76 = arith.constant dense<0.000000e+00> : vector<160x32xf32>
    %193 = tpu.matmul %192, %182, %cst_76 {dimension_numbers = #tpu.dot_dimension_numbers<[1], [0], [0], [1], [0, 0, 1, 1], [], []>} : vector<160x32xf32>, vector<32x32xf32>, vector<160x32xf32> -> vector<160x32xf32>
    %194 = vector.broadcast %183 : vector<1x32xf32> to vector<160x32xf32>
    %195 = arith.addf %193, %194 : vector<160x32xf32>
    %cst_77 = arith.constant 0.000000e+00 : f32
    %196 = vector.broadcast %cst_77 : f32 to vector<160x32xf32>
    %197 = arith.cmpf oge, %195, %196 : vector<160x32xf32>
    %cst_78 = arith.constant 0.00999999977 : f32
    %198 = vector.broadcast %cst_78 : f32 to vector<160x32xf32>
    %199 = arith.mulf %198, %195 : vector<160x32xf32>
    %200 = arith.select %197, %195, %199 : vector<160x32xi1>, vector<160x32xf32>
    %cst_79 = arith.constant dense<0.000000e+00> : vector<160x16xf32>
    %201 = tpu.matmul %200, %184, %cst_79 {dimension_numbers = #tpu.dot_dimension_numbers<[1], [0], [0], [1], [0, 0, 1, 1], [], []>} : vector<160x32xf32>, vector<32x16xf32>, vector<160x16xf32> -> vector<160x16xf32>
    %202 = vector.broadcast %185 : vector<1x16xf32> to vector<160x16xf32>
    %203 = arith.addf %201, %202 : vector<160x16xf32>
    %cst_80 = arith.constant 0.000000e+00 : f32
    %204 = vector.broadcast %cst_80 : f32 to vector<160x16xf32>
    %205 = arith.cmpf oge, %203, %204 : vector<160x16xf32>
    %cst_81 = arith.constant 0.00999999977 : f32
    %206 = vector.broadcast %cst_81 : f32 to vector<160x16xf32>
    %207 = arith.mulf %206, %203 : vector<160x16xf32>
    %208 = arith.select %205, %203, %207 : vector<160x16xi1>, vector<160x16xf32>
    %209 = vector.extract_strided_slice %208 {offsets = [0, 0], sizes = [32, 16], strides = [1, 1]} : vector<160x16xf32> to vector<32x16xf32>
    %210 = vector.extract_strided_slice %208 {offsets = [32, 0], sizes = [64, 16], strides = [1, 1]} : vector<160x16xf32> to vector<64x16xf32>
    %211 = vector.extract_strided_slice %208 {offsets = [96, 0], sizes = [64, 16], strides = [1, 1]} : vector<160x16xf32> to vector<64x16xf32>
    %212 = vector.broadcast %84 : vector<64x1xf32> to vector<64x16xf32>
    %213 = arith.mulf %212, %210 : vector<64x16xf32>
    %214 = tpu.concatenate %213, %84 in 1 : vector<64x16xf32>, vector<64x1xf32> -> vector<64x17xf32>
    %215 = vector.broadcast %85 : vector<64x1xf32> to vector<64x16xf32>
    %216 = arith.mulf %215, %211 : vector<64x16xf32>
    %217 = tpu.concatenate %216, %85 in 1 : vector<64x16xf32>, vector<64x1xf32> -> vector<64x17xf32>
    %cst_82 = arith.constant dense<0.000000e+00> : vector<32x17xf32>
    %218 = tpu.matmul %123, %214, %cst_82 {dimension_numbers = #tpu.dot_dimension_numbers<[1], [0], [0], [1], [0, 0, 1, 1], [], []>} : vector<32x64xf32>, vector<64x17xf32>, vector<32x17xf32> -> vector<32x17xf32>
    %cst_83 = arith.constant dense<0.000000e+00> : vector<32x17xf32>
    %219 = tpu.matmul %127, %217, %cst_83 {dimension_numbers = #tpu.dot_dimension_numbers<[1], [0], [0], [1], [0, 0, 1, 1], [], []>} : vector<32x64xf32>, vector<64x17xf32>, vector<32x17xf32> -> vector<32x17xf32>
    %220 = arith.addf %218, %219 : vector<32x17xf32>
    %221 = vector.extract_strided_slice %220 {offsets = [0, 0], sizes = [32, 16], strides = [1, 1]} : vector<32x17xf32> to vector<32x16xf32>
    %222 = arith.addf %209, %221 : vector<32x16xf32>
    %223 = vector.extract_strided_slice %220 {offsets = [0, 16], sizes = [32, 1], strides = [1, 1]} : vector<32x17xf32> to vector<32x1xf32>
    %cst_84 = arith.constant 1.000000e+00 : f32
    %224 = vector.broadcast %cst_84 : f32 to vector<32x1xf32>
    %225 = arith.addf %224, %223 : vector<32x1xf32>
    %226 = tpu.reciprocal %225 {approx = true} : vector<32x1xf32> -> vector<32x1xf32>
    %227 = vector.broadcast %226 : vector<32x1xf32> to vector<32x16xf32>
    %228 = arith.mulf %222, %227 : vector<32x16xf32>
    %229 = arith.addf %228, %181 : vector<32x16xf32>
    %cst_85 = arith.constant 0.000000e+00 : f32
    %230 = vector.broadcast %cst_85 : f32 to vector<32x16xf32>
    %231 = arith.cmpf oge, %229, %230 : vector<32x16xf32>
    %cst_86 = arith.constant 0.00999999977 : f32
    %232 = vector.broadcast %cst_86 : f32 to vector<32x16xf32>
    %233 = arith.mulf %232, %229 : vector<32x16xf32>
    %234 = arith.select %231, %229, %233 : vector<32x16xi1>, vector<32x16xf32>
    %cst_87 = arith.constant dense<0.000000e+00> : vector<64x16xf32>
    %235 = tpu.matmul %115, %234, %cst_87 {dimension_numbers = #tpu.dot_dimension_numbers<[1], [0], [0], [1], [0, 0, 1, 1], [], []>} : vector<64x32xf32>, vector<32x16xf32>, vector<64x16xf32> -> vector<64x16xf32>
    %cst_88 = arith.constant dense<0.000000e+00> : vector<64x16xf32>
    %236 = tpu.matmul %119, %234, %cst_88 {dimension_numbers = #tpu.dot_dimension_numbers<[1], [0], [0], [1], [0, 0, 1, 1], [], []>} : vector<64x32xf32>, vector<32x16xf32>, vector<64x16xf32> -> vector<64x16xf32>
    %237 = tpu.concatenate %235, %236, %57, %37 in 1 : vector<64x16xf32>, vector<64x16xf32>, vector<64x16xf32>, vector<64x12xf32> -> vector<64x60xf32>
    %c328 = arith.constant 328 : index
    %c0_89 = arith.constant 0 : index
    %238 = vector.load %arg4[%c328, %c0_89] : memref<424x32xf32, #tpu.memory_space<vmem>>, vector<60x16xf32>
    %cst_90 = arith.constant dense<0.000000e+00> : vector<64x16xf32>
    %239 = tpu.matmul %237, %238, %cst_90 {dimension_numbers = #tpu.dot_dimension_numbers<[1], [0], [0], [1], [0, 0, 1, 1], [], []>} : vector<64x60xf32>, vector<60x16xf32>, vector<64x16xf32> -> vector<64x16xf32>
    %c392 = arith.constant 392 : index
    %c0_91 = arith.constant 0 : index
    %240 = vector.load %arg4[%c392, %c0_91] : memref<424x32xf32, #tpu.memory_space<vmem>>, vector<1x16xf32>
    %241 = vector.broadcast %240 : vector<1x16xf32> to vector<64x16xf32>
    %242 = arith.addf %239, %241 : vector<64x16xf32>
    %cst_92 = arith.constant 0.000000e+00 : f32
    %243 = vector.broadcast %cst_92 : f32 to vector<64x16xf32>
    %244 = arith.cmpf oge, %242, %243 : vector<64x16xf32>
    %cst_93 = arith.constant 0.00999999977 : f32
    %245 = vector.broadcast %cst_93 : f32 to vector<64x16xf32>
    %246 = arith.mulf %245, %242 : vector<64x16xf32>
    %247 = arith.select %244, %242, %246 : vector<64x16xi1>, vector<64x16xf32>
    %c400 = arith.constant 400 : index
    %c0_94 = arith.constant 0 : index
    %248 = vector.load %arg4[%c400, %c0_94] : memref<424x32xf32, #tpu.memory_space<vmem>>, vector<16x1xf32>
    %cst_95 = arith.constant dense<0.000000e+00> : vector<64x1xf32>
    %249 = tpu.matmul %247, %248, %cst_95 {dimension_numbers = #tpu.dot_dimension_numbers<[1], [0], [0], [1], [0, 0, 1, 1], [], []>} : vector<64x16xf32>, vector<16x1xf32>, vector<64x1xf32> -> vector<64x1xf32>
    %c416 = arith.constant 416 : index
    %c0_96 = arith.constant 0 : index
    %250 = vector.load %arg4[%c416, %c0_96] : memref<424x32xf32, #tpu.memory_space<vmem>>, vector<1x1xf32>
    %251 = vector.broadcast %250 : vector<1x1xf32> to vector<64x1xf32>
    %252 = arith.addf %249, %251 : vector<64x1xf32>
    %253 = math.absf %252 : vector<64x1xf32>
    %cst_97 = arith.constant 0.000000e+00 : f32
    %254 = vector.broadcast %cst_97 : f32 to vector<64x1xf32>
    %255 = arith.subf %254, %253 : vector<64x1xf32>
    %256 = math.exp %255 : vector<64x1xf32>
    %cst_98 = arith.constant 0.000000e+00 : f32
    %257 = vector.broadcast %cst_98 : f32 to vector<64x1xf32>
    %258 = arith.cmpf oge, %252, %257 : vector<64x1xf32>
    %cst_99 = arith.constant 1.000000e+00 : f32
    %259 = vector.broadcast %cst_99 : f32 to vector<64x1xf32>
    %260 = arith.select %258, %259, %256 : vector<64x1xi1>, vector<64x1xf32>
    %cst_100 = arith.constant 1.000000e+00 : f32
    %261 = vector.broadcast %cst_100 : f32 to vector<64x1xf32>
    %262 = arith.addf %261, %256 : vector<64x1xf32>
    %263 = arith.divf %260, %262 : vector<64x1xf32>
    %c0_101 = arith.constant 0 : index
    %c0_102 = arith.constant 0 : index
    %264 = vector.load %arg5[%c0_101, %c0_102] : memref<64x1xf32, #tpu.memory_space<vmem>>, vector<64x1xf32>
    tpu.vector_store %arg5[%c0_101, %c0_102], %263 {strides = array<i32>} : memref<64x1xf32, #tpu.memory_space<vmem>>, vector<64x1xf32>,
    return
  }
}

</mosaic_0001>

<llo_original>
// kernel: tpu_custom_call.1
$region0: #{tpu_custom_call.1}
  #allocation0 [shape = 'u32[]', space=smem, size = 0x4, offset = 0x4, fixed_abs, tag = 'smem constant byte address 0x4 - core index']
  #allocation1 [shape = 'u32[144,128]{1,0:T(1,128)}', space=vmem, size = 0x12000, scoped, tag = 'internal scratch']
  %s0 = inlined_call_operand.vmem [shape: f32[32,19], index: 0, kind: input, shape index: {}]
  %s1 = inlined_call_operand.vmem [shape: f32[64,12], index: 1, kind: input, shape index: {}]
  %s2 = inlined_call_operand.vmem [shape: s32[2,64], index: 2, kind: input, shape index: {}]
  %s3 = inlined_call_operand.vmem [shape: s32[64,2], index: 3, kind: input, shape index: {}]
  %s4 = inlined_call_operand.vmem [shape: f32[424,32], index: 4, kind: input, shape index: {}]
  %s5 = inlined_call_operand.vmem [shape: f32[64,1], index: 5, kind: output, shape index: {}]
  %s6 = sld [smem:[#allocation0]]
  $region30: #{tpu_custom_call.1} parent=0
    _
  %s8 = ssub.s32 1, %s6
  %s9 = scalar_select 0, %s8, %s6
  // Predicated region
  $region2: #{tpu_custom_call.1} parent=0 // pred_check
    _
  $region3: #{tpu_custom_call.1} parent=0 // pred_check_branch
    %11 = sbr.rel (0) target = $region5
  $region4: #{tpu_custom_call.1} parent=0 // pred_region
    _
  $region5: #{tpu_custom_call.1} parent=0 // pred_fallthru
    _
  // Predicated region
  $region6: #{tpu_custom_call.1} parent=0 // pred_check
    _
  $region7: #{tpu_custom_call.1} parent=0 // pred_check_branch
    %13 = sbr.rel (0) target = $region9
  $region8: #{tpu_custom_call.1} parent=0 // pred_region
    _
  $region9: #{tpu_custom_call.1} parent=0 // pred_fallthru
    _
  // Predicated region
  $region10: #{tpu_custom_call.1} parent=0 // pred_check
    _
  $region11: #{tpu_custom_call.1} parent=0 // pred_check_branch
    %15 = sbr.rel (0) target = $region13
  $region12: #{tpu_custom_call.1} parent=0 // pred_region
    _
  $region13: #{tpu_custom_call.1} parent=0 // pred_fallthru
    _
  // Predicated region
  $region14: #{tpu_custom_call.1} parent=0 // pred_check
    _
  $region15: #{tpu_custom_call.1} parent=0 // pred_check_branch
    %17 = sbr.rel (0) target = $region17
  $region16: #{tpu_custom_call.1} parent=0 // pred_region
    _
  $region17: #{tpu_custom_call.1} parent=0 // pred_fallthru
    _
  // Predicated region
  $region18: #{tpu_custom_call.1} parent=0 // pred_check
    _
  $region19: #{tpu_custom_call.1} parent=0 // pred_check_branch
    %19 = sbr.rel (0) target = $region21
  $region20: #{tpu_custom_call.1} parent=0 // pred_region
    _
  $region21: #{tpu_custom_call.1} parent=0 // pred_fallthru
    _
  %v20 = vld [vmem:[%s0] sm:$0xff]
  %v21 = vld [vmem:[%s0 + $0x8] sm:$0xff]
  %v22 = vld [vmem:[%s0 + $0x10] sm:$0xff]
  %v23 = vld [vmem:[%s0 + $0x18] sm:$0xff]
  %v24 = vld [vmem:[%s1] sm:$0xff]
  %v25 = vld [vmem:[%s1 + $0x8] sm:$0xff]
  %v26 = vld [vmem:[%s1 + $0x10] sm:$0xff]
  %v27 = vld [vmem:[%s1 + $0x18] sm:$0xff]
  %v28 = vld [vmem:[%s1 + $0x20] sm:$0xff]
  %v29 = vld [vmem:[%s1 + $0x28] sm:$0xff]
  %v30 = vld [vmem:[%s1 + $0x30] sm:$0xff]
  %v31 = vld [vmem:[%s1 + $0x38] sm:$0xff]
  %vm32 = vcmask 154624
  %v33 = vsel %vm32, %v20, 0.0
  %v34 = vsel %vm32, %v21, 0.0
  %v35 = vadd.f32 %v33, %v34
  %v36 = vsel %vm32, %v22, 0.0
  %v37 = vadd.f32 %v35, %v36
  %v38 = vsel %vm32, %v23, 0.0
  %v39 = vadd.f32 %v37, %v38
  %v40 = vrot.slane %v39, 4
  %v41 = vadd.f32 %v39, %v40
  %v42 = vrot.slane %v41, 2
  %v43 = vadd.f32 %v41, %v42
  %v44 = vrot.slane %v43, 1
  %v45 = vadd.f32 %v43, %v44
  %v46 = vrcp.pop 32.0
  %v47 = vmul.f32 %v45, %v46
  %v48 = vsub.f32 %v20, %v47
  %v49 = vsub.f32 %v21, %v47
  %v50 = vsub.f32 %v22, %v47
  %v51 = vsub.f32 %v23, %v47
  %v52 = vmul.f32 %v48, %v48
  %v53 = vmul.f32 %v49, %v49
  %v54 = vmul.f32 %v50, %v50
  %v55 = vmul.f32 %v51, %v51
  %v56 = vsel %vm32, %v52, 0.0
  %v57 = vsel %vm32, %v53, 0.0
  %v58 = vadd.f32 %v56, %v57
  %v59 = vsel %vm32, %v54, 0.0
  %v60 = vadd.f32 %v58, %v59
  %v61 = vsel %vm32, %v55, 0.0
  %v62 = vadd.f32 %v60, %v61
  %v63 = vrot.slane %v62, 4
  %v64 = vadd.f32 %v62, %v63
  %v65 = vrot.slane %v64, 2
  %v66 = vadd.f32 %v64, %v65
  %v67 = vrot.slane %v66, 1
  %v68 = vadd.f32 %v66, %v67
  %v69 = vmul.f32 %v68, %v46
  %v70 = vrsqrt.pop %v69
  %v71 = vmul.f32 %v69, %v70
  %vm72 = vcmp.eq.f32.partialorder %v69, inf
  %v73 = vsel %vm72, %v69, %v71
  %vm74 = vcmp.eq.f32.partialorder %v69, 0.0
  %v75 = vand.u32 %v69, 2147483648
  %v76 = vsel %vm74, %v75, %v73
  %v77 = vadd.f32 %v76, 0.0001
  %v78 = vrcp.pop %v77
  %v79 = vmul.f32 %v48, %v78
  %v80 = vmul.f32 %v49, %v78
  %v81 = vmul.f32 %v50, %v78
  %v82 = vmul.f32 %v51, %v78
  %vm83 = vcmask 97280
  %v84 = vsel %vm83, %v24, 0.0
  %v85 = vsel %vm83, %v25, 0.0
  %v86 = vadd.f32 %v84, %v85
  %v87 = vsel %vm83, %v26, 0.0
  %v88 = vadd.f32 %v86, %v87
  %v89 = vsel %vm83, %v27, 0.0
  %v90 = vadd.f32 %v88, %v89
  %v91 = vsel %vm83, %v28, 0.0
  %v92 = vadd.f32 %v90, %v91
  %v93 = vsel %vm83, %v29, 0.0
  %v94 = vadd.f32 %v92, %v93
  %v95 = vsel %vm83, %v30, 0.0
  %v96 = vadd.f32 %v94, %v95
  %v97 = vsel %vm83, %v31, 0.0
  %v98 = vadd.f32 %v96, %v97
  %v99 = vrot.slane %v98, 4
  %v100 = vadd.f32 %v98, %v99
  %v101 = vrot.slane %v100, 2
  %v102 = vadd.f32 %v100, %v101
  %v103 = vrot.slane %v102, 1
  %v104 = vadd.f32 %v102, %v103
  %v105 = vrcp.pop 64.0
  %v106 = vmul.f32 %v104, %v105
  %v107 = vsub.f32 %v24, %v106
  %v108 = vsub.f32 %v25, %v106
  %v109 = vsub.f32 %v26, %v106
  %v110 = vsub.f32 %v27, %v106
  %v111 = vsub.f32 %v28, %v106
  %v112 = vsub.f32 %v29, %v106
  %v113 = vsub.f32 %v30, %v106
  %v114 = vsub.f32 %v31, %v106
  %v115 = vmul.f32 %v107, %v107
  %v116 = vmul.f32 %v108, %v108
  %v117 = vmul.f32 %v109, %v109
  %v118 = vmul.f32 %v110, %v110
  %v119 = vmul.f32 %v111, %v111
  %v120 = vmul.f32 %v112, %v112
  %v121 = vmul.f32 %v113, %v113
  %v122 = vmul.f32 %v114, %v114
  %v123 = vsel %vm83, %v115, 0.0
  %v124 = vsel %vm83, %v116, 0.0
  %v125 = vadd.f32 %v123, %v124
  %v126 = vsel %vm83, %v117, 0.0
  %v127 = vadd.f32 %v125, %v126
  %v128 = vsel %vm83, %v118, 0.0
  %v129 = vadd.f32 %v127, %v128
  %v130 = vsel %vm83, %v119, 0.0
  %v131 = vadd.f32 %v129, %v130
  %v132 = vsel %vm83, %v120, 0.0
  %v133 = vadd.f32 %v131, %v132
  %v134 = vsel %vm83, %v121, 0.0
  %v135 = vadd.f32 %v133, %v134
  %v136 = vsel %vm83, %v122, 0.0
  %v137 = vadd.f32 %v135, %v136
  %v138 = vrot.slane %v137, 4
  %v139 = vadd.f32 %v137, %v138
  %v140 = vrot.slane %v139, 2
  %v141 = vadd.f32 %v139, %v140
  %v142 = vrot.slane %v141, 1
  %v143 = vadd.f32 %v141, %v142
  %v144 = vmul.f32 %v143, %v105
  %v145 = vrsqrt.pop %v144
  %v146 = vmul.f32 %v144, %v145
  %vm147 = vcmp.eq.f32.partialorder %v144, inf
  %v148 = vsel %vm147, %v144, %v146
  %vm149 = vcmp.eq.f32.partialorder %v144, 0.0
  %v150 = vand.u32 %v144, 2147483648
  %v151 = vsel %vm149, %v150, %v148
  %v152 = vadd.f32 %v151, 0.0001
  %v153 = vrcp.pop %v152
  %v154 = vmul.f32 %v107, %v153
  %v155 = vmul.f32 %v108, %v153
  %v156 = vmul.f32 %v109, %v153
  %v157 = vmul.f32 %v110, %v153
  %v158 = vmul.f32 %v111, %v153
  %v159 = vmul.f32 %v112, %v153
  %v160 = vmul.f32 %v113, %v153
  %v161 = vmul.f32 %v114, %v153
  %v162 = vld [vmem:[%s4 + $0x38] sm:$0xff]
  %v163 = vld [vmem:[%s4 + $0x40] sm:$0xf]
  %v164 = vld [vmem:[%s4 + $0x48] sm:$0x1]
  %v165 = vlaneseq
  %v166 = vshrl.u32 %v165, 7
  %v167 = vsub.s32 0, %v166
  %v168 = vrot.slane %v164, %v167
  %v170 = vsel %vm83, %v154, 0
  %v173 = vsel %vm83, %v155, 0
  %v176 = vsel %vm83, %v156, 0
  %v179 = vsel %vm83, %v157, 0
  %v182 = vsel %vm83, %v158, 0
  %v185 = vsel %vm83, %v159, 0
  %v188 = vsel %vm83, %v160, 0
  %v191 = vsel %vm83, %v161, 0
  %vm193 = vcmask 1043456
  %v195 = vsel %vm193, %v163, 0
  %197 = vmatprep.subr.mxu0 0.0
  %198 = vmatpush1.msra.mxu0 0.0
  %199 = vmatprep.subr.mxu0 0.0
  %200 = vmatpush1.msra.mxu0 0.0
  %201 = vmatprep.subr.mxu0 0.0
  %202 = vmatpush1.msra.mxu0 0.0
  %203 = vmatprep.subr.mxu0 0.0
  %204 = vmatpush1.msra.mxu0 0.0
  %205 = vmatprep.subr.mxu0 0.0
  %206 = vmatpush1.msra.mxu0 0.0
  %207 = vmatprep.subr.mxu0 0.0
  %208 = vmatpush1.msra.mxu0 0.0
  %209 = vmatprep.subr.mxu0 0.0
  %210 = vmatpush1.msra.mxu0 0.0
  %211 = vmatprep.subr.mxu0 0.0
  %212 = vmatpush1.msra.mxu0 0.0
  %213 = vmatprep.subr.mxu0 0.0
  %214 = vmatpush1.msra.mxu0 0.0
  %215 = vmatprep.subr.mxu0 0.0
  %216 = vmatpush1.msra.mxu0 0.0
  %217 = vmatprep.subr.mxu0 0.0
  %218 = vmatpush1.msra.mxu0 0.0
  %219 = vmatprep.subr.mxu0 0.0
  %220 = vmatpush1.msra.mxu0 0.0
  %221 = vmatprep.subr.mxu0 0.0
  %222 = vmatpush1.msra.mxu0 0.0
  %223 = vmatprep.subr.mxu0 0.0
  %224 = vmatpush1.msra.mxu0 0.0
  %225 = vmatprep.subr.mxu0 0.0
  %226 = vmatpush1.msra.mxu0 %v195
  %227 = vmatprep.subr.mxu0 0.0
  %228 = vmatpush1.msra.mxu0 %v162
  %229 = vmatprep.subr.mxu0 0.0
  %230 = vmatpush2.msra.mxu0 0.0
  %231 = vmatprep.subr.mxu0 0.0
  %232 = vmatpush2.msra.mxu0 0.0
  %233 = vmatprep.subr.mxu0 0.0
  %234 = vmatpush2.msra.mxu0 0.0
  %235 = vmatprep.subr.mxu0 0.0
  %236 = vmatpush2.msra.mxu0 0.0
  %237 = vmatprep.subr.mxu0 0.0
  %238 = vmatpush2.msra.mxu0 0.0
  %239 = vmatprep.subr.mxu0 0.0
  %240 = vmatpush2.msra.mxu0 0.0
  %241 = vmatprep.subr.mxu0 0.0
  %242 = vmatpush2.msra.mxu0 0.0
  %243 = vmatprep.subr.mxu0 0.0
  %244 = vmatpush2.msra.mxu0 0.0
  %245 = vmatprep.subr.mxu0 0.0
  %246 = vmatpush2.msra.mxu0 0.0
  %247 = vmatprep.subr.mxu0 0.0
  %248 = vmatpush2.msra.mxu0 0.0
  %249 = vmatprep.subr.mxu0 0.0
  %250 = vmatpush2.msra.mxu0 0.0
  %251 = vmatprep.subr.mxu0 0.0
  %252 = vmatpush2.msra.mxu0 0.0
  %253 = vmatprep.subr.mxu0 0.0
  %254 = vmatpush2.msra.mxu0 0.0
  %255 = vmatprep.subr.mxu0 0.0
  %256 = vmatpush2.msra.mxu0 0.0
  %257 = vmatprep.subr.mxu0 0.0
  %258 = vmatpush2.msra.mxu0 0.0
  %259 = vmatprep.subr.mxu0 0.0
  %260 = vmatpush2.msra.mxu0 0.0
  %261 = vmatprep.mubr.f32.mxu0 0.0
  %262 = vmatmul.mubr.f32.gmra.mxu0 %v170
  %v263 = vpop.f32.mrf.mxu0
  %v264 = vadd.f32 %v168, %v263
  %v265 = vpop.f32.mrf.mxu0
  %266 = vmatprep.mubr.f32.mxu0 0.0
  %267 = vmatmul.mubr.f32.gmra.mxu0 %v173
  %v268 = vpop.f32.mrf.mxu0
  %v269 = vadd.f32 %v168, %v268
  %v270 = vpop.f32.mrf.mxu0
  %271 = vmatprep.mubr.f32.mxu0 0.0
  %272 = vmatmul.mubr.f32.gmra.mxu0 %v176
  %v273 = vpop.f32.mrf.mxu0
  %v274 = vadd.f32 %v168, %v273
  %v275 = vpop.f32.mrf.mxu0
  %276 = vmatprep.mubr.f32.mxu0 0.0
  %277 = vmatmul.mubr.f32.gmra.mxu0 %v179
  %v278 = vpop.f32.mrf.mxu0
  %v279 = vadd.f32 %v168, %v278
  %v280 = vpop.f32.mrf.mxu0
  %281 = vmatprep.mubr.f32.mxu0 0.0
  %282 = vmatmul.mubr.f32.gmra.mxu0 %v182
  %v283 = vpop.f32.mrf.mxu0
  %v284 = vadd.f32 %v168, %v283
  %v285 = vpop.f32.mrf.mxu0
  %286 = vmatprep.mubr.f32.mxu0 0.0
  %287 = vmatmul.mubr.f32.gmra.mxu0 %v185
  %v288 = vpop.f32.mrf.mxu0
  %v289 = vadd.f32 %v168, %v288
  %v290 = vpop.f32.mrf.mxu0
  %291 = vmatprep.mubr.f32.mxu0 0.0
  %292 = vmatmul.mubr.f32.gmra.mxu0 %v188
  %v293 = vpop.f32.mrf.mxu0
  %v294 = vadd.f32 %v168, %v293
  %v295 = vpop.f32.mrf.mxu0
  %296 = vmatprep.mubr.f32.mxu0 0.0
  %297 = vmatmul.mubr.f32.gmra.mxu0 %v191
  %v298 = vpop.f32.mrf.mxu0
  %v299 = vadd.f32 %v168, %v298
  %v300 = vpop.f32.mrf.mxu0
  %301 = vdwg.mxu0
  %vm302 = vcmp.ge.f32.partialorder %v264, 0.0
  %vm303 = vcmp.ge.f32.partialorder %v269, 0.0
  %vm304 = vcmp.ge.f32.partialorder %v274, 0.0
  %vm305 = vcmp.ge.f32.partialorder %v279, 0.0
  %vm306 = vcmp.ge.f32.partialorder %v284, 0.0
  %vm307 = vcmp.ge.f32.partialorder %v289, 0.0
  %vm308 = vcmp.ge.f32.partialorder %v294, 0.0
  %vm309 = vcmp.ge.f32.partialorder %v299, 0.0
  %v310 = vmul.f32 %v264, 0.01
  %v311 = vmul.f32 %v269, 0.01
  %v312 = vmul.f32 %v274, 0.01
  %v313 = vmul.f32 %v279, 0.01
  %v314 = vmul.f32 %v284, 0.01
  %v315 = vmul.f32 %v289, 0.01
  %v316 = vmul.f32 %v294, 0.01
  %v317 = vmul.f32 %v299, 0.01
  %v318 = vsel %vm302, %v264, %v310
  %v319 = vsel %vm303, %v269, %v311
  %v320 = vsel %vm304, %v274, %v312
  %v321 = vsel %vm305, %v279, %v313
  %v322 = vsel %vm306, %v284, %v314
  %v323 = vsel %vm307, %v289, %v315
  %v324 = vsel %vm308, %v294, %v316
  %v325 = vsel %vm309, %v299, %v317
  %v326 = vld [vmem:[%s4 + $0x50] sm:$0xff]
  %v327 = vld [vmem:[%s4 + $0x58] sm:$0xff]
  %v328 = vld [vmem:[%s4 + $0x60] sm:$0x1]
  %v329 = vlaneseq
  %v330 = vshrl.u32 %v329, 7
  %v331 = vsub.s32 0, %v330
  %v332 = vrot.slane %v328, %v331
  %vm333 = vcmask 130048
  %v335 = vsel %vm333, %v318, 0
  %v338 = vsel %vm333, %v319, 0
  %v341 = vsel %vm333, %v320, 0
  %v344 = vsel %vm333, %v321, 0
  %v347 = vsel %vm333, %v322, 0
  %v350 = vsel %vm333, %v323, 0
  %v353 = vsel %vm333, %v324, 0
  %v356 = vsel %vm333, %v325, 0
  %358 = vmatprep.subr.mxu0 0.0
  %359 = vmatpush1.msra.mxu0 0.0
  %360 = vmatprep.subr.mxu0 0.0
  %361 = vmatpush1.msra.mxu0 0.0
  %362 = vmatprep.subr.mxu0 0.0
  %363 = vmatpush1.msra.mxu0 0.0
  %364 = vmatprep.subr.mxu0 0.0
  %365 = vmatpush1.msra.mxu0 0.0
  %366 = vmatprep.subr.mxu0 0.0
  %367 = vmatpush1.msra.mxu0 0.0
  %368 = vmatprep.subr.mxu0 0.0
  %369 = vmatpush1.msra.mxu0 0.0
  %370 = vmatprep.subr.mxu0 0.0
  %371 = vmatpush1.msra.mxu0 0.0
  %372 = vmatprep.subr.mxu0 0.0
  %373 = vmatpush1.msra.mxu0 0.0
  %374 = vmatprep.subr.mxu0 0.0
  %375 = vmatpush1.msra.mxu0 0.0
  %376 = vmatprep.subr.mxu0 0.0
  %377 = vmatpush1.msra.mxu0 0.0
  %378 = vmatprep.subr.mxu0 0.0
  %379 = vmatpush1.msra.mxu0 0.0
  %380 = vmatprep.subr.mxu0 0.0
  %381 = vmatpush1.msra.mxu0 0.0
  %382 = vmatprep.subr.mxu0 0.0
  %383 = vmatpush1.msra.mxu0 0.0
  %384 = vmatprep.subr.mxu0 0.0
  %385 = vmatpush1.msra.mxu0 0.0
  %386 = vmatprep.subr.mxu0 0.0
  %387 = vmatpush1.msra.mxu0 %v327
  %388 = vmatprep.subr.mxu0 0.0
  %389 = vmatpush1.msra.mxu0 %v326
  %390 = vmatprep.subr.mxu0 0.0
  %391 = vmatpush2.msra.mxu0 0.0
  %392 = vmatprep.subr.mxu0 0.0
  %393 = vmatpush2.msra.mxu0 0.0
  %394 = vmatprep.subr.mxu0 0.0
  %395 = vmatpush2.msra.mxu0 0.0
  %396 = vmatprep.subr.mxu0 0.0
  %397 = vmatpush2.msra.mxu0 0.0
  %398 = vmatprep.subr.mxu0 0.0
  %399 = vmatpush2.msra.mxu0 0.0
  %400 = vmatprep.subr.mxu0 0.0
  %401 = vmatpush2.msra.mxu0 0.0
  %402 = vmatprep.subr.mxu0 0.0
  %403 = vmatpush2.msra.mxu0 0.0
  %404 = vmatprep.subr.mxu0 0.0
  %405 = vmatpush2.msra.mxu0 0.0
  %406 = vmatprep.subr.mxu0 0.0
  %407 = vmatpush2.msra.mxu0 0.0
  %408 = vmatprep.subr.mxu0 0.0
  %409 = vmatpush2.msra.mxu0 0.0
  %410 = vmatprep.subr.mxu0 0.0
  %411 = vmatpush2.msra.mxu0 0.0
  %412 = vmatprep.subr.mxu0 0.0
  %413 = vmatpush2.msra.mxu0 0.0
  %414 = vmatprep.subr.mxu0 0.0
  %415 = vmatpush2.msra.mxu0 0.0
  %416 = vmatprep.subr.mxu0 0.0
  %417 = vmatpush2.msra.mxu0 0.0
  %418 = vmatprep.subr.mxu0 0.0
  %419 = vmatpush2.msra.mxu0 0.0
  %420 = vmatprep.subr.mxu0 0.0
  %421 = vmatpush2.msra.mxu0 0.0
  %422 = vmatprep.mubr.f32.mxu0 0.0
  %423 = vmatmul.mubr.f32.gmra.mxu0 %v335
  %v424 = vpop.f32.mrf.mxu0
  %v425 = vadd.f32 %v332, %v424
  %v426 = vpop.f32.mrf.mxu0
  %427 = vmatprep.mubr.f32.mxu0 0.0
  %428 = vmatmul.mubr.f32.gmra.mxu0 %v338
  %v429 = vpop.f32.mrf.mxu0
  %v430 = vadd.f32 %v332, %v429
  %v431 = vpop.f32.mrf.mxu0
  %432 = vmatprep.mubr.f32.mxu0 0.0
  %433 = vmatmul.mubr.f32.gmra.mxu0 %v341
  %v434 = vpop.f32.mrf.mxu0
  %v435 = vadd.f32 %v332, %v434
  %v436 = vpop.f32.mrf.mxu0
  %437 = vmatprep.mubr.f32.mxu0 0.0
  %438 = vmatmul.mubr.f32.gmra.mxu0 %v344
  %v439 = vpop.f32.mrf.mxu0
  %v440 = vadd.f32 %v332, %v439
  %v441 = vpop.f32.mrf.mxu0
  %442 = vmatprep.mubr.f32.mxu0 0.0
  %443 = vmatmul.mubr.f32.gmra.mxu0 %v347
  %v444 = vpop.f32.mrf.mxu0
  %v445 = vadd.f32 %v332, %v444
  %v446 = vpop.f32.mrf.mxu0
  %447 = vmatprep.mubr.f32.mxu0 0.0
  %448 = vmatmul.mubr.f32.gmra.mxu0 %v350
  %v449 = vpop.f32.mrf.mxu0
  %v450 = vadd.f32 %v332, %v449
  %v451 = vpop.f32.mrf.mxu0
  %452 = vmatprep.mubr.f32.mxu0 0.0
  %453 = vmatmul.mubr.f32.gmra.mxu0 %v353
  %v454 = vpop.f32.mrf.mxu0
  %v455 = vadd.f32 %v332, %v454
  %v456 = vpop.f32.mrf.mxu0
  %457 = vmatprep.mubr.f32.mxu0 0.0
  %458 = vmatmul.mubr.f32.gmra.mxu0 %v356
  %v459 = vpop.f32.mrf.mxu0
  %v460 = vadd.f32 %v332, %v459
  %v461 = vpop.f32.mrf.mxu0
  %462 = vdwg.mxu0
  %vm463 = vcmp.ge.f32.partialorder %v425, 0.0
  %vm464 = vcmp.ge.f32.partialorder %v430, 0.0
  %vm465 = vcmp.ge.f32.partialorder %v435, 0.0
  %vm466 = vcmp.ge.f32.partialorder %v440, 0.0
  %vm467 = vcmp.ge.f32.partialorder %v445, 0.0
  %vm468 = vcmp.ge.f32.partialorder %v450, 0.0
  %vm469 = vcmp.ge.f32.partialorder %v455, 0.0
  %vm470 = vcmp.ge.f32.partialorder %v460, 0.0
  %v471 = vmul.f32 %v425, 0.01
  %v472 = vmul.f32 %v430, 0.01
  %v473 = vmul.f32 %v435, 0.01
  %v474 = vmul.f32 %v440, 0.01
  %v475 = vmul.f32 %v445, 0.01
  %v476 = vmul.f32 %v450, 0.01
  %v477 = vmul.f32 %v455, 0.01
  %v478 = vmul.f32 %v460, 0.01
  %v479 = vsel %vm463, %v425, %v471
  %v480 = vsel %vm464, %v430, %v472
  %v481 = vsel %vm465, %v435, %v473
  %v482 = vsel %vm466, %v440, %v474
  %v483 = vsel %vm467, %v445, %v475
  %v484 = vsel %vm468, %v450, %v476
  %v485 = vsel %vm469, %v455, %v477
  %v486 = vsel %vm470, %v460, %v478
  %v487 = vld [vmem:[%s4 + $0x68] sm:$0xff]
  %v488 = vld [vmem:[%s4 + $0x70] sm:$0xff]
  %v489 = vld [vmem:[%s4 + $0x78] sm:$0x1]
  %v490 = vlaneseq
  %v491 = vshrl.u32 %v490, 7
  %v492 = vsub.s32 0, %v491
  %v493 = vrot.slane %v489, %v492
  %v495 = vsel %vm333, %v479, 0
  %v498 = vsel %vm333, %v480, 0
  %v501 = vsel %vm333, %v481, 0
  %v504 = vsel %vm333, %v482, 0
  %v507 = vsel %vm333, %v483, 0
  %v510 = vsel %vm333, %v484, 0
  %v513 = vsel %vm333, %v485, 0
  %v516 = vsel %vm333, %v486, 0
  %518 = vmatprep.subr.mxu0 0.0
  %519 = vmatpush1.msra.mxu0 0.0
  %520 = vmatprep.subr.mxu0 0.0
  %521 = vmatpush1.msra.mxu0 0.0
  %522 = vmatprep.subr.mxu0 0.0
  %523 = vmatpush1.msra.mxu0 0.0
  %524 = vmatprep.subr.mxu0 0.0
  %525 = vmatpush1.msra.mxu0 0.0
  %526 = vmatprep.subr.mxu0 0.0
  %527 = vmatpush1.msra.mxu0 0.0
  %528 = vmatprep.subr.mxu0 0.0
  %529 = vmatpush1.msra.mxu0 0.0
  %530 = vmatprep.subr.mxu0 0.0
  %531 = vmatpush1.msra.mxu0 0.0
  %532 = vmatprep.subr.mxu0 0.0
  %533 = vmatpush1.msra.mxu0 0.0
  %534 = vmatprep.subr.mxu0 0.0
  %535 = vmatpush1.msra.mxu0 0.0
  %536 = vmatprep.subr.mxu0 0.0
  %537 = vmatpush1.msra.mxu0 0.0
  %538 = vmatprep.subr.mxu0 0.0
  %539 = vmatpush1.msra.mxu0 0.0
  %540 = vmatprep.subr.mxu0 0.0
  %541 = vmatpush1.msra.mxu0 0.0
  %542 = vmatprep.subr.mxu0 0.0
  %543 = vmatpush1.msra.mxu0 0.0
  %544 = vmatprep.subr.mxu0 0.0
  %545 = vmatpush1.msra.mxu0 0.0
  %546 = vmatprep.subr.mxu0 0.0
  %547 = vmatpush1.msra.mxu0 %v488
  %548 = vmatprep.subr.mxu0 0.0
  %549 = vmatpush1.msra.mxu0 %v487
  %550 = vmatprep.subr.mxu0 0.0
  %551 = vmatpush2.msra.mxu0 0.0
  %552 = vmatprep.subr.mxu0 0.0
  %553 = vmatpush2.msra.mxu0 0.0
  %554 = vmatprep.subr.mxu0 0.0
  %555 = vmatpush2.msra.mxu0 0.0
  %556 = vmatprep.subr.mxu0 0.0
  %557 = vmatpush2.msra.mxu0 0.0
  %558 = vmatprep.subr.mxu0 0.0
  %559 = vmatpush2.msra.mxu0 0.0
  %560 = vmatprep.subr.mxu0 0.0
  %561 = vmatpush2.msra.mxu0 0.0
  %562 = vmatprep.subr.mxu0 0.0
  %563 = vmatpush2.msra.mxu0 0.0
  %564 = vmatprep.subr.mxu0 0.0
  %565 = vmatpush2.msra.mxu0 0.0
  %566 = vmatprep.subr.mxu0 0.0
  %567 = vmatpush2.msra.mxu0 0.0
  %568 = vmatprep.subr.mxu0 0.0
  %569 = vmatpush2.msra.mxu0 0.0
  %570 = vmatprep.subr.mxu0 0.0
  %571 = vmatpush2.msra.mxu0 0.0
  %572 = vmatprep.subr.mxu0 0.0
  %573 = vmatpush2.msra.mxu0 0.0
  %574 = vmatprep.subr.mxu0 0.0
  %575 = vmatpush2.msra.mxu0 0.0
  %576 = vmatprep.subr.mxu0 0.0
  %577 = vmatpush2.msra.mxu0 0.0
  %578 = vmatprep.subr.mxu0 0.0
  %579 = vmatpush2.msra.mxu0 0.0
  %580 = vmatprep.subr.mxu0 0.0
  %581 = vmatpush2.msra.mxu0 0.0
  %582 = vmatprep.mubr.f32.mxu0 0.0
  %583 = vmatmul.mubr.f32.gmra.mxu0 %v495
  %v584 = vpop.f32.mrf.mxu0
  %v585 = vadd.f32 %v493, %v584
  %v586 = vpop.f32.mrf.mxu0
  %587 = vmatprep.mubr.f32.mxu0 0.0
  %588 = vmatmul.mubr.f32.gmra.mxu0 %v498
  %v589 = vpop.f32.mrf.mxu0
  %v590 = vadd.f32 %v493, %v589
  %v591 = vpop.f32.mrf.mxu0
  %592 = vmatprep.mubr.f32.mxu0 0.0
  %593 = vmatmul.mubr.f32.gmra.mxu0 %v501
  %v594 = vpop.f32.mrf.mxu0
  %v595 = vadd.f32 %v493, %v594
  %v596 = vpop.f32.mrf.mxu0
  %597 = vmatprep.mubr.f32.mxu0 0.0
  %598 = vmatmul.mubr.f32.gmra.mxu0 %v504
  %v599 = vpop.f32.mrf.mxu0
  %v600 = vadd.f32 %v493, %v599
  %v601 = vpop.f32.mrf.mxu0
  %602 = vmatprep.mubr.f32.mxu0 0.0
  %603 = vmatmul.mubr.f32.gmra.mxu0 %v507
  %v604 = vpop.f32.mrf.mxu0
  %v605 = vadd.f32 %v493, %v604
  %v606 = vpop.f32.mrf.mxu0
  %607 = vmatprep.mubr.f32.mxu0 0.0
  %608 = vmatmul.mubr.f32.gmra.mxu0 %v510
  %v609 = vpop.f32.mrf.mxu0
  %v610 = vadd.f32 %v493, %v609
  %v611 = vpop.f32.mrf.mxu0
  %612 = vmatprep.mubr.f32.mxu0 0.0
  %613 = vmatmul.mubr.f32.gmra.mxu0 %v513
  %v614 = vpop.f32.mrf.mxu0
  %v615 = vadd.f32 %v493, %v614
  %v616 = vpop.f32.mrf.mxu0
  %617 = vmatprep.mubr.f32.mxu0 0.0
  %618 = vmatmul.mubr.f32.gmra.mxu0 %v516
  %v619 = vpop.f32.mrf.mxu0
  %v620 = vadd.f32 %v493, %v619
  %v621 = vpop.f32.mrf.mxu0
  %622 = vdwg.mxu0
  %vm623 = vcmp.ge.f32.partialorder %v585, 0.0
  %vm624 = vcmp.ge.f32.partialorder %v590, 0.0
  %vm625 = vcmp.ge.f32.partialorder %v595, 0.0
  %vm626 = vcmp.ge.f32.partialorder %v600, 0.0
  %vm627 = vcmp.ge.f32.partialorder %v605, 0.0
  %vm628 = vcmp.ge.f32.partialorder %v610, 0.0
  %vm629 = vcmp.ge.f32.partialorder %v615, 0.0
  %vm630 = vcmp.ge.f32.partialorder %v620, 0.0
  %v631 = vmul.f32 %v585, 0.01
  %v632 = vmul.f32 %v590, 0.01
  %v633 = vmul.f32 %v595, 0.01
  %v634 = vmul.f32 %v600, 0.01
  %v635 = vmul.f32 %v605, 0.01
  %v636 = vmul.f32 %v610, 0.01
  %v637 = vmul.f32 %v615, 0.01
  %v638 = vmul.f32 %v620, 0.01
  %v639 = vsel %vm623, %v585, %v631
  %v640 = vsel %vm624, %v590, %v632
  %v641 = vsel %vm625, %v595, %v633
  %v642 = vsel %vm626, %v600, %v634
  %v643 = vsel %vm627, %v605, %v635
  %v644 = vsel %vm628, %v610, %v636
  %v645 = vsel %vm629, %v615, %v637
  %v646 = vsel %vm630, %v620, %v638
  %v647 = vld [vmem:[%s4 + $0x80] sm:$0xff]
  %v648 = vld [vmem:[%s4 + $0x88] sm:$0xff]
  %v649 = vld [vmem:[%s4 + $0x90] sm:$0xff]
  %v650 = vld [vmem:[%s4 + $0x98] sm:$0xff]
  %v651 = vld [vmem:[%s4 + $0xa0] sm:$0x1]
  %v652 = vlaneseq
  %v653 = vshrl.u32 %v652, 7
  %v654 = vsub.s32 0, %v653
  %v655 = vrot.slane %v651, %v654
  %vm656 = vcmask 261120
  %v658 = vsel %vm656, %v639, 0
  %v661 = vsel %vm656, %v640, 0
  %v664 = vsel %vm656, %v641, 0
  %v667 = vsel %vm656, %v642, 0
  %v670 = vsel %vm656, %v643, 0
  %v673 = vsel %vm656, %v644, 0
  %v676 = vsel %vm656, %v645, 0
  %v679 = vsel %vm656, %v646, 0
  %681 = vmatprep.subr.mxu0 0.0
  %682 = vmatpush1.msra.mxu0 0.0
  %683 = vmatprep.subr.mxu0 0.0
  %684 = vmatpush1.msra.mxu0 0.0
  %685 = vmatprep.subr.mxu0 0.0
  %686 = vmatpush1.msra.mxu0 0.0
  %687 = vmatprep.subr.mxu0 0.0
  %688 = vmatpush1.msra.mxu0 0.0
  %689 = vmatprep.subr.mxu0 0.0
  %690 = vmatpush1.msra.mxu0 0.0
  %691 = vmatprep.subr.mxu0 0.0
  %692 = vmatpush1.msra.mxu0 0.0
  %693 = vmatprep.subr.mxu0 0.0
  %694 = vmatpush1.msra.mxu0 0.0
  %695 = vmatprep.subr.mxu0 0.0
  %696 = vmatpush1.msra.mxu0 0.0
  %697 = vmatprep.subr.mxu0 0.0
  %698 = vmatpush1.msra.mxu0 0.0
  %699 = vmatprep.subr.mxu0 0.0
  %700 = vmatpush1.msra.mxu0 0.0
  %701 = vmatprep.subr.mxu0 0.0
  %702 = vmatpush1.msra.mxu0 0.0
  %703 = vmatprep.subr.mxu0 0.0
  %704 = vmatpush1.msra.mxu0 0.0
  %705 = vmatprep.subr.mxu0 0.0
  %706 = vmatpush1.msra.mxu0 %v650
  %707 = vmatprep.subr.mxu0 0.0
  %708 = vmatpush1.msra.mxu0 %v649
  %709 = vmatprep.subr.mxu0 0.0
  %710 = vmatpush1.msra.mxu0 %v648
  %711 = vmatprep.subr.mxu0 0.0
  %712 = vmatpush1.msra.mxu0 %v647
  %713 = vmatprep.subr.mxu0 0.0
  %714 = vmatpush2.msra.mxu0 0.0
  %715 = vmatprep.subr.mxu0 0.0
  %716 = vmatpush2.msra.mxu0 0.0
  %717 = vmatprep.subr.mxu0 0.0
  %718 = vmatpush2.msra.mxu0 0.0
  %719 = vmatprep.subr.mxu0 0.0
  %720 = vmatpush2.msra.mxu0 0.0
  %721 = vmatprep.subr.mxu0 0.0
  %722 = vmatpush2.msra.mxu0 0.0
  %723 = vmatprep.subr.mxu0 0.0
  %724 = vmatpush2.msra.mxu0 0.0
  %725 = vmatprep.subr.mxu0 0.0
  %726 = vmatpush2.msra.mxu0 0.0
  %727 = vmatprep.subr.mxu0 0.0
  %728 = vmatpush2.msra.mxu0 0.0
  %729 = vmatprep.subr.mxu0 0.0
  %730 = vmatpush2.msra.mxu0 0.0
  %731 = vmatprep.subr.mxu0 0.0
  %732 = vmatpush2.msra.mxu0 0.0
  %733 = vmatprep.subr.mxu0 0.0
  %734 = vmatpush2.msra.mxu0 0.0
  %735 = vmatprep.subr.mxu0 0.0
  %736 = vmatpush2.msra.mxu0 0.0
  %737 = vmatprep.subr.mxu0 0.0
  %738 = vmatpush2.msra.mxu0 0.0
  %739 = vmatprep.subr.mxu0 0.0
  %740 = vmatpush2.msra.mxu0 0.0
  %741 = vmatprep.subr.mxu0 0.0
  %742 = vmatpush2.msra.mxu0 0.0
  %743 = vmatprep.subr.mxu0 0.0
  %744 = vmatpush2.msra.mxu0 0.0
  %745 = vmatprep.mubr.f32.mxu0 0.0
  %746 = vmatmul.mubr.f32.gmra.mxu0 %v658
  %v747 = vpop.f32.mrf.mxu0
  %v748 = vadd.f32 %v655, %v747
  %v749 = vpop.f32.mrf.mxu0
  %750 = vmatprep.mubr.f32.mxu0 0.0
  %751 = vmatmul.mubr.f32.gmra.mxu0 %v661
  %v752 = vpop.f32.mrf.mxu0
  %v753 = vadd.f32 %v655, %v752
  %v754 = vpop.f32.mrf.mxu0
  %755 = vmatprep.mubr.f32.mxu0 0.0
  %756 = vmatmul.mubr.f32.gmra.mxu0 %v664
  %v757 = vpop.f32.mrf.mxu0
  %v758 = vadd.f32 %v655, %v757
  %v759 = vpop.f32.mrf.mxu0
  %760 = vmatprep.mubr.f32.mxu0 0.0
  %761 = vmatmul.mubr.f32.gmra.mxu0 %v667
  %v762 = vpop.f32.mrf.mxu0
  %v763 = vadd.f32 %v655, %v762
  %v764 = vpop.f32.mrf.mxu0
  %765 = vmatprep.mubr.f32.mxu0 0.0
  %766 = vmatmul.mubr.f32.gmra.mxu0 %v670
  %v767 = vpop.f32.mrf.mxu0
  %v768 = vadd.f32 %v655, %v767
  %v769 = vpop.f32.mrf.mxu0
  %770 = vmatprep.mubr.f32.mxu0 0.0
  %771 = vmatmul.mubr.f32.gmra.mxu0 %v673
  %v772 = vpop.f32.mrf.mxu0
  %v773 = vadd.f32 %v655, %v772
  %v774 = vpop.f32.mrf.mxu0
  %775 = vmatprep.mubr.f32.mxu0 0.0
  %776 = vmatmul.mubr.f32.gmra.mxu0 %v676
  %v777 = vpop.f32.mrf.mxu0
  %v778 = vadd.f32 %v655, %v777
  %v779 = vpop.f32.mrf.mxu0
  %780 = vmatprep.mubr.f32.mxu0 0.0
  %781 = vmatmul.mubr.f32.gmra.mxu0 %v679
  %v782 = vpop.f32.mrf.mxu0
  %v783 = vadd.f32 %v655, %v782
  %v784 = vpop.f32.mrf.mxu0
  %785 = vdwg.mxu0
  %v786 = vand.u32 2147483647, %v748
  %v787 = vand.u32 2147483647, %v753
  %v788 = vand.u32 2147483647, %v758
  %v789 = vand.u32 2147483647, %v763
  %v790 = vand.u32 2147483647, %v768
  %v791 = vand.u32 2147483647, %v773
  %v792 = vand.u32 2147483647, %v778
  %v793 = vand.u32 2147483647, %v783
  %v794 = vsub.f32 0.0, %v786
  %v795 = vsub.f32 0.0, %v787
  %v796 = vsub.f32 0.0, %v788
  %v797 = vsub.f32 0.0, %v789
  %v798 = vsub.f32 0.0, %v790
  %v799 = vsub.f32 0.0, %v791
  %v800 = vsub.f32 0.0, %v792
  %v801 = vsub.f32 0.0, %v793
  %v802 = vmul.f32 %v794, 1.442695
  %v803 = vpow.pop %v802
  %v804 = vmul.f32 %v795, 1.442695
  %v805 = vpow.pop %v804
  %v806 = vmul.f32 %v796, 1.442695
  %v807 = vpow.pop %v806
  %v808 = vmul.f32 %v797, 1.442695
  %v809 = vpow.pop %v808
  %v810 = vmul.f32 %v798, 1.442695
  %v811 = vpow.pop %v810
  %v812 = vmul.f32 %v799, 1.442695
  %v813 = vpow.pop %v812
  %v814 = vmul.f32 %v800, 1.442695
  %v815 = vpow.pop %v814
  %v816 = vmul.f32 %v801, 1.442695
  %v817 = vpow.pop %v816
  %vm818 = vcmp.ge.f32.partialorder %v748, 0.0
  %vm819 = vcmp.ge.f32.partialorder %v753, 0.0
  %vm820 = vcmp.ge.f32.partialorder %v758, 0.0
  %vm821 = vcmp.ge.f32.partialorder %v763, 0.0
  %vm822 = vcmp.ge.f32.partialorder %v768, 0.0
  %vm823 = vcmp.ge.f32.partialorder %v773, 0.0
  %vm824 = vcmp.ge.f32.partialorder %v778, 0.0
  %vm825 = vcmp.ge.f32.partialorder %v783, 0.0
  %v826 = vsel %vm818, 1.0, %v803
  %v827 = vsel %vm819, 1.0, %v805
  %v828 = vsel %vm820, 1.0, %v807
  %v829 = vsel %vm821, 1.0, %v809
  %v830 = vsel %vm822, 1.0, %v811
  %v831 = vsel %vm823, 1.0, %v813
  %v832 = vsel %vm824, 1.0, %v815
  %v833 = vsel %vm825, 1.0, %v817
  %v834 = vadd.f32 %v803, 1.0
  %v835 = vadd.f32 %v805, 1.0
  %v836 = vadd.f32 %v807, 1.0
  %v837 = vadd.f32 %v809, 1.0
  %v838 = vadd.f32 %v811, 1.0
  %v839 = vadd.f32 %v813, 1.0
  %v840 = vadd.f32 %v815, 1.0
  %v841 = vadd.f32 %v817, 1.0
  %v842 = vrcp.pop %v834
  %v843 = vmul.f32 %v826, %v842
  %v844 = vrcp.pop %v835
  %v845 = vmul.f32 %v827, %v844
  %v846 = vrcp.pop %v836
  %v847 = vmul.f32 %v828, %v846
  %v848 = vrcp.pop %v837
  %v849 = vmul.f32 %v829, %v848
  %v850 = vrcp.pop %v838
  %v851 = vmul.f32 %v830, %v850
  %v852 = vrcp.pop %v839
  %v853 = vmul.f32 %v831, %v852
  %v854 = vrcp.pop %v840
  %v855 = vmul.f32 %v832, %v854
  %v856 = vrcp.pop %v841
  %v857 = vmul.f32 %v833, %v856
  %v858 = vld [vmem:[%s4] sm:$0xff]
  %v859 = vld [vmem:[%s4 + $0x8] sm:$0xff]
  %v860 = vld [vmem:[%s4 + $0x10] sm:$0x7]
  %v861 = vld [vmem:[%s4 + $0x18] sm:$0x1]
  %v862 = vlaneseq
  %v863 = vshrl.u32 %v862, 7
  %v864 = vsub.s32 0, %v863
  %v865 = vrot.slane %v861, %v864
  %v867 = vsel %vm32, %v79, 0
  %v870 = vsel %vm32, %v80, 0
  %v873 = vsel %vm32, %v81, 0
  %v876 = vsel %vm32, %v82, 0
  %vm878 = vcmask 1042432
  %v880 = vsel %vm878, %v860, 0
  %882 = vmatprep.subr.mxu0 0.0
  %883 = vmatpush1.msra.mxu0 0.0
  %884 = vmatprep.subr.mxu0 0.0
  %885 = vmatpush1.msra.mxu0 0.0
  %886 = vmatprep.subr.mxu0 0.0
  %887 = vmatpush1.msra.mxu0 0.0
  %888 = vmatprep.subr.mxu0 0.0
  %889 = vmatpush1.msra.mxu0 0.0
  %890 = vmatprep.subr.mxu0 0.0
  %891 = vmatpush1.msra.mxu0 0.0
  %892 = vmatprep.subr.mxu0 0.0
  %893 = vmatpush1.msra.mxu0 0.0
  %894 = vmatprep.subr.mxu0 0.0
  %895 = vmatpush1.msra.mxu0 0.0
  %896 = vmatprep.subr.mxu0 0.0
  %897 = vmatpush1.msra.mxu0 0.0
  %898 = vmatprep.subr.mxu0 0.0
  %899 = vmatpush1.msra.mxu0 0.0
  %900 = vmatprep.subr.mxu0 0.0
  %901 = vmatpush1.msra.mxu0 0.0
  %902 = vmatprep.subr.mxu0 0.0
  %903 = vmatpush1.msra.mxu0 0.0
  %904 = vmatprep.subr.mxu0 0.0
  %905 = vmatpush1.msra.mxu0 0.0
  %906 = vmatprep.subr.mxu0 0.0
  %907 = vmatpush1.msra.mxu0 0.0
  %908 = vmatprep.subr.mxu0 0.0
  %909 = vmatpush1.msra.mxu0 %v880
  %910 = vmatprep.subr.mxu0 0.0
  %911 = vmatpush1.msra.mxu0 %v859
  %912 = vmatprep.subr.mxu0 0.0
  %913 = vmatpush1.msra.mxu0 %v858
  %914 = vmatprep.subr.mxu0 0.0
  %915 = vmatpush2.msra.mxu0 0.0
  %916 = vmatprep.subr.mxu0 0.0
  %917 = vmatpush2.msra.mxu0 0.0
  %918 = vmatprep.subr.mxu0 0.0
  %919 = vmatpush2.msra.mxu0 0.0
  %920 = vmatprep.subr.mxu0 0.0
  %921 = vmatpush2.msra.mxu0 0.0
  %922 = vmatprep.subr.mxu0 0.0
  %923 = vmatpush2.msra.mxu0 0.0
  %924 = vmatprep.subr.mxu0 0.0
  %925 = vmatpush2.msra.mxu0 0.0
  %926 = vmatprep.subr.mxu0 0.0
  %927 = vmatpush2.msra.mxu0 0.0
  %928 = vmatprep.subr.mxu0 0.0
  %929 = vmatpush2.msra.mxu0 0.0
  %930 = vmatprep.subr.mxu0 0.0
  %931 = vmatpush2.msra.mxu0 0.0
  %932 = vmatprep.subr.mxu0 0.0
  %933 = vmatpush2.msra.mxu0 0.0
  %934 = vmatprep.subr.mxu0 0.0
  %935 = vmatpush2.msra.mxu0 0.0
  %936 = vmatprep.subr.mxu0 0.0
  %937 = vmatpush2.msra.mxu0 0.0
  %938 = vmatprep.subr.mxu0 0.0
  %939 = vmatpush2.msra.mxu0 0.0
  %940 = vmatprep.subr.mxu0 0.0
  %941 = vmatpush2.msra.mxu0 0.0
  %942 = vmatprep.subr.mxu0 0.0
  %943 = vmatpush2.msra.mxu0 0.0
  %944 = vmatprep.subr.mxu0 0.0
  %945 = vmatpush2.msra.mxu0 0.0
  %946 = vmatprep.mubr.f32.mxu0 0.0
  %947 = vmatmul.mubr.f32.gmra.mxu0 %v867
  %v948 = vpop.f32.mrf.mxu0
  %v949 = vadd.f32 %v865, %v948
  %v950 = vpop.f32.mrf.mxu0
  %951 = vmatprep.mubr.f32.mxu0 0.0
  %952 = vmatmul.mubr.f32.gmra.mxu0 %v870
  %v953 = vpop.f32.mrf.mxu0
  %v954 = vadd.f32 %v865, %v953
  %v955 = vpop.f32.mrf.mxu0
  %956 = vmatprep.mubr.f32.mxu0 0.0
  %957 = vmatmul.mubr.f32.gmra.mxu0 %v873
  %v958 = vpop.f32.mrf.mxu0
  %v959 = vadd.f32 %v865, %v958
  %v960 = vpop.f32.mrf.mxu0
  %961 = vmatprep.mubr.f32.mxu0 0.0
  %962 = vmatmul.mubr.f32.gmra.mxu0 %v876
  %v963 = vpop.f32.mrf.mxu0
  %v964 = vadd.f32 %v865, %v963
  %v965 = vpop.f32.mrf.mxu0
  %966 = vdwg.mxu0
  %vm967 = vcmp.ge.f32.partialorder %v949, 0.0
  %vm968 = vcmp.ge.f32.partialorder %v954, 0.0
  %vm969 = vcmp.ge.f32.partialorder %v959, 0.0
  %vm970 = vcmp.ge.f32.partialorder %v964, 0.0
  %v971 = vmul.f32 %v949, 0.01
  %v972 = vmul.f32 %v954, 0.01
  %v973 = vmul.f32 %v959, 0.01
  %v974 = vmul.f32 %v964, 0.01
  %v975 = vsel %vm967, %v949, %v971
  %v976 = vsel %vm968, %v954, %v972
  %v977 = vsel %vm969, %v959, %v973
  %v978 = vsel %vm970, %v964, %v974
  %v979 = vld [vmem:[%s4 + $0x20] sm:$0xff]
  %v980 = vld [vmem:[%s4 + $0x28] sm:$0xff]
  %v981 = vld [vmem:[%s4 + $0x30] sm:$0x1]
  %v982 = vlaneseq
  %v983 = vshrl.u32 %v982, 7
  %v984 = vsub.s32 0, %v983
  %v985 = vrot.slane %v981, %v984
  %v987 = vsel %vm333, %v975, 0
  %v990 = vsel %vm333, %v976, 0
  %v993 = vsel %vm333, %v977, 0
  %v996 = vsel %vm333, %v978, 0
  %998 = vmatprep.subr.mxu0 0.0
  %999 = vmatpush1.msra.mxu0 0.0
  %1000 = vmatprep.subr.mxu0 0.0
  %1001 = vmatpush1.msra.mxu0 0.0
  %1002 = vmatprep.subr.mxu0 0.0
  %1003 = vmatpush1.msra.mxu0 0.0
  %1004 = vmatprep.subr.mxu0 0.0
  %1005 = vmatpush1.msra.mxu0 0.0
  %1006 = vmatprep.subr.mxu0 0.0
  %1007 = vmatpush1.msra.mxu0 0.0
  %1008 = vmatprep.subr.mxu0 0.0
  %1009 = vmatpush1.msra.mxu0 0.0
  %1010 = vmatprep.subr.mxu0 0.0
  %1011 = vmatpush1.msra.mxu0 0.0
  %1012 = vmatprep.subr.mxu0 0.0
  %1013 = vmatpush1.msra.mxu0 0.0
  %1014 = vmatprep.subr.mxu0 0.0
  %1015 = vmatpush1.msra.mxu0 0.0
  %1016 = vmatprep.subr.mxu0 0.0
  %1017 = vmatpush1.msra.mxu0 0.0
  %1018 = vmatprep.subr.mxu0 0.0
  %1019 = vmatpush1.msra.mxu0 0.0
  %1020 = vmatprep.subr.mxu0 0.0
  %1021 = vmatpush1.msra.mxu0 0.0
  %1022 = vmatprep.subr.mxu0 0.0
  %1023 = vmatpush1.msra.mxu0 0.0
  %1024 = vmatprep.subr.mxu0 0.0
  %1025 = vmatpush1.msra.mxu0 0.0
  %1026 = vmatprep.subr.mxu0 0.0
  %1027 = vmatpush1.msra.mxu0 %v980
  %1028 = vmatprep.subr.mxu0 0.0
  %1029 = vmatpush1.msra.mxu0 %v979
  %1030 = vmatprep.subr.mxu0 0.0
  %1031 = vmatpush2.msra.mxu0 0.0
  %1032 = vmatprep.subr.mxu0 0.0
  %1033 = vmatpush2.msra.mxu0 0.0
  %1034 = vmatprep.subr.mxu0 0.0
  %1035 = vmatpush2.msra.mxu0 0.0
  %1036 = vmatprep.subr.mxu0 0.0
  %1037 = vmatpush2.msra.mxu0 0.0
  %1038 = vmatprep.subr.mxu0 0.0
  %1039 = vmatpush2.msra.mxu0 0.0
  %1040 = vmatprep.subr.mxu0 0.0
  %1041 = vmatpush2.msra.mxu0 0.0
  %1042 = vmatprep.subr.mxu0 0.0
  %1043 = vmatpush2.msra.mxu0 0.0
  %1044 = vmatprep.subr.mxu0 0.0
  %1045 = vmatpush2.msra.mxu0 0.0
  %1046 = vmatprep.subr.mxu0 0.0
  %1047 = vmatpush2.msra.mxu0 0.0
  %1048 = vmatprep.subr.mxu0 0.0
  %1049 = vmatpush2.msra.mxu0 0.0
  %1050 = vmatprep.subr.mxu0 0.0
  %1051 = vmatpush2.msra.mxu0 0.0
  %1052 = vmatprep.subr.mxu0 0.0
  %1053 = vmatpush2.msra.mxu0 0.0
  %1054 = vmatprep.subr.mxu0 0.0
  %1055 = vmatpush2.msra.mxu0 0.0
  %1056 = vmatprep.subr.mxu0 0.0
  %1057 = vmatpush2.msra.mxu0 0.0
  %1058 = vmatprep.subr.mxu0 0.0
  %1059 = vmatpush2.msra.mxu0 0.0
  %1060 = vmatprep.subr.mxu0 0.0
  %1061 = vmatpush2.msra.mxu0 0.0
  %1062 = vmatprep.mubr.f32.mxu0 0.0
  %1063 = vmatmul.mubr.f32.gmra.mxu0 %v987
  %v1064 = vpop.f32.mrf.mxu0
  %v1065 = vadd.f32 %v985, %v1064
  %v1066 = vpop.f32.mrf.mxu0
  %1067 = vmatprep.mubr.f32.mxu0 0.0
  %1068 = vmatmul.mubr.f32.gmra.mxu0 %v990
  %v1069 = vpop.f32.mrf.mxu0
  %v1070 = vadd.f32 %v985, %v1069
  %v1071 = vpop.f32.mrf.mxu0
  %1072 = vmatprep.mubr.f32.mxu0 0.0
  %1073 = vmatmul.mubr.f32.gmra.mxu0 %v993
  %v1074 = vpop.f32.mrf.mxu0
  %v1075 = vadd.f32 %v985, %v1074
  %v1076 = vpop.f32.mrf.mxu0
  %1077 = vmatprep.mubr.f32.mxu0 0.0
  %1078 = vmatmul.mubr.f32.gmra.mxu0 %v996
  %v1079 = vpop.f32.mrf.mxu0
  %v1080 = vadd.f32 %v985, %v1079
  %v1081 = vpop.f32.mrf.mxu0
  %1082 = vdwg.mxu0
  %vm1083 = vcmp.ge.f32.partialorder %v1065, 0.0
  %vm1084 = vcmp.ge.f32.partialorder %v1070, 0.0
  %vm1085 = vcmp.ge.f32.partialorder %v1075, 0.0
  %vm1086 = vcmp.ge.f32.partialorder %v1080, 0.0
  %v1087 = vmul.f32 %v1065, 0.01
  %v1088 = vmul.f32 %v1070, 0.01
  %v1089 = vmul.f32 %v1075, 0.01
  %v1090 = vmul.f32 %v1080, 0.01
  %v1091 = vsel %vm1083, %v1065, %v1087
  %v1092 = vsel %vm1084, %v1070, %v1088
  %v1093 = vsel %vm1085, %v1075, %v1089
  %v1094 = vsel %vm1086, %v1080, %v1090
  %v1095 = vld [vmem:[%s2] sm:$0x1]
  %v1096 = vld [vmem:[%s2 + $0x1] sm:$0x1]
  %v1097 = vld [vmem:[%s3] sm:$0xff]
  %v1098 = vld [vmem:[%s3 + $0x8] sm:$0xff]
  %v1099 = vld [vmem:[%s3 + $0x10] sm:$0xff]
  %v1100 = vld [vmem:[%s3 + $0x18] sm:$0xff]
  %v1101 = vld [vmem:[%s3 + $0x20] sm:$0xff]
  %v1102 = vld [vmem:[%s3 + $0x28] sm:$0xff]
  %v1103 = vld [vmem:[%s3 + $0x30] sm:$0xff]
  %v1104 = vld [vmem:[%s3 + $0x38] sm:$0xff]
  %v1105 = vlaneseq
  %v1106 = vand.u32 %v1105, 127
  %v1107 = vlaneseq
  %v1108 = vshrl.u32 %v1107, 7
  %v1109 = vadd.s32 %v1108, 8
  %v1110 = vadd.s32 %v1108, 16
  %v1111 = vadd.s32 %v1108, 24
  %1112 = vset.pattern.permute.xlu0 0
  %1113 = vperm.xlu0 %1112, %v1097
  %v1114 = vpop.permute.xlu0 %1113
  %1115 = vset.pattern.permute.xlu0 0
  %1116 = vperm.xlu0 %1115, %v1098
  %v1117 = vpop.permute.xlu0 %1116
  %1118 = vset.pattern.permute.xlu0 0
  %1119 = vperm.xlu0 %1118, %v1099
  %v1120 = vpop.permute.xlu0 %1119
  %1121 = vset.pattern.permute.xlu0 0
  %1122 = vperm.xlu0 %1121, %v1100
  %v1123 = vpop.permute.xlu0 %1122
  %1124 = vset.pattern.permute.xlu0 0
  %1125 = vperm.xlu0 %1124, %v1101
  %v1126 = vpop.permute.xlu0 %1125
  %1127 = vset.pattern.permute.xlu0 0
  %1128 = vperm.xlu0 %1127, %v1102
  %v1129 = vpop.permute.xlu0 %1128
  %1130 = vset.pattern.permute.xlu0 0
  %1131 = vperm.xlu0 %1130, %v1103
  %v1132 = vpop.permute.xlu0 %1131
  %1133 = vset.pattern.permute.xlu0 0
  %1134 = vperm.xlu0 %1133, %v1104
  %v1135 = vpop.permute.xlu0 %1134
  %vm1136 = vcmp.eq.s32.totalorder %v1106, %v1114
  %vm1137 = vcmp.eq.s32.totalorder %v1106, %v1117
  %vm1138 = vcmp.eq.s32.totalorder %v1106, %v1120
  %vm1139 = vcmp.eq.s32.totalorder %v1106, %v1123
  %vm1140 = vcmp.eq.s32.totalorder %v1106, %v1126
  %vm1141 = vcmp.eq.s32.totalorder %v1106, %v1129
  %vm1142 = vcmp.eq.s32.totalorder %v1106, %v1132
  %vm1143 = vcmp.eq.s32.totalorder %v1106, %v1135
  %v1144 = vsel %vm1136, 1, 0
  %v1145 = vsel %vm1137, 1, 0
  %v1146 = vsel %vm1138, 1, 0
  %v1147 = vsel %vm1139, 1, 0
  %v1148 = vsel %vm1140, 1, 0
  %v1149 = vsel %vm1141, 1, 0
  %v1150 = vsel %vm1142, 1, 0
  %v1151 = vsel %vm1143, 1, 0
  %v1152 = vcvt.s32.f32 %v1144
  %v1153 = vcvt.s32.f32 %v1145
  %v1154 = vcvt.s32.f32 %v1146
  %v1155 = vcvt.s32.f32 %v1147
  %v1156 = vcvt.s32.f32 %v1148
  %v1157 = vcvt.s32.f32 %v1149
  %v1158 = vcvt.s32.f32 %v1150
  %v1159 = vcvt.s32.f32 %v1151
  %1160 = vset.pattern.permute.xlu0 1
  %1161 = vperm.xlu0 %1160, %v1097
  %v1162 = vpop.permute.xlu0 %1161
  %1163 = vset.pattern.permute.xlu0 1
  %1164 = vperm.xlu0 %1163, %v1098
  %v1165 = vpop.permute.xlu0 %1164
  %1166 = vset.pattern.permute.xlu0 1
  %1167 = vperm.xlu0 %1166, %v1099
  %v1168 = vpop.permute.xlu0 %1167
  %1169 = vset.pattern.permute.xlu0 1
  %1170 = vperm.xlu0 %1169, %v1100
  %v1171 = vpop.permute.xlu0 %1170
  %1172 = vset.pattern.permute.xlu0 1
  %1173 = vperm.xlu0 %1172, %v1101
  %v1174 = vpop.permute.xlu0 %1173
  %1175 = vset.pattern.permute.xlu0 1
  %1176 = vperm.xlu0 %1175, %v1102
  %v1177 = vpop.permute.xlu0 %1176
  %1178 = vset.pattern.permute.xlu0 1
  %1179 = vperm.xlu0 %1178, %v1103
  %v1180 = vpop.permute.xlu0 %1179
  %1181 = vset.pattern.permute.xlu0 1
  %1182 = vperm.xlu0 %1181, %v1104
  %v1183 = vpop.permute.xlu0 %1182
  %vm1184 = vcmp.eq.s32.totalorder %v1106, %v1162
  %vm1185 = vcmp.eq.s32.totalorder %v1106, %v1165
  %vm1186 = vcmp.eq.s32.totalorder %v1106, %v1168
  %vm1187 = vcmp.eq.s32.totalorder %v1106, %v1171
  %vm1188 = vcmp.eq.s32.totalorder %v1106, %v1174
  %vm1189 = vcmp.eq.s32.totalorder %v1106, %v1177
  %vm1190 = vcmp.eq.s32.totalorder %v1106, %v1180
  %vm1191 = vcmp.eq.s32.totalorder %v1106, %v1183
  %v1192 = vsel %vm1184, 1, 0
  %v1193 = vsel %vm1185, 1, 0
  %v1194 = vsel %vm1186, 1, 0
  %v1195 = vsel %vm1187, 1, 0
  %v1196 = vsel %vm1188, 1, 0
  %v1197 = vsel %vm1189, 1, 0
  %v1198 = vsel %vm1190, 1, 0
  %v1199 = vsel %vm1191, 1, 0
  %v1200 = vcvt.s32.f32 %v1192
  %v1201 = vcvt.s32.f32 %v1193
  %v1202 = vcvt.s32.f32 %v1194
  %v1203 = vcvt.s32.f32 %v1195
  %v1204 = vcvt.s32.f32 %v1196
  %v1205 = vcvt.s32.f32 %v1197
  %v1206 = vcvt.s32.f32 %v1198
  %v1207 = vcvt.s32.f32 %v1199
  %v1208 = vlaneseq
  %v1209 = vshrl.u32 %v1208, 7
  %v1210 = vsub.s32 0, %v1209
  %v1211 = vrot.slane %v1095, %v1210
  %vm1212 = vcmp.eq.s32.totalorder %v1108, %v1211
  %vm1213 = vcmp.eq.s32.totalorder %v1109, %v1211
  %vm1214 = vcmp.eq.s32.totalorder %v1110, %v1211
  %vm1215 = vcmp.eq.s32.totalorder %v1111, %v1211
  %v1216 = vsel %vm1212, 1, 0
  %v1217 = vsel %vm1213, 1, 0
  %v1218 = vsel %vm1214, 1, 0
  %v1219 = vsel %vm1215, 1, 0
  %v1220 = vcvt.s32.f32 %v1216
  %v1221 = vcvt.s32.f32 %v1217
  %v1222 = vcvt.s32.f32 %v1218
  %v1223 = vcvt.s32.f32 %v1219
  %v1224 = vlaneseq
  %v1225 = vshrl.u32 %v1224, 7
  %v1226 = vsub.s32 0, %v1225
  %v1227 = vrot.slane %v1096, %v1226
  %vm1228 = vcmp.eq.s32.totalorder %v1108, %v1227
  %vm1229 = vcmp.eq.s32.totalorder %v1109, %v1227
  %vm1230 = vcmp.eq.s32.totalorder %v1110, %v1227
  %vm1231 = vcmp.eq.s32.totalorder %v1111, %v1227
  %v1232 = vsel %vm1228, 1, 0
  %v1233 = vsel %vm1229, 1, 0
  %v1234 = vsel %vm1230, 1, 0
  %v1235 = vsel %vm1231, 1, 0
  %v1236 = vcvt.s32.f32 %v1232
  %v1237 = vcvt.s32.f32 %v1233
  %v1238 = vcvt.s32.f32 %v1234
  %v1239 = vcvt.s32.f32 %v1235
  %v1240 = vld [vmem:[%s4 + $0xa8] sm:$0xff]
  %v1241 = vld [vmem:[%s4 + $0xb0] sm:$0xff]
  %v1242 = vld [vmem:[%s4 + $0xb8] sm:$0xff]
  %v1243 = vld [vmem:[%s4 + $0xc0] sm:$0xff]
  %v1244 = vld [vmem:[%s4 + $0xc8] sm:$0x1]
  %v1245 = vld [vmem:[%s4 + $0xd0] sm:$0xff]
  %v1246 = vld [vmem:[%s4 + $0xd8] sm:$0xff]
  %v1247 = vld [vmem:[%s4 + $0xe0] sm:$0xff]
  %v1248 = vld [vmem:[%s4 + $0xe8] sm:$0xff]
  %v1249 = vld [vmem:[%s4 + $0xf0] sm:$0x1]
  %v1251 = vsel %vm656, %v1152, 0
  %v1254 = vsel %vm656, %v1153, 0
  %v1257 = vsel %vm656, %v1154, 0
  %v1260 = vsel %vm656, %v1155, 0
  %v1263 = vsel %vm656, %v1156, 0
  %v1266 = vsel %vm656, %v1157, 0
  %v1269 = vsel %vm656, %v1158, 0
  %v1272 = vsel %vm656, %v1159, 0
  %1274 = vmatprep.subr.mxu0 0.0
  %1275 = vmatpush1.msra.mxu0 0.0
  %1276 = vmatprep.subr.mxu0 0.0
  %1277 = vmatpush1.msra.mxu0 0.0
  %1278 = vmatprep.subr.mxu0 0.0
  %1279 = vmatpush1.msra.mxu0 0.0
  %1280 = vmatprep.subr.mxu0 0.0
  %1281 = vmatpush1.msra.mxu0 0.0
  %1282 = vmatprep.subr.mxu0 0.0
  %1283 = vmatpush1.msra.mxu0 0.0
  %1284 = vmatprep.subr.mxu0 0.0
  %1285 = vmatpush1.msra.mxu0 0.0
  %1286 = vmatprep.subr.mxu0 0.0
  %1287 = vmatpush1.msra.mxu0 0.0
  %1288 = vmatprep.subr.mxu0 0.0
  %1289 = vmatpush1.msra.mxu0 0.0
  %1290 = vmatprep.subr.mxu0 0.0
  %1291 = vmatpush1.msra.mxu0 0.0
  %1292 = vmatprep.subr.mxu0 0.0
  %1293 = vmatpush1.msra.mxu0 0.0
  %1294 = vmatprep.subr.mxu0 0.0
  %1295 = vmatpush1.msra.mxu0 0.0
  %1296 = vmatprep.subr.mxu0 0.0
  %1297 = vmatpush1.msra.mxu0 0.0
  %1298 = vmatprep.subr.mxu0 0.0
  %1299 = vmatpush1.msra.mxu0 %v1094
  %1300 = vmatprep.subr.mxu0 0.0
  %1301 = vmatpush1.msra.mxu0 %v1093
  %1302 = vmatprep.subr.mxu0 0.0
  %1303 = vmatpush1.msra.mxu0 %v1092
  %1304 = vmatprep.subr.mxu0 0.0
  %1305 = vmatpush1.msra.mxu0 %v1091
  %1306 = vmatprep.subr.mxu0 0.0
  %1307 = vmatpush2.msra.mxu0 0.0
  %1308 = vmatprep.subr.mxu0 0.0
  %1309 = vmatpush2.msra.mxu0 0.0
  %1310 = vmatprep.subr.mxu0 0.0
  %1311 = vmatpush2.msra.mxu0 0.0
  %1312 = vmatprep.subr.mxu0 0.0
  %1313 = vmatpush2.msra.mxu0 0.0
  %1314 = vmatprep.subr.mxu0 0.0
  %1315 = vmatpush2.msra.mxu0 0.0
  %1316 = vmatprep.subr.mxu0 0.0
  %1317 = vmatpush2.msra.mxu0 0.0
  %1318 = vmatprep.subr.mxu0 0.0
  %1319 = vmatpush2.msra.mxu0 0.0
  %1320 = vmatprep.subr.mxu0 0.0
  %1321 = vmatpush2.msra.mxu0 0.0
  %1322 = vmatprep.subr.mxu0 0.0
  %1323 = vmatpush2.msra.mxu0 0.0
  %1324 = vmatprep.subr.mxu0 0.0
  %1325 = vmatpush2.msra.mxu0 0.0
  %1326 = vmatprep.subr.mxu0 0.0
  %1327 = vmatpush2.msra.mxu0 0.0
  %1328 = vmatprep.subr.mxu0 0.0
  %1329 = vmatpush2.msra.mxu0 0.0
  %1330 = vmatprep.subr.mxu0 0.0
  %1331 = vmatpush2.msra.mxu0 0.0
  %1332 = vmatprep.subr.mxu0 0.0
  %1333 = vmatpush2.msra.mxu0 0.0
  %1334 = vmatprep.subr.mxu0 0.0
  %1335 = vmatpush2.msra.mxu0 0.0
  %1336 = vmatprep.subr.mxu0 0.0
  %1337 = vmatpush2.msra.mxu0 0.0
  %1338 = vmatprep.mubr.f32.mxu0 0.0
  %1339 = vmatmul.mubr.f32.gmra.mxu0 %v1251
  %v1340 = vpop.f32.mrf.mxu0
  %v1341 = vadd.f32 0.0, %v1340
  %v1342 = vpop.f32.mrf.mxu0
  %1343 = vmatprep.mubr.f32.mxu0 0.0
  %1344 = vmatmul.mubr.f32.gmra.mxu0 %v1254
  %v1345 = vpop.f32.mrf.mxu0
  %v1346 = vadd.f32 0.0, %v1345
  %v1347 = vpop.f32.mrf.mxu0
  %1348 = vmatprep.mubr.f32.mxu0 0.0
  %1349 = vmatmul.mubr.f32.gmra.mxu0 %v1257
  %v1350 = vpop.f32.mrf.mxu0
  %v1351 = vadd.f32 0.0, %v1350
  %v1352 = vpop.f32.mrf.mxu0
  %1353 = vmatprep.mubr.f32.mxu0 0.0
  %1354 = vmatmul.mubr.f32.gmra.mxu0 %v1260
  %v1355 = vpop.f32.mrf.mxu0
  %v1356 = vadd.f32 0.0, %v1355
  %v1357 = vpop.f32.mrf.mxu0
  %1358 = vmatprep.mubr.f32.mxu0 0.0
  %1359 = vmatmul.mubr.f32.gmra.mxu0 %v1263
  %v1360 = vpop.f32.mrf.mxu0
  %v1361 = vadd.f32 0.0, %v1360
  %v1362 = vpop.f32.mrf.mxu0
  %1363 = vmatprep.mubr.f32.mxu0 0.0
  %1364 = vmatmul.mubr.f32.gmra.mxu0 %v1266
  %v1365 = vpop.f32.mrf.mxu0
  %v1366 = vadd.f32 0.0, %v1365
  %v1367 = vpop.f32.mrf.mxu0
  %1368 = vmatprep.mubr.f32.mxu0 0.0
  %1369 = vmatmul.mubr.f32.gmra.mxu0 %v1269
  %v1370 = vpop.f32.mrf.mxu0
  %v1371 = vadd.f32 0.0, %v1370
  %v1372 = vpop.f32.mrf.mxu0
  %1373 = vmatprep.mubr.f32.mxu0 0.0
  %1374 = vmatmul.mubr.f32.gmra.mxu0 %v1272
  %v1375 = vpop.f32.mrf.mxu0
  %v1376 = vadd.f32 0.0, %v1375
  %v1377 = vpop.f32.mrf.mxu0
  %1378 = vdwg.mxu0
  %v1380 = vsel %vm656, %v1200, 0
  %v1383 = vsel %vm656, %v1201, 0
  %v1386 = vsel %vm656, %v1202, 0
  %v1389 = vsel %vm656, %v1203, 0
  %v1392 = vsel %vm656, %v1204, 0
  %v1395 = vsel %vm656, %v1205, 0
  %v1398 = vsel %vm656, %v1206, 0
  %v1401 = vsel %vm656, %v1207, 0
  %1403 = vmatprep.subr.mxu0 0.0
  %1404 = vmatpush1.msra.mxu0 0.0
  %1405 = vmatprep.subr.mxu0 0.0
  %1406 = vmatpush1.msra.mxu0 0.0
  %1407 = vmatprep.subr.mxu0 0.0
  %1408 = vmatpush1.msra.mxu0 0.0
  %1409 = vmatprep.subr.mxu0 0.0
  %1410 = vmatpush1.msra.mxu0 0.0
  %1411 = vmatprep.subr.mxu0 0.0
  %1412 = vmatpush1.msra.mxu0 0.0
  %1413 = vmatprep.subr.mxu0 0.0
  %1414 = vmatpush1.msra.mxu0 0.0
  %1415 = vmatprep.subr.mxu0 0.0
  %1416 = vmatpush1.msra.mxu0 0.0
  %1417 = vmatprep.subr.mxu0 0.0
  %1418 = vmatpush1.msra.mxu0 0.0
  %1419 = vmatprep.subr.mxu0 0.0
  %1420 = vmatpush1.msra.mxu0 0.0
  %1421 = vmatprep.subr.mxu0 0.0
  %1422 = vmatpush1.msra.mxu0 0.0
  %1423 = vmatprep.subr.mxu0 0.0
  %1424 = vmatpush1.msra.mxu0 0.0
  %1425 = vmatprep.subr.mxu0 0.0
  %1426 = vmatpush1.msra.mxu0 0.0
  %1427 = vmatprep.subr.mxu0 0.0
  %1428 = vmatpush1.msra.mxu0 %v1094
  %1429 = vmatprep.subr.mxu0 0.0
  %1430 = vmatpush1.msra.mxu0 %v1093
  %1431 = vmatprep.subr.mxu0 0.0
  %1432 = vmatpush1.msra.mxu0 %v1092
  %1433 = vmatprep.subr.mxu0 0.0
  %1434 = vmatpush1.msra.mxu0 %v1091
  %1435 = vmatprep.subr.mxu0 0.0
  %1436 = vmatpush2.msra.mxu0 0.0
  %1437 = vmatprep.subr.mxu0 0.0
  %1438 = vmatpush2.msra.mxu0 0.0
  %1439 = vmatprep.subr.mxu0 0.0
  %1440 = vmatpush2.msra.mxu0 0.0
  %1441 = vmatprep.subr.mxu0 0.0
  %1442 = vmatpush2.msra.mxu0 0.0
  %1443 = vmatprep.subr.mxu0 0.0
  %1444 = vmatpush2.msra.mxu0 0.0
  %1445 = vmatprep.subr.mxu0 0.0
  %1446 = vmatpush2.msra.mxu0 0.0
  %1447 = vmatprep.subr.mxu0 0.0
  %1448 = vmatpush2.msra.mxu0 0.0
  %1449 = vmatprep.subr.mxu0 0.0
  %1450 = vmatpush2.msra.mxu0 0.0
  %1451 = vmatprep.subr.mxu0 0.0
  %1452 = vmatpush2.msra.mxu0 0.0
  %1453 = vmatprep.subr.mxu0 0.0
  %1454 = vmatpush2.msra.mxu0 0.0
  %1455 = vmatprep.subr.mxu0 0.0
  %1456 = vmatpush2.msra.mxu0 0.0
  %1457 = vmatprep.subr.mxu0 0.0
  %1458 = vmatpush2.msra.mxu0 0.0
  %1459 = vmatprep.subr.mxu0 0.0
  %1460 = vmatpush2.msra.mxu0 0.0
  %1461 = vmatprep.subr.mxu0 0.0
  %1462 = vmatpush2.msra.mxu0 0.0
  %1463 = vmatprep.subr.mxu0 0.0
  %1464 = vmatpush2.msra.mxu0 0.0
  %1465 = vmatprep.subr.mxu0 0.0
  %1466 = vmatpush2.msra.mxu0 0.0
  %1467 = vmatprep.mubr.f32.mxu0 0.0
  %1468 = vmatmul.mubr.f32.gmra.mxu0 %v1380
  %v1469 = vpop.f32.mrf.mxu0
  %v1470 = vadd.f32 0.0, %v1469
  %v1471 = vpop.f32.mrf.mxu0
  %1472 = vmatprep.mubr.f32.mxu0 0.0
  %1473 = vmatmul.mubr.f32.gmra.mxu0 %v1383
  %v1474 = vpop.f32.mrf.mxu0
  %v1475 = vadd.f32 0.0, %v1474
  %v1476 = vpop.f32.mrf.mxu0
  %1477 = vmatprep.mubr.f32.mxu0 0.0
  %1478 = vmatmul.mubr.f32.gmra.mxu0 %v1386
  %v1479 = vpop.f32.mrf.mxu0
  %v1480 = vadd.f32 0.0, %v1479
  %v1481 = vpop.f32.mrf.mxu0
  %1482 = vmatprep.mubr.f32.mxu0 0.0
  %1483 = vmatmul.mubr.f32.gmra.mxu0 %v1389
  %v1484 = vpop.f32.mrf.mxu0
  %v1485 = vadd.f32 0.0, %v1484
  %v1486 = vpop.f32.mrf.mxu0
  %1487 = vmatprep.mubr.f32.mxu0 0.0
  %1488 = vmatmul.mubr.f32.gmra.mxu0 %v1392
  %v1489 = vpop.f32.mrf.mxu0
  %v1490 = vadd.f32 0.0, %v1489
  %v1491 = vpop.f32.mrf.mxu0
  %1492 = vmatprep.mubr.f32.mxu0 0.0
  %1493 = vmatmul.mubr.f32.gmra.mxu0 %v1395
  %v1494 = vpop.f32.mrf.mxu0
  %v1495 = vadd.f32 0.0, %v1494
  %v1496 = vpop.f32.mrf.mxu0
  %1497 = vmatprep.mubr.f32.mxu0 0.0
  %1498 = vmatmul.mubr.f32.gmra.mxu0 %v1398
  %v1499 = vpop.f32.mrf.mxu0
  %v1500 = vadd.f32 0.0, %v1499
  %v1501 = vpop.f32.mrf.mxu0
  %1502 = vmatprep.mubr.f32.mxu0 0.0
  %1503 = vmatmul.mubr.f32.gmra.mxu0 %v1401
  %v1504 = vpop.f32.mrf.mxu0
  %v1505 = vadd.f32 0.0, %v1504
  %v1506 = vpop.f32.mrf.mxu0
  %1507 = vdwg.mxu0
  %v1508 = vsub.f32 %v1470, %v1341
  %v1509 = vsub.f32 %v1475, %v1346
  %v1510 = vsub.f32 %v1480, %v1351
  %v1511 = vsub.f32 %v1485, %v1356
  %v1512 = vsub.f32 %v1490, %v1361
  %v1513 = vsub.f32 %v1495, %v1366
  %v1514 = vsub.f32 %v1500, %v1371
  %v1515 = vsub.f32 %v1505, %v1376
  %v1516 = vsub.f32 %v1341, %v1470
  %v1517 = vsub.f32 %v1346, %v1475
  %v1518 = vsub.f32 %v1351, %v1480
  %v1519 = vsub.f32 %v1356, %v1485
  %v1520 = vsub.f32 %v1361, %v1490
  %v1521 = vsub.f32 %v1366, %v1495
  %v1522 = vsub.f32 %v1371, %v1500
  %v1523 = vsub.f32 %v1376, %v1505
  %1541 = vrot.lane.b32.xlu0 0.0, 16
  %v1542 = vpop.permute.xlu0 %1541
  %1543 = vrot.lane.b32.xlu0 %v1508, 16
  %v1544 = vpop.permute.xlu0 %1543
  %1545 = vrot.lane.b32.xlu0 %v1509, 16
  %v1546 = vpop.permute.xlu0 %1545
  %1547 = vrot.lane.b32.xlu0 %v1510, 16
  %v1548 = vpop.permute.xlu0 %1547
  %1549 = vrot.lane.b32.xlu0 %v1511, 16
  %v1550 = vpop.permute.xlu0 %1549
  %1551 = vrot.lane.b32.xlu0 %v1512, 16
  %v1552 = vpop.permute.xlu0 %1551
  %1553 = vrot.lane.b32.xlu0 %v1513, 16
  %v1554 = vpop.permute.xlu0 %1553
  %1555 = vrot.lane.b32.xlu0 %v1514, 16
  %v1556 = vpop.permute.xlu0 %1555
  %1557 = vrot.lane.b32.xlu0 %v1515, 16
  %v1558 = vpop.permute.xlu0 %1557
  %1559 = vrot.lane.b32.xlu0 %v1516, 16
  %v1560 = vpop.permute.xlu0 %1559
  %1561 = vrot.lane.b32.xlu0 %v1517, 16
  %v1562 = vpop.permute.xlu0 %1561
  %1563 = vrot.lane.b32.xlu0 %v1518, 16
  %v1564 = vpop.permute.xlu0 %1563
  %1565 = vrot.lane.b32.xlu0 %v1519, 16
  %v1566 = vpop.permute.xlu0 %1565
  %1567 = vrot.lane.b32.xlu0 %v1520, 16
  %v1568 = vpop.permute.xlu0 %1567
  %1569 = vrot.lane.b32.xlu0 %v1521, 16
  %v1570 = vpop.permute.xlu0 %1569
  %1571 = vrot.lane.b32.xlu0 %v1522, 16
  %v1572 = vpop.permute.xlu0 %1571
  %1573 = vrot.lane.b32.xlu0 %v1523, 16
  %v1574 = vpop.permute.xlu0 %1573
  %v1592 = vsel %vm333, %v1091, %v1542
  %v1593 = vsel %vm333, %v1092, %v1542
  %v1594 = vsel %vm333, %v1093, %v1542
  %v1595 = vsel %vm333, %v1094, %v1542
  %v1596 = vsel %vm333, %v1341, %v1544
  %v1597 = vsel %vm333, %v1346, %v1546
  %v1598 = vsel %vm333, %v1351, %v1548
  %v1599 = vsel %vm333, %v1356, %v1550
  %v1600 = vsel %vm333, %v1361, %v1552
  %v1601 = vsel %vm333, %v1366, %v1554
  %v1602 = vsel %vm333, %v1371, %v1556
  %v1603 = vsel %vm333, %v1376, %v1558
  %v1604 = vsel %vm333, %v1470, %v1560
  %v1605 = vsel %vm333, %v1475, %v1562
  %v1606 = vsel %vm333, %v1480, %v1564
  %v1607 = vsel %vm333, %v1485, %v1566
  %v1608 = vsel %vm333, %v1490, %v1568
  %v1609 = vsel %vm333, %v1495, %v1570
  %v1610 = vsel %vm333, %v1500, %v1572
  %v1611 = vsel %vm333, %v1505, %v1574
  %v1612 = vlaneseq
  %v1613 = vshrl.u32 %v1612, 7
  %v1614 = vsub.s32 0, %v1613
  %v1615 = vrot.slane %v1244, %v1614
  %v1617 = vsel %vm656, %v1592, 0
  %v1620 = vsel %vm656, %v1593, 0
  %v1623 = vsel %vm656, %v1594, 0
  %v1626 = vsel %vm656, %v1595, 0
  %v1629 = vsel %vm656, %v1596, 0
  %v1632 = vsel %vm656, %v1597, 0
  %v1635 = vsel %vm656, %v1598, 0
  %v1638 = vsel %vm656, %v1599, 0
  %v1641 = vsel %vm656, %v1600, 0
  %v1644 = vsel %vm656, %v1601, 0
  %v1647 = vsel %vm656, %v1602, 0
  %v1650 = vsel %vm656, %v1603, 0
  %v1653 = vsel %vm656, %v1604, 0
  %v1656 = vsel %vm656, %v1605, 0
  %v1659 = vsel %vm656, %v1606, 0
  %v1662 = vsel %vm656, %v1607, 0
  %v1665 = vsel %vm656, %v1608, 0
  %v1668 = vsel %vm656, %v1609, 0
  %v1671 = vsel %vm656, %v1610, 0
  %v1674 = vsel %vm656, %v1611, 0
  %1676 = vmatprep.subr.mxu0 0.0
  %1677 = vmatpush1.msra.mxu0 0.0
  %1678 = vmatprep.subr.mxu0 0.0
  %1679 = vmatpush1.msra.mxu0 0.0
  %1680 = vmatprep.subr.mxu0 0.0
  %1681 = vmatpush1.msra.mxu0 0.0
  %1682 = vmatprep.subr.mxu0 0.0
  %1683 = vmatpush1.msra.mxu0 0.0
  %1684 = vmatprep.subr.mxu0 0.0
  %1685 = vmatpush1.msra.mxu0 0.0
  %1686 = vmatprep.subr.mxu0 0.0
  %1687 = vmatpush1.msra.mxu0 0.0
  %1688 = vmatprep.subr.mxu0 0.0
  %1689 = vmatpush1.msra.mxu0 0.0
  %1690 = vmatprep.subr.mxu0 0.0
  %1691 = vmatpush1.msra.mxu0 0.0
  %1692 = vmatprep.subr.mxu0 0.0
  %1693 = vmatpush1.msra.mxu0 0.0
  %1694 = vmatprep.subr.mxu0 0.0
  %1695 = vmatpush1.msra.mxu0 0.0
  %1696 = vmatprep.subr.mxu0 0.0
  %1697 = vmatpush1.msra.mxu0 0.0
  %1698 = vmatprep.subr.mxu0 0.0
  %1699 = vmatpush1.msra.mxu0 0.0
  %1700 = vmatprep.subr.mxu0 0.0
  %1701 = vmatpush1.msra.mxu0 %v1243
  %1702 = vmatprep.subr.mxu0 0.0
  %1703 = vmatpush1.msra.mxu0 %v1242
  %1704 = vmatprep.subr.mxu0 0.0
  %1705 = vmatpush1.msra.mxu0 %v1241
  %1706 = vmatprep.subr.mxu0 0.0
  %1707 = vmatpush1.msra.mxu0 %v1240
  %1708 = vmatprep.subr.mxu0 0.0
  %1709 = vmatpush2.msra.mxu0 0.0
  %1710 = vmatprep.subr.mxu0 0.0
  %1711 = vmatpush2.msra.mxu0 0.0
  %1712 = vmatprep.subr.mxu0 0.0
  %1713 = vmatpush2.msra.mxu0 0.0
  %1714 = vmatprep.subr.mxu0 0.0
  %1715 = vmatpush2.msra.mxu0 0.0
  %1716 = vmatprep.subr.mxu0 0.0
  %1717 = vmatpush2.msra.mxu0 0.0
  %1718 = vmatprep.subr.mxu0 0.0
  %1719 = vmatpush2.msra.mxu0 0.0
  %1720 = vmatprep.subr.mxu0 0.0
  %1721 = vmatpush2.msra.mxu0 0.0
  %1722 = vmatprep.subr.mxu0 0.0
  %1723 = vmatpush2.msra.mxu0 0.0
  %1724 = vmatprep.subr.mxu0 0.0
  %1725 = vmatpush2.msra.mxu0 0.0
  %1726 = vmatprep.subr.mxu0 0.0
  %1727 = vmatpush2.msra.mxu0 0.0
  %1728 = vmatprep.subr.mxu0 0.0
  %1729 = vmatpush2.msra.mxu0 0.0
  %1730 = vmatprep.subr.mxu0 0.0
  %1731 = vmatpush2.msra.mxu0 0.0
  %1732 = vmatprep.subr.mxu0 0.0
  %1733 = vmatpush2.msra.mxu0 0.0
  %1734 = vmatprep.subr.mxu0 0.0
  %1735 = vmatpush2.msra.mxu0 0.0
  %1736 = vmatprep.subr.mxu0 0.0
  %1737 = vmatpush2.msra.mxu0 0.0
  %1738 = vmatprep.subr.mxu0 0.0
  %1739 = vmatpush2.msra.mxu0 0.0
  %1740 = vmatprep.mubr.f32.mxu0 0.0
  %1741 = vmatmul.mubr.f32.gmra.mxu0 %v1617
  %v1742 = vpop.f32.mrf.mxu0
  %v1743 = vadd.f32 %v1615, %v1742
  %v1744 = vpop.f32.mrf.mxu0
  %1745 = vmatprep.mubr.f32.mxu0 0.0
  %1746 = vmatmul.mubr.f32.gmra.mxu0 %v1620
  %v1747 = vpop.f32.mrf.mxu0
  %v1748 = vadd.f32 %v1615, %v1747
  %v1749 = vpop.f32.mrf.mxu0
  %1750 = vmatprep.mubr.f32.mxu0 0.0
  %1751 = vmatmul.mubr.f32.gmra.mxu0 %v1623
  %v1752 = vpop.f32.mrf.mxu0
  %v1753 = vadd.f32 %v1615, %v1752
  %v1754 = vpop.f32.mrf.mxu0
  %1755 = vmatprep.mubr.f32.mxu0 0.0
  %1756 = vmatmul.mubr.f32.gmra.mxu0 %v1626
  %v1757 = vpop.f32.mrf.mxu0
  %v1758 = vadd.f32 %v1615, %v1757
  %v1759 = vpop.f32.mrf.mxu0
  %1760 = vmatprep.mubr.f32.mxu0 0.0
  %1761 = vmatmul.mubr.f32.gmra.mxu0 %v1629
  %v1762 = vpop.f32.mrf.mxu0
  %v1763 = vadd.f32 %v1615, %v1762
  %v1764 = vpop.f32.mrf.mxu0
  %1765 = vmatprep.mubr.f32.mxu0 0.0
  %1766 = vmatmul.mubr.f32.gmra.mxu0 %v1632
  %v1767 = vpop.f32.mrf.mxu0
  %v1768 = vadd.f32 %v1615, %v1767
  %v1769 = vpop.f32.mrf.mxu0
  %1770 = vmatprep.mubr.f32.mxu0 0.0
  %1771 = vmatmul.mubr.f32.gmra.mxu0 %v1635
  %v1772 = vpop.f32.mrf.mxu0
  %v1773 = vadd.f32 %v1615, %v1772
  %v1774 = vpop.f32.mrf.mxu0
  %1775 = vmatprep.mubr.f32.mxu0 0.0
  %1776 = vmatmul.mubr.f32.gmra.mxu0 %v1638
  %v1777 = vpop.f32.mrf.mxu0
  %v1778 = vadd.f32 %v1615, %v1777
  %v1779 = vpop.f32.mrf.mxu0
  %1780 = vmatprep.mubr.f32.mxu0 0.0
  %1781 = vmatmul.mubr.f32.gmra.mxu0 %v1641
  %v1782 = vpop.f32.mrf.mxu0
  %v1783 = vadd.f32 %v1615, %v1782
  %v1784 = vpop.f32.mrf.mxu0
  %1785 = vmatprep.mubr.f32.mxu0 0.0
  %1786 = vmatmul.mubr.f32.gmra.mxu0 %v1644
  %v1787 = vpop.f32.mrf.mxu0
  %v1788 = vadd.f32 %v1615, %v1787
  %v1789 = vpop.f32.mrf.mxu0
  %1790 = vmatprep.mubr.f32.mxu0 0.0
  %1791 = vmatmul.mubr.f32.gmra.mxu0 %v1647
  %v1792 = vpop.f32.mrf.mxu0
  %v1793 = vadd.f32 %v1615, %v1792
  %v1794 = vpop.f32.mrf.mxu0
  %1795 = vmatprep.mubr.f32.mxu0 0.0
  %1796 = vmatmul.mubr.f32.gmra.mxu0 %v1650
  %v1797 = vpop.f32.mrf.mxu0
  %v1798 = vadd.f32 %v1615, %v1797
  %v1799 = vpop.f32.mrf.mxu0
  %1800 = vmatprep.mubr.f32.mxu0 0.0
  %1801 = vmatmul.mubr.f32.gmra.mxu0 %v1653
  %v1802 = vpop.f32.mrf.mxu0
  %v1803 = vadd.f32 %v1615, %v1802
  %v1804 = vpop.f32.mrf.mxu0
  %1805 = vmatprep.mubr.f32.mxu0 0.0
  %1806 = vmatmul.mubr.f32.gmra.mxu0 %v1656
  %v1807 = vpop.f32.mrf.mxu0
  %v1808 = vadd.f32 %v1615, %v1807
  %v1809 = vpop.f32.mrf.mxu0
  %1810 = vmatprep.mubr.f32.mxu0 0.0
  %1811 = vmatmul.mubr.f32.gmra.mxu0 %v1659
  %v1812 = vpop.f32.mrf.mxu0
  %v1813 = vadd.f32 %v1615, %v1812
  %v1814 = vpop.f32.mrf.mxu0
  %1815 = vmatprep.mubr.f32.mxu0 0.0
  %1816 = vmatmul.mubr.f32.gmra.mxu0 %v1662
  %v1817 = vpop.f32.mrf.mxu0
  %v1818 = vadd.f32 %v1615, %v1817
  %v1819 = vpop.f32.mrf.mxu0
  %1820 = vmatprep.mubr.f32.mxu0 0.0
  %1821 = vmatmul.mubr.f32.gmra.mxu0 %v1665
  %v1822 = vpop.f32.mrf.mxu0
  %v1823 = vadd.f32 %v1615, %v1822
  %v1824 = vpop.f32.mrf.mxu0
  %1825 = vmatprep.mubr.f32.mxu0 0.0
  %1826 = vmatmul.mubr.f32.gmra.mxu0 %v1668
  %v1827 = vpop.f32.mrf.mxu0
  %v1828 = vadd.f32 %v1615, %v1827
  %v1829 = vpop.f32.mrf.mxu0
  %1830 = vmatprep.mubr.f32.mxu0 0.0
  %1831 = vmatmul.mubr.f32.gmra.mxu0 %v1671
  %v1832 = vpop.f32.mrf.mxu0
  %v1833 = vadd.f32 %v1615, %v1832
  %v1834 = vpop.f32.mrf.mxu0
  %1835 = vmatprep.mubr.f32.mxu0 0.0
  %1836 = vmatmul.mubr.f32.gmra.mxu0 %v1674
  %v1837 = vpop.f32.mrf.mxu0
  %v1838 = vadd.f32 %v1615, %v1837
  %v1839 = vpop.f32.mrf.mxu0
  %1840 = vdwg.mxu0
  %vm1841 = vcmp.ge.f32.partialorder %v1743, 0.0
  %vm1842 = vcmp.ge.f32.partialorder %v1748, 0.0
  %vm1843 = vcmp.ge.f32.partialorder %v1753, 0.0
  %vm1844 = vcmp.ge.f32.partialorder %v1758, 0.0
  %vm1845 = vcmp.ge.f32.partialorder %v1763, 0.0
  %vm1846 = vcmp.ge.f32.partialorder %v1768, 0.0
  %vm1847 = vcmp.ge.f32.partialorder %v1773, 0.0
  %vm1848 = vcmp.ge.f32.partialorder %v1778, 0.0
  %vm1849 = vcmp.ge.f32.partialorder %v1783, 0.0
  %vm1850 = vcmp.ge.f32.partialorder %v1788, 0.0
  %vm1851 = vcmp.ge.f32.partialorder %v1793, 0.0
  %vm1852 = vcmp.ge.f32.partialorder %v1798, 0.0
  %vm1853 = vcmp.ge.f32.partialorder %v1803, 0.0
  %vm1854 = vcmp.ge.f32.partialorder %v1808, 0.0
  %vm1855 = vcmp.ge.f32.partialorder %v1813, 0.0
  %vm1856 = vcmp.ge.f32.partialorder %v1818, 0.0
  %vm1857 = vcmp.ge.f32.partialorder %v1823, 0.0
  %vm1858 = vcmp.ge.f32.partialorder %v1828, 0.0
  %vm1859 = vcmp.ge.f32.partialorder %v1833, 0.0
  %vm1860 = vcmp.ge.f32.partialorder %v1838, 0.0
  %v1861 = vmul.f32 %v1743, 0.01
  %v1862 = vmul.f32 %v1748, 0.01
  %v1863 = vmul.f32 %v1753, 0.01
  %v1864 = vmul.f32 %v1758, 0.01
  %v1865 = vmul.f32 %v1763, 0.01
  %v1866 = vmul.f32 %v1768, 0.01
  %v1867 = vmul.f32 %v1773, 0.01
  %v1868 = vmul.f32 %v1778, 0.01
  %v1869 = vmul.f32 %v1783, 0.01
  %v1870 = vmul.f32 %v1788, 0.01
  %v1871 = vmul.f32 %v1793, 0.01
  %v1872 = vmul.f32 %v1798, 0.01
  %v1873 = vmul.f32 %v1803, 0.01
  %v1874 = vmul.f32 %v1808, 0.01
  %v1875 = vmul.f32 %v1813, 0.01
  %v1876 = vmul.f32 %v1818, 0.01
  %v1877 = vmul.f32 %v1823, 0.01
  %v1878 = vmul.f32 %v1828, 0.01
  %v1879 = vmul.f32 %v1833, 0.01
  %v1880 = vmul.f32 %v1838, 0.01
  %v1881 = vsel %vm1841, %v1743, %v1861
  %v1882 = vsel %vm1842, %v1748, %v1862
  %v1883 = vsel %vm1843, %v1753, %v1863
  %v1884 = vsel %vm1844, %v1758, %v1864
  %v1885 = vsel %vm1845, %v1763, %v1865
  %v1886 = vsel %vm1846, %v1768, %v1866
  %v1887 = vsel %vm1847, %v1773, %v1867
  %v1888 = vsel %vm1848, %v1778, %v1868
  %v1889 = vsel %vm1849, %v1783, %v1869
  %v1890 = vsel %vm1850, %v1788, %v1870
  %v1891 = vsel %vm1851, %v1793, %v1871
  %v1892 = vsel %vm1852, %v1798, %v1872
  %v1893 = vsel %vm1853, %v1803, %v1873
  %v1894 = vsel %vm1854, %v1808, %v1874
  %v1895 = vsel %vm1855, %v1813, %v1875
  %v1896 = vsel %vm1856, %v1818, %v1876
  %v1897 = vsel %vm1857, %v1823, %v1877
  %v1898 = vsel %vm1858, %v1828, %v1878
  %v1899 = vsel %vm1859, %v1833, %v1879
  %v1900 = vsel %vm1860, %v1838, %v1880
  %v1901 = vlaneseq
  %v1902 = vshrl.u32 %v1901, 7
  %v1903 = vsub.s32 0, %v1902
  %v1904 = vrot.slane %v1249, %v1903
  %v1906 = vsel %vm656, %v1881, 0
  %v1909 = vsel %vm656, %v1882, 0
  %v1912 = vsel %vm656, %v1883, 0
  %v1915 = vsel %vm656, %v1884, 0
  %v1918 = vsel %vm656, %v1885, 0
  %v1921 = vsel %vm656, %v1886, 0
  %v1924 = vsel %vm656, %v1887, 0
  %v1927 = vsel %vm656, %v1888, 0
  %v1930 = vsel %vm656, %v1889, 0
  %v1933 = vsel %vm656, %v1890, 0
  %v1936 = vsel %vm656, %v1891, 0
  %v1939 = vsel %vm656, %v1892, 0
  %v1942 = vsel %vm656, %v1893, 0
  %v1945 = vsel %vm656, %v1894, 0
  %v1948 = vsel %vm656, %v1895, 0
  %v1951 = vsel %vm656, %v1896, 0
  %v1954 = vsel %vm656, %v1897, 0
  %v1957 = vsel %vm656, %v1898, 0
  %v1960 = vsel %vm656, %v1899, 0
  %v1963 = vsel %vm656, %v1900, 0
  %1965 = vmatprep.subr.mxu0 0.0
  %1966 = vmatpush1.msra.mxu0 0.0
  %1967 = vmatprep.subr.mxu0 0.0
  %1968 = vmatpush1.msra.mxu0 0.0
  %1969 = vmatprep.subr.mxu0 0.0
  %1970 = vmatpush1.msra.mxu0 0.0
  %1971 = vmatprep.subr.mxu0 0.0
  %1972 = vmatpush1.msra.mxu0 0.0
  %1973 = vmatprep.subr.mxu0 0.0
  %1974 = vmatpush1.msra.mxu0 0.0
  %1975 = vmatprep.subr.mxu0 0.0
  %1976 = vmatpush1.msra.mxu0 0.0
  %1977 = vmatprep.subr.mxu0 0.0
  %1978 = vmatpush1.msra.mxu0 0.0
  %1979 = vmatprep.subr.mxu0 0.0
  %1980 = vmatpush1.msra.mxu0 0.0
  %1981 = vmatprep.subr.mxu0 0.0
  %1982 = vmatpush1.msra.mxu0 0.0
  %1983 = vmatprep.subr.mxu0 0.0
  %1984 = vmatpush1.msra.mxu0 0.0
  %1985 = vmatprep.subr.mxu0 0.0
  %1986 = vmatpush1.msra.mxu0 0.0
  %1987 = vmatprep.subr.mxu0 0.0
  %1988 = vmatpush1.msra.mxu0 0.0
  %1989 = vmatprep.subr.mxu0 0.0
  %1990 = vmatpush1.msra.mxu0 %v1248
  %1991 = vmatprep.subr.mxu0 0.0
  %1992 = vmatpush1.msra.mxu0 %v1247
  %1993 = vmatprep.subr.mxu0 0.0
  %1994 = vmatpush1.msra.mxu0 %v1246
  %1995 = vmatprep.subr.mxu0 0.0
  %1996 = vmatpush1.msra.mxu0 %v1245
  %1997 = vmatprep.subr.mxu0 0.0
  %1998 = vmatpush2.msra.mxu0 0.0
  %1999 = vmatprep.subr.mxu0 0.0
  %2000 = vmatpush2.msra.mxu0 0.0
  %2001 = vmatprep.subr.mxu0 0.0
  %2002 = vmatpush2.msra.mxu0 0.0
  %2003 = vmatprep.subr.mxu0 0.0
  %2004 = vmatpush2.msra.mxu0 0.0
  %2005 = vmatprep.subr.mxu0 0.0
  %2006 = vmatpush2.msra.mxu0 0.0
  %2007 = vmatprep.subr.mxu0 0.0
  %2008 = vmatpush2.msra.mxu0 0.0
  %2009 = vmatprep.subr.mxu0 0.0
  %2010 = vmatpush2.msra.mxu0 0.0
  %2011 = vmatprep.subr.mxu0 0.0
  %2012 = vmatpush2.msra.mxu0 0.0
  %2013 = vmatprep.subr.mxu0 0.0
  %2014 = vmatpush2.msra.mxu0 0.0
  %2015 = vmatprep.subr.mxu0 0.0
  %2016 = vmatpush2.msra.mxu0 0.0
  %2017 = vmatprep.subr.mxu0 0.0
  %2018 = vmatpush2.msra.mxu0 0.0
  %2019 = vmatprep.subr.mxu0 0.0
  %2020 = vmatpush2.msra.mxu0 0.0
  %2021 = vmatprep.subr.mxu0 0.0
  %2022 = vmatpush2.msra.mxu0 0.0
  %2023 = vmatprep.subr.mxu0 0.0
  %2024 = vmatpush2.msra.mxu0 0.0
  %2025 = vmatprep.subr.mxu0 0.0
  %2026 = vmatpush2.msra.mxu0 0.0
  %2027 = vmatprep.subr.mxu0 0.0
  %2028 = vmatpush2.msra.mxu0 0.0
  %2029 = vmatprep.mubr.f32.mxu0 0.0
  %2030 = vmatmul.mubr.f32.gmra.mxu0 %v1906
  %v2031 = vpop.f32.mrf.mxu0
  %v2032 = vadd.f32 %v1904, %v2031
  %v2033 = vpop.f32.mrf.mxu0
  %2034 = vmatprep.mubr.f32.mxu0 0.0
  %2035 = vmatmul.mubr.f32.gmra.mxu0 %v1909
  %v2036 = vpop.f32.mrf.mxu0
  %v2037 = vadd.f32 %v1904, %v2036
  %v2038 = vpop.f32.mrf.mxu0
  %2039 = vmatprep.mubr.f32.mxu0 0.0
  %2040 = vmatmul.mubr.f32.gmra.mxu0 %v1912
  %v2041 = vpop.f32.mrf.mxu0
  %v2042 = vadd.f32 %v1904, %v2041
  %v2043 = vpop.f32.mrf.mxu0
  %2044 = vmatprep.mubr.f32.mxu0 0.0
  %2045 = vmatmul.mubr.f32.gmra.mxu0 %v1915
  %v2046 = vpop.f32.mrf.mxu0
  %v2047 = vadd.f32 %v1904, %v2046
  %v2048 = vpop.f32.mrf.mxu0
  %2049 = vmatprep.mubr.f32.mxu0 0.0
  %2050 = vmatmul.mubr.f32.gmra.mxu0 %v1918
  %v2051 = vpop.f32.mrf.mxu0
  %v2052 = vadd.f32 %v1904, %v2051
  %v2053 = vpop.f32.mrf.mxu0
  %2054 = vmatprep.mubr.f32.mxu0 0.0
  %2055 = vmatmul.mubr.f32.gmra.mxu0 %v1921
  %v2056 = vpop.f32.mrf.mxu0
  %v2057 = vadd.f32 %v1904, %v2056
  %v2058 = vpop.f32.mrf.mxu0
  %2059 = vmatprep.mubr.f32.mxu0 0.0
  %2060 = vmatmul.mubr.f32.gmra.mxu0 %v1924
  %v2061 = vpop.f32.mrf.mxu0
  %v2062 = vadd.f32 %v1904, %v2061
  %v2063 = vpop.f32.mrf.mxu0
  %2064 = vmatprep.mubr.f32.mxu0 0.0
  %2065 = vmatmul.mubr.f32.gmra.mxu0 %v1927
  %v2066 = vpop.f32.mrf.mxu0
  %v2067 = vadd.f32 %v1904, %v2066
  %v2068 = vpop.f32.mrf.mxu0
  %2069 = vmatprep.mubr.f32.mxu0 0.0
  %2070 = vmatmul.mubr.f32.gmra.mxu0 %v1930
  %v2071 = vpop.f32.mrf.mxu0
  %v2072 = vadd.f32 %v1904, %v2071
  %v2073 = vpop.f32.mrf.mxu0
  %2074 = vmatprep.mubr.f32.mxu0 0.0
  %2075 = vmatmul.mubr.f32.gmra.mxu0 %v1933
  %v2076 = vpop.f32.mrf.mxu0
  %v2077 = vadd.f32 %v1904, %v2076
  %v2078 = vpop.f32.mrf.mxu0
  %2079 = vmatprep.mubr.f32.mxu0 0.0
  %2080 = vmatmul.mubr.f32.gmra.mxu0 %v1936
  %v2081 = vpop.f32.mrf.mxu0
  %v2082 = vadd.f32 %v1904, %v2081
  %v2083 = vpop.f32.mrf.mxu0
  %2084 = vmatprep.mubr.f32.mxu0 0.0
  %2085 = vmatmul.mubr.f32.gmra.mxu0 %v1939
  %v2086 = vpop.f32.mrf.mxu0
  %v2087 = vadd.f32 %v1904, %v2086
  %v2088 = vpop.f32.mrf.mxu0
  %2089 = vmatprep.mubr.f32.mxu0 0.0
  %2090 = vmatmul.mubr.f32.gmra.mxu0 %v1942
  %v2091 = vpop.f32.mrf.mxu0
  %v2092 = vadd.f32 %v1904, %v2091
  %v2093 = vpop.f32.mrf.mxu0
  %2094 = vmatprep.mubr.f32.mxu0 0.0
  %2095 = vmatmul.mubr.f32.gmra.mxu0 %v1945
  %v2096 = vpop.f32.mrf.mxu0
  %v2097 = vadd.f32 %v1904, %v2096
  %v2098 = vpop.f32.mrf.mxu0
  %2099 = vmatprep.mubr.f32.mxu0 0.0
  %2100 = vmatmul.mubr.f32.gmra.mxu0 %v1948
  %v2101 = vpop.f32.mrf.mxu0
  %v2102 = vadd.f32 %v1904, %v2101
  %v2103 = vpop.f32.mrf.mxu0
  %2104 = vmatprep.mubr.f32.mxu0 0.0
  %2105 = vmatmul.mubr.f32.gmra.mxu0 %v1951
  %v2106 = vpop.f32.mrf.mxu0
  %v2107 = vadd.f32 %v1904, %v2106
  %v2108 = vpop.f32.mrf.mxu0
  %2109 = vmatprep.mubr.f32.mxu0 0.0
  %2110 = vmatmul.mubr.f32.gmra.mxu0 %v1954
  %v2111 = vpop.f32.mrf.mxu0
  %v2112 = vadd.f32 %v1904, %v2111
  %v2113 = vpop.f32.mrf.mxu0
  %2114 = vmatprep.mubr.f32.mxu0 0.0
  %2115 = vmatmul.mubr.f32.gmra.mxu0 %v1957
  %v2116 = vpop.f32.mrf.mxu0
  %v2117 = vadd.f32 %v1904, %v2116
  %v2118 = vpop.f32.mrf.mxu0
  %2119 = vmatprep.mubr.f32.mxu0 0.0
  %2120 = vmatmul.mubr.f32.gmra.mxu0 %v1960
  %v2121 = vpop.f32.mrf.mxu0
  %v2122 = vadd.f32 %v1904, %v2121
  %v2123 = vpop.f32.mrf.mxu0
  %2124 = vmatprep.mubr.f32.mxu0 0.0
  %2125 = vmatmul.mubr.f32.gmra.mxu0 %v1963
  %v2126 = vpop.f32.mrf.mxu0
  %v2127 = vadd.f32 %v1904, %v2126
  %v2128 = vpop.f32.mrf.mxu0
  %2129 = vdwg.mxu0
  %vm2130 = vcmp.ge.f32.partialorder %v2032, 0.0
  %vm2131 = vcmp.ge.f32.partialorder %v2037, 0.0
  %vm2132 = vcmp.ge.f32.partialorder %v2042, 0.0
  %vm2133 = vcmp.ge.f32.partialorder %v2047, 0.0
  %vm2134 = vcmp.ge.f32.partialorder %v2052, 0.0
  %vm2135 = vcmp.ge.f32.partialorder %v2057, 0.0
  %vm2136 = vcmp.ge.f32.partialorder %v2062, 0.0
  %vm2137 = vcmp.ge.f32.partialorder %v2067, 0.0
  %vm2138 = vcmp.ge.f32.partialorder %v2072, 0.0
  %vm2139 = vcmp.ge.f32.partialorder %v2077, 0.0
  %vm2140 = vcmp.ge.f32.partialorder %v2082, 0.0
  %vm2141 = vcmp.ge.f32.partialorder %v2087, 0.0
  %vm2142 = vcmp.ge.f32.partialorder %v2092, 0.0
  %vm2143 = vcmp.ge.f32.partialorder %v2097, 0.0
  %vm2144 = vcmp.ge.f32.partialorder %v2102, 0.0
  %vm2145 = vcmp.ge.f32.partialorder %v2107, 0.0
  %vm2146 = vcmp.ge.f32.partialorder %v2112, 0.0
  %vm2147 = vcmp.ge.f32.partialorder %v2117, 0.0
  %vm2148 = vcmp.ge.f32.partialorder %v2122, 0.0
  %vm2149 = vcmp.ge.f32.partialorder %v2127, 0.0
  %v2150 = vmul.f32 %v2032, 0.01
  %v2151 = vmul.f32 %v2037, 0.01
  %v2152 = vmul.f32 %v2042, 0.01
  %v2153 = vmul.f32 %v2047, 0.01
  %v2154 = vmul.f32 %v2052, 0.01
  %v2155 = vmul.f32 %v2057, 0.01
  %v2156 = vmul.f32 %v2062, 0.01
  %v2157 = vmul.f32 %v2067, 0.01
  %v2158 = vmul.f32 %v2072, 0.01
  %v2159 = vmul.f32 %v2077, 0.01
  %v2160 = vmul.f32 %v2082, 0.01
  %v2161 = vmul.f32 %v2087, 0.01
  %v2162 = vmul.f32 %v2092, 0.01
  %v2163 = vmul.f32 %v2097, 0.01
  %v2164 = vmul.f32 %v2102, 0.01
  %v2165 = vmul.f32 %v2107, 0.01
  %v2166 = vmul.f32 %v2112, 0.01
  %v2167 = vmul.f32 %v2117, 0.01
  %v2168 = vmul.f32 %v2122, 0.01
  %v2169 = vmul.f32 %v2127, 0.01
  %v2170 = vsel %vm2130, %v2032, %v2150
  %v2171 = vsel %vm2131, %v2037, %v2151
  %v2172 = vsel %vm2132, %v2042, %v2152
  %v2173 = vsel %vm2133, %v2047, %v2153
  %v2174 = vsel %vm2134, %v2052, %v2154
  %v2175 = vsel %vm2135, %v2057, %v2155
  %v2176 = vsel %vm2136, %v2062, %v2156
  %v2177 = vsel %vm2137, %v2067, %v2157
  %v2178 = vsel %vm2138, %v2072, %v2158
  %v2179 = vsel %vm2139, %v2077, %v2159
  %v2180 = vsel %vm2140, %v2082, %v2160
  %v2181 = vsel %vm2141, %v2087, %v2161
  %v2182 = vsel %vm2142, %v2092, %v2162
  %v2183 = vsel %vm2143, %v2097, %v2163
  %v2184 = vsel %vm2144, %v2102, %v2164
  %v2185 = vsel %vm2145, %v2107, %v2165
  %v2186 = vsel %vm2146, %v2112, %v2166
  %v2187 = vsel %vm2147, %v2117, %v2167
  %v2188 = vsel %vm2148, %v2122, %v2168
  %v2189 = vsel %vm2149, %v2127, %v2169
  %2191 = vset.pattern.permute.xlu0 0
  %2192 = vperm.xlu0 %2191, %v843
  %v2193 = vpop.permute.xlu0 %2192
  %2196 = vset.pattern.permute.xlu0 0
  %2197 = vperm.xlu0 %2196, %v845
  %v2198 = vpop.permute.xlu0 %2197
  %2201 = vset.pattern.permute.xlu0 0
  %2202 = vperm.xlu0 %2201, %v847
  %v2203 = vpop.permute.xlu0 %2202
  %2206 = vset.pattern.permute.xlu0 0
  %2207 = vperm.xlu0 %2206, %v849
  %v2208 = vpop.permute.xlu0 %2207
  %2211 = vset.pattern.permute.xlu0 0
  %2212 = vperm.xlu0 %2211, %v851
  %v2213 = vpop.permute.xlu0 %2212
  %2216 = vset.pattern.permute.xlu0 0
  %2217 = vperm.xlu0 %2216, %v853
  %v2218 = vpop.permute.xlu0 %2217
  %2221 = vset.pattern.permute.xlu0 0
  %2222 = vperm.xlu0 %2221, %v855
  %v2223 = vpop.permute.xlu0 %2222
  %2226 = vset.pattern.permute.xlu0 0
  %2227 = vperm.xlu0 %2226, %v857
  %v2228 = vpop.permute.xlu0 %2227
  %v2230 = vmul.f32 %v2193, %v2174
  %v2231 = vmul.f32 %v2198, %v2175
  %v2232 = vmul.f32 %v2203, %v2176
  %v2233 = vmul.f32 %v2208, %v2177
  %v2234 = vmul.f32 %v2213, %v2178
  %v2235 = vmul.f32 %v2218, %v2179
  %v2236 = vmul.f32 %v2223, %v2180
  %v2237 = vmul.f32 %v2228, %v2181
  %2238 = vrot.lane.b32.xlu0 %v843, 16
  %v2239 = vpop.permute.xlu0 %2238
  %2240 = vrot.lane.b32.xlu0 %v845, 16
  %v2241 = vpop.permute.xlu0 %2240
  %2242 = vrot.lane.b32.xlu0 %v847, 16
  %v2243 = vpop.permute.xlu0 %2242
  %2244 = vrot.lane.b32.xlu0 %v849, 16
  %v2245 = vpop.permute.xlu0 %2244
  %2246 = vrot.lane.b32.xlu0 %v851, 16
  %v2247 = vpop.permute.xlu0 %2246
  %2248 = vrot.lane.b32.xlu0 %v853, 16
  %v2249 = vpop.permute.xlu0 %2248
  %2250 = vrot.lane.b32.xlu0 %v855, 16
  %v2251 = vpop.permute.xlu0 %2250
  %2252 = vrot.lane.b32.xlu0 %v857, 16
  %v2253 = vpop.permute.xlu0 %2252
  %v2262 = vsel %vm333, %v2230, %v2239
  %v2263 = vsel %vm333, %v2231, %v2241
  %v2264 = vsel %vm333, %v2232, %v2243
  %v2265 = vsel %vm333, %v2233, %v2245
  %v2266 = vsel %vm333, %v2234, %v2247
  %v2267 = vsel %vm333, %v2235, %v2249
  %v2268 = vsel %vm333, %v2236, %v2251
  %v2269 = vsel %vm333, %v2237, %v2253
  %2270 = vset.pattern.permute.xlu0 1
  %2271 = vperm.xlu0 %2270, %v843
  %v2272 = vpop.permute.xlu0 %2271
  %2274 = vset.pattern.permute.xlu0 1
  %2275 = vperm.xlu0 %2274, %v845
  %v2276 = vpop.permute.xlu0 %2275
  %2278 = vset.pattern.permute.xlu0 1
  %2279 = vperm.xlu0 %2278, %v847
  %v2280 = vpop.permute.xlu0 %2279
  %2282 = vset.pattern.permute.xlu0 1
  %2283 = vperm.xlu0 %2282, %v849
  %v2284 = vpop.permute.xlu0 %2283
  %2286 = vset.pattern.permute.xlu0 1
  %2287 = vperm.xlu0 %2286, %v851
  %v2288 = vpop.permute.xlu0 %2287
  %2290 = vset.pattern.permute.xlu0 1
  %2291 = vperm.xlu0 %2290, %v853
  %v2292 = vpop.permute.xlu0 %2291
  %2294 = vset.pattern.permute.xlu0 1
  %2295 = vperm.xlu0 %2294, %v855
  %v2296 = vpop.permute.xlu0 %2295
  %2298 = vset.pattern.permute.xlu0 1
  %2299 = vperm.xlu0 %2298, %v857
  %v2300 = vpop.permute.xlu0 %2299
  %v2302 = vmul.f32 %v2272, %v2182
  %v2303 = vmul.f32 %v2276, %v2183
  %v2304 = vmul.f32 %v2280, %v2184
  %v2305 = vmul.f32 %v2284, %v2185
  %v2306 = vmul.f32 %v2288, %v2186
  %v2307 = vmul.f32 %v2292, %v2187
  %v2308 = vmul.f32 %v2296, %v2188
  %v2309 = vmul.f32 %v2300, %v2189
  %2310 = vrot.lane.b32.xlu0 %v843, 15
  %v2311 = vpop.permute.xlu0 %2310
  %2312 = vrot.lane.b32.xlu0 %v845, 15
  %v2313 = vpop.permute.xlu0 %2312
  %2314 = vrot.lane.b32.xlu0 %v847, 15
  %v2315 = vpop.permute.xlu0 %2314
  %2316 = vrot.lane.b32.xlu0 %v849, 15
  %v2317 = vpop.permute.xlu0 %2316
  %2318 = vrot.lane.b32.xlu0 %v851, 15
  %v2319 = vpop.permute.xlu0 %2318
  %2320 = vrot.lane.b32.xlu0 %v853, 15
  %v2321 = vpop.permute.xlu0 %2320
  %2322 = vrot.lane.b32.xlu0 %v855, 15
  %v2323 = vpop.permute.xlu0 %2322
  %2324 = vrot.lane.b32.xlu0 %v857, 15
  %v2325 = vpop.permute.xlu0 %2324
  %v2334 = vsel %vm333, %v2302, %v2311
  %v2335 = vsel %vm333, %v2303, %v2313
  %v2336 = vsel %vm333, %v2304, %v2315
  %v2337 = vsel %vm333, %v2305, %v2317
  %v2338 = vsel %vm333, %v2306, %v2319
  %v2339 = vsel %vm333, %v2307, %v2321
  %v2340 = vsel %vm333, %v2308, %v2323
  %v2341 = vsel %vm333, %v2309, %v2325
  %vm2342 = vcmask 523264
  %v2344 = vsel %vm2342, %v1236, 0
  %v2347 = vsel %vm2342, %v1237, 0
  %v2350 = vsel %vm2342, %v1238, 0
  %v2353 = vsel %vm2342, %v1239, 0
  %2355 = vmatprep.subr.mxu0 0.0
  %2356 = vmatpush1.msra.mxu0 0.0
  %2357 = vmatprep.subr.mxu0 0.0
  %2358 = vmatpush1.msra.mxu0 0.0
  %2359 = vmatprep.subr.mxu0 0.0
  %2360 = vmatpush1.msra.mxu0 0.0
  %2361 = vmatprep.subr.mxu0 0.0
  %2362 = vmatpush1.msra.mxu0 0.0
  %2363 = vmatprep.subr.mxu0 0.0
  %2364 = vmatpush1.msra.mxu0 0.0
  %2365 = vmatprep.subr.mxu0 0.0
  %2366 = vmatpush1.msra.mxu0 0.0
  %2367 = vmatprep.subr.mxu0 0.0
  %2368 = vmatpush1.msra.mxu0 0.0
  %2369 = vmatprep.subr.mxu0 0.0
  %2370 = vmatpush1.msra.mxu0 0.0
  %2371 = vmatprep.subr.mxu0 0.0
  %2372 = vmatpush1.msra.mxu0 %v2341
  %2373 = vmatprep.subr.mxu0 0.0
  %2374 = vmatpush1.msra.mxu0 %v2340
  %2375 = vmatprep.subr.mxu0 0.0
  %2376 = vmatpush1.msra.mxu0 %v2339
  %2377 = vmatprep.subr.mxu0 0.0
  %2378 = vmatpush1.msra.mxu0 %v2338
  %2379 = vmatprep.subr.mxu0 0.0
  %2380 = vmatpush1.msra.mxu0 %v2337
  %2381 = vmatprep.subr.mxu0 0.0
  %2382 = vmatpush1.msra.mxu0 %v2336
  %2383 = vmatprep.subr.mxu0 0.0
  %2384 = vmatpush1.msra.mxu0 %v2335
  %2385 = vmatprep.subr.mxu0 0.0
  %2386 = vmatpush1.msra.mxu0 %v2334
  %2387 = vmatprep.subr.mxu0 0.0
  %2388 = vmatpush2.msra.mxu0 0.0
  %2389 = vmatprep.subr.mxu0 0.0
  %2390 = vmatpush2.msra.mxu0 0.0
  %2391 = vmatprep.subr.mxu0 0.0
  %2392 = vmatpush2.msra.mxu0 0.0
  %2393 = vmatprep.subr.mxu0 0.0
  %2394 = vmatpush2.msra.mxu0 0.0
  %2395 = vmatprep.subr.mxu0 0.0
  %2396 = vmatpush2.msra.mxu0 0.0
  %2397 = vmatprep.subr.mxu0 0.0
  %2398 = vmatpush2.msra.mxu0 0.0
  %2399 = vmatprep.subr.mxu0 0.0
  %2400 = vmatpush2.msra.mxu0 0.0
  %2401 = vmatprep.subr.mxu0 0.0
  %2402 = vmatpush2.msra.mxu0 0.0
  %2403 = vmatprep.subr.mxu0 0.0
  %2404 = vmatpush2.msra.mxu0 0.0
  %2405 = vmatprep.subr.mxu0 0.0
  %2406 = vmatpush2.msra.mxu0 0.0
  %2407 = vmatprep.subr.mxu0 0.0
  %2408 = vmatpush2.msra.mxu0 0.0
  %2409 = vmatprep.subr.mxu0 0.0
  %2410 = vmatpush2.msra.mxu0 0.0
  %2411 = vmatprep.subr.mxu0 0.0
  %2412 = vmatpush2.msra.mxu0 0.0
  %2413 = vmatprep.subr.mxu0 0.0
  %2414 = vmatpush2.msra.mxu0 0.0
  %2415 = vmatprep.subr.mxu0 0.0
  %2416 = vmatpush2.msra.mxu0 0.0
  %2417 = vmatprep.subr.mxu0 0.0
  %2418 = vmatpush2.msra.mxu0 0.0
  %2419 = vmatprep.mubr.f32.mxu0 0.0
  %2420 = vmatmul.mubr.f32.gmra.mxu0 %v2344
  %v2421 = vpop.f32.mrf.mxu0
  %v2422 = vadd.f32 0.0, %v2421
  %v2423 = vpop.f32.mrf.mxu0
  %2424 = vmatprep.mubr.f32.mxu0 0.0
  %2425 = vmatmul.mubr.f32.gmra.mxu0 %v2347
  %v2426 = vpop.f32.mrf.mxu0
  %v2427 = vadd.f32 0.0, %v2426
  %v2428 = vpop.f32.mrf.mxu0
  %2429 = vmatprep.mubr.f32.mxu0 0.0
  %2430 = vmatmul.mubr.f32.gmra.mxu0 %v2350
  %v2431 = vpop.f32.mrf.mxu0
  %v2432 = vadd.f32 0.0, %v2431
  %v2433 = vpop.f32.mrf.mxu0
  %2434 = vmatprep.mubr.f32.mxu0 0.0
  %2435 = vmatmul.mubr.f32.gmra.mxu0 %v2353
  %v2436 = vpop.f32.mrf.mxu0
  %v2437 = vadd.f32 0.0, %v2436
  %v2438 = vpop.f32.mrf.mxu0
  %2439 = vdwg.mxu0
  %v2441 = vsel %vm2342, %v1220, 0
  %v2444 = vsel %vm2342, %v1221, 0
  %v2447 = vsel %vm2342, %v1222, 0
  %v2450 = vsel %vm2342, %v1223, 0
  %2452 = vmatprep.subr.mxu0 0.0
  %2453 = vmatpush1.msra.mxu0 0.0
  %2454 = vmatprep.subr.mxu0 0.0
  %2455 = vmatpush1.msra.mxu0 0.0
  %2456 = vmatprep.subr.mxu0 0.0
  %2457 = vmatpush1.msra.mxu0 0.0
  %2458 = vmatprep.subr.mxu0 0.0
  %2459 = vmatpush1.msra.mxu0 0.0
  %2460 = vmatprep.subr.mxu0 0.0
  %2461 = vmatpush1.msra.mxu0 0.0
  %2462 = vmatprep.subr.mxu0 0.0
  %2463 = vmatpush1.msra.mxu0 0.0
  %2464 = vmatprep.subr.mxu0 0.0
  %2465 = vmatpush1.msra.mxu0 0.0
  %2466 = vmatprep.subr.mxu0 0.0
  %2467 = vmatpush1.msra.mxu0 0.0
  %2468 = vmatprep.subr.mxu0 0.0
  %2469 = vmatpush1.msra.mxu0 %v2269
  %2470 = vmatprep.subr.mxu0 0.0
  %2471 = vmatpush1.msra.mxu0 %v2268
  %2472 = vmatprep.subr.mxu0 0.0
  %2473 = vmatpush1.msra.mxu0 %v2267
  %2474 = vmatprep.subr.mxu0 0.0
  %2475 = vmatpush1.msra.mxu0 %v2266
  %2476 = vmatprep.subr.mxu0 0.0
  %2477 = vmatpush1.msra.mxu0 %v2265
  %2478 = vmatprep.subr.mxu0 0.0
  %2479 = vmatpush1.msra.mxu0 %v2264
  %2480 = vmatprep.subr.mxu0 0.0
  %2481 = vmatpush1.msra.mxu0 %v2263
  %2482 = vmatprep.subr.mxu0 0.0
  %2483 = vmatpush1.msra.mxu0 %v2262
  %2484 = vmatprep.subr.mxu0 0.0
  %2485 = vmatpush2.msra.mxu0 0.0
  %2486 = vmatprep.subr.mxu0 0.0
  %2487 = vmatpush2.msra.mxu0 0.0
  %2488 = vmatprep.subr.mxu0 0.0
  %2489 = vmatpush2.msra.mxu0 0.0
  %2490 = vmatprep.subr.mxu0 0.0
  %2491 = vmatpush2.msra.mxu0 0.0
  %2492 = vmatprep.subr.mxu0 0.0
  %2493 = vmatpush2.msra.mxu0 0.0
  %2494 = vmatprep.subr.mxu0 0.0
  %2495 = vmatpush2.msra.mxu0 0.0
  %2496 = vmatprep.subr.mxu0 0.0
  %2497 = vmatpush2.msra.mxu0 0.0
  %2498 = vmatprep.subr.mxu0 0.0
  %2499 = vmatpush2.msra.mxu0 0.0
  %2500 = vmatprep.subr.mxu0 0.0
  %2501 = vmatpush2.msra.mxu0 0.0
  %2502 = vmatprep.subr.mxu0 0.0
  %2503 = vmatpush2.msra.mxu0 0.0
  %2504 = vmatprep.subr.mxu0 0.0
  %2505 = vmatpush2.msra.mxu0 0.0
  %2506 = vmatprep.subr.mxu0 0.0
  %2507 = vmatpush2.msra.mxu0 0.0
  %2508 = vmatprep.subr.mxu0 0.0
  %2509 = vmatpush2.msra.mxu0 0.0
  %2510 = vmatprep.subr.mxu0 0.0
  %2511 = vmatpush2.msra.mxu0 0.0
  %2512 = vmatprep.subr.mxu0 0.0
  %2513 = vmatpush2.msra.mxu0 0.0
  %2514 = vmatprep.subr.mxu0 0.0
  %2515 = vmatpush2.msra.mxu0 0.0
  %2516 = vmatprep.mubr.f32.mxu0 0.0
  %2517 = vmatmul.mubr.f32.gmra.mxu0 %v2441
  %v2518 = vpop.f32.mrf.mxu0
  %v2519 = vadd.f32 %v2422, %v2518
  %v2520 = vpop.f32.mrf.mxu0
  %2521 = vmatprep.mubr.f32.mxu0 0.0
  %2522 = vmatmul.mubr.f32.gmra.mxu0 %v2444
  %v2523 = vpop.f32.mrf.mxu0
  %v2524 = vadd.f32 %v2427, %v2523
  %v2525 = vpop.f32.mrf.mxu0
  %2526 = vmatprep.mubr.f32.mxu0 0.0
  %2527 = vmatmul.mubr.f32.gmra.mxu0 %v2447
  %v2528 = vpop.f32.mrf.mxu0
  %v2529 = vadd.f32 %v2432, %v2528
  %v2530 = vpop.f32.mrf.mxu0
  %2531 = vmatprep.mubr.f32.mxu0 0.0
  %2532 = vmatmul.mubr.f32.gmra.mxu0 %v2450
  %v2533 = vpop.f32.mrf.mxu0
  %v2534 = vadd.f32 %v2437, %v2533
  %v2535 = vpop.f32.mrf.mxu0
  %2536 = vdwg.mxu0
  %v2537 = vadd.f32 %v2170, %v2519
  %v2538 = vadd.f32 %v2171, %v2524
  %v2539 = vadd.f32 %v2172, %v2529
  %v2540 = vadd.f32 %v2173, %v2534
  %v2541 = vadd.f32 %v2519, 1.0
  %v2542 = vadd.f32 %v2524, 1.0
  %v2543 = vadd.f32 %v2529, 1.0
  %v2544 = vadd.f32 %v2534, 1.0
  %v2545 = vrcp.pop %v2541
  %v2546 = vrcp.pop %v2542
  %v2547 = vrcp.pop %v2543
  %v2548 = vrcp.pop %v2544
  %2550 = vset.pattern.permute.xlu0 16
  %2551 = vperm.xlu0 %2550, %v2545
  %v2552 = vpop.permute.xlu0 %2551
  %2555 = vset.pattern.permute.xlu0 16
  %2556 = vperm.xlu0 %2555, %v2546
  %v2557 = vpop.permute.xlu0 %2556
  %2560 = vset.pattern.permute.xlu0 16
  %2561 = vperm.xlu0 %2560, %v2547
  %v2562 = vpop.permute.xlu0 %2561
  %2565 = vset.pattern.permute.xlu0 16
  %2566 = vperm.xlu0 %2565, %v2548
  %v2567 = vpop.permute.xlu0 %2566
  %v2569 = vmul.f32 %v2537, %v2552
  %v2570 = vmul.f32 %v2538, %v2557
  %v2571 = vmul.f32 %v2539, %v2562
  %v2572 = vmul.f32 %v2540, %v2567
  %v2573 = vadd.f32 %v2569, %v1091
  %v2574 = vadd.f32 %v2570, %v1092
  %v2575 = vadd.f32 %v2571, %v1093
  %v2576 = vadd.f32 %v2572, %v1094
  %vm2577 = vcmp.ge.f32.partialorder %v2573, 0.0
  %vm2578 = vcmp.ge.f32.partialorder %v2574, 0.0
  %vm2579 = vcmp.ge.f32.partialorder %v2575, 0.0
  %vm2580 = vcmp.ge.f32.partialorder %v2576, 0.0
  %v2581 = vmul.f32 %v2573, 0.01
  %v2582 = vmul.f32 %v2574, 0.01
  %v2583 = vmul.f32 %v2575, 0.01
  %v2584 = vmul.f32 %v2576, 0.01
  %v2585 = vsel %vm2577, %v2573, %v2581
  %v2586 = vsel %vm2578, %v2574, %v2582
  %v2587 = vsel %vm2579, %v2575, %v2583
  %v2588 = vsel %vm2580, %v2576, %v2584
  %v2589 = vld [vmem:[%s4 + $0xf8] sm:$0xff]
  %v2590 = vld [vmem:[%s4 + $0x100] sm:$0xff]
  %v2591 = vld [vmem:[%s4 + $0x108] sm:$0xff]
  %v2592 = vld [vmem:[%s4 + $0x110] sm:$0xff]
  %v2593 = vld [vmem:[%s4 + $0x118] sm:$0x1]
  %v2594 = vld [vmem:[%s4 + $0x120] sm:$0xff]
  %v2595 = vld [vmem:[%s4 + $0x128] sm:$0xff]
  %v2596 = vld [vmem:[%s4 + $0x130] sm:$0xff]
  %v2597 = vld [vmem:[%s4 + $0x138] sm:$0xff]
  %v2598 = vld [vmem:[%s4 + $0x140] sm:$0x1]
  %2599 = vmatprep.subr.mxu0 0.0
  %2600 = vmatpush1.msra.mxu0 0.0
  %2601 = vmatprep.subr.mxu0 0.0
  %2602 = vmatpush1.msra.mxu0 0.0
  %2603 = vmatprep.subr.mxu0 0.0
  %2604 = vmatpush1.msra.mxu0 0.0
  %2605 = vmatprep.subr.mxu0 0.0
  %2606 = vmatpush1.msra.mxu0 0.0
  %2607 = vmatprep.subr.mxu0 0.0
  %2608 = vmatpush1.msra.mxu0 0.0
  %2609 = vmatprep.subr.mxu0 0.0
  %2610 = vmatpush1.msra.mxu0 0.0
  %2611 = vmatprep.subr.mxu0 0.0
  %2612 = vmatpush1.msra.mxu0 0.0
  %2613 = vmatprep.subr.mxu0 0.0
  %2614 = vmatpush1.msra.mxu0 0.0
  %2615 = vmatprep.subr.mxu0 0.0
  %2616 = vmatpush1.msra.mxu0 0.0
  %2617 = vmatprep.subr.mxu0 0.0
  %2618 = vmatpush1.msra.mxu0 0.0
  %2619 = vmatprep.subr.mxu0 0.0
  %2620 = vmatpush1.msra.mxu0 0.0
  %2621 = vmatprep.subr.mxu0 0.0
  %2622 = vmatpush1.msra.mxu0 0.0
  %2623 = vmatprep.subr.mxu0 0.0
  %2624 = vmatpush1.msra.mxu0 %v2588
  %2625 = vmatprep.subr.mxu0 0.0
  %2626 = vmatpush1.msra.mxu0 %v2587
  %2627 = vmatprep.subr.mxu0 0.0
  %2628 = vmatpush1.msra.mxu0 %v2586
  %2629 = vmatprep.subr.mxu0 0.0
  %2630 = vmatpush1.msra.mxu0 %v2585
  %2631 = vmatprep.subr.mxu0 0.0
  %2632 = vmatpush2.msra.mxu0 0.0
  %2633 = vmatprep.subr.mxu0 0.0
  %2634 = vmatpush2.msra.mxu0 0.0
  %2635 = vmatprep.subr.mxu0 0.0
  %2636 = vmatpush2.msra.mxu0 0.0
  %2637 = vmatprep.subr.mxu0 0.0
  %2638 = vmatpush2.msra.mxu0 0.0
  %2639 = vmatprep.subr.mxu0 0.0
  %2640 = vmatpush2.msra.mxu0 0.0
  %2641 = vmatprep.subr.mxu0 0.0
  %2642 = vmatpush2.msra.mxu0 0.0
  %2643 = vmatprep.subr.mxu0 0.0
  %2644 = vmatpush2.msra.mxu0 0.0
  %2645 = vmatprep.subr.mxu0 0.0
  %2646 = vmatpush2.msra.mxu0 0.0
  %2647 = vmatprep.subr.mxu0 0.0
  %2648 = vmatpush2.msra.mxu0 0.0
  %2649 = vmatprep.subr.mxu0 0.0
  %2650 = vmatpush2.msra.mxu0 0.0
  %2651 = vmatprep.subr.mxu0 0.0
  %2652 = vmatpush2.msra.mxu0 0.0
  %2653 = vmatprep.subr.mxu0 0.0
  %2654 = vmatpush2.msra.mxu0 0.0
  %2655 = vmatprep.subr.mxu0 0.0
  %2656 = vmatpush2.msra.mxu0 0.0
  %2657 = vmatprep.subr.mxu0 0.0
  %2658 = vmatpush2.msra.mxu0 0.0
  %2659 = vmatprep.subr.mxu0 0.0
  %2660 = vmatpush2.msra.mxu0 0.0
  %2661 = vmatprep.subr.mxu0 0.0
  %2662 = vmatpush2.msra.mxu0 0.0
  %2663 = vmatprep.mubr.f32.mxu0 0.0
  %2664 = vmatmul.mubr.f32.gmra.mxu0 %v1251
  %v2665 = vpop.f32.mrf.mxu0
  %v2666 = vadd.f32 0.0, %v2665
  %v2667 = vpop.f32.mrf.mxu0
  %2668 = vmatprep.mubr.f32.mxu0 0.0
  %2669 = vmatmul.mubr.f32.gmra.mxu0 %v1254
  %v2670 = vpop.f32.mrf.mxu0
  %v2671 = vadd.f32 0.0, %v2670
  %v2672 = vpop.f32.mrf.mxu0
  %2673 = vmatprep.mubr.f32.mxu0 0.0
  %2674 = vmatmul.mubr.f32.gmra.mxu0 %v1257
  %v2675 = vpop.f32.mrf.mxu0
  %v2676 = vadd.f32 0.0, %v2675
  %v2677 = vpop.f32.mrf.mxu0
  %2678 = vmatprep.mubr.f32.mxu0 0.0
  %2679 = vmatmul.mubr.f32.gmra.mxu0 %v1260
  %v2680 = vpop.f32.mrf.mxu0
  %v2681 = vadd.f32 0.0, %v2680
  %v2682 = vpop.f32.mrf.mxu0
  %2683 = vmatprep.mubr.f32.mxu0 0.0
  %2684 = vmatmul.mubr.f32.gmra.mxu0 %v1263
  %v2685 = vpop.f32.mrf.mxu0
  %v2686 = vadd.f32 0.0, %v2685
  %v2687 = vpop.f32.mrf.mxu0
  %2688 = vmatprep.mubr.f32.mxu0 0.0
  %2689 = vmatmul.mubr.f32.gmra.mxu0 %v1266
  %v2690 = vpop.f32.mrf.mxu0
  %v2691 = vadd.f32 0.0, %v2690
  %v2692 = vpop.f32.mrf.mxu0
  %2693 = vmatprep.mubr.f32.mxu0 0.0
  %2694 = vmatmul.mubr.f32.gmra.mxu0 %v1269
  %v2695 = vpop.f32.mrf.mxu0
  %v2696 = vadd.f32 0.0, %v2695
  %v2697 = vpop.f32.mrf.mxu0
  %2698 = vmatprep.mubr.f32.mxu0 0.0
  %2699 = vmatmul.mubr.f32.gmra.mxu0 %v1272
  %v2700 = vpop.f32.mrf.mxu0
  %v2701 = vadd.f32 0.0, %v2700
  %v2702 = vpop.f32.mrf.mxu0
  %2703 = vdwg.mxu0
  %2704 = vmatprep.subr.mxu0 0.0
  %2705 = vmatpush1.msra.mxu0 0.0
  %2706 = vmatprep.subr.mxu0 0.0
  %2707 = vmatpush1.msra.mxu0 0.0
  %2708 = vmatprep.subr.mxu0 0.0
  %2709 = vmatpush1.msra.mxu0 0.0
  %2710 = vmatprep.subr.mxu0 0.0
  %2711 = vmatpush1.msra.mxu0 0.0
  %2712 = vmatprep.subr.mxu0 0.0
  %2713 = vmatpush1.msra.mxu0 0.0
  %2714 = vmatprep.subr.mxu0 0.0
  %2715 = vmatpush1.msra.mxu0 0.0
  %2716 = vmatprep.subr.mxu0 0.0
  %2717 = vmatpush1.msra.mxu0 0.0
  %2718 = vmatprep.subr.mxu0 0.0
  %2719 = vmatpush1.msra.mxu0 0.0
  %2720 = vmatprep.subr.mxu0 0.0
  %2721 = vmatpush1.msra.mxu0 0.0
  %2722 = vmatprep.subr.mxu0 0.0
  %2723 = vmatpush1.msra.mxu0 0.0
  %2724 = vmatprep.subr.mxu0 0.0
  %2725 = vmatpush1.msra.mxu0 0.0
  %2726 = vmatprep.subr.mxu0 0.0
  %2727 = vmatpush1.msra.mxu0 0.0
  %2728 = vmatprep.subr.mxu0 0.0
  %2729 = vmatpush1.msra.mxu0 %v2588
  %2730 = vmatprep.subr.mxu0 0.0
  %2731 = vmatpush1.msra.mxu0 %v2587
  %2732 = vmatprep.subr.mxu0 0.0
  %2733 = vmatpush1.msra.mxu0 %v2586
  %2734 = vmatprep.subr.mxu0 0.0
  %2735 = vmatpush1.msra.mxu0 %v2585
  %2736 = vmatprep.subr.mxu0 0.0
  %2737 = vmatpush2.msra.mxu0 0.0
  %2738 = vmatprep.subr.mxu0 0.0
  %2739 = vmatpush2.msra.mxu0 0.0
  %2740 = vmatprep.subr.mxu0 0.0
  %2741 = vmatpush2.msra.mxu0 0.0
  %2742 = vmatprep.subr.mxu0 0.0
  %2743 = vmatpush2.msra.mxu0 0.0
  %2744 = vmatprep.subr.mxu0 0.0
  %2745 = vmatpush2.msra.mxu0 0.0
  %2746 = vmatprep.subr.mxu0 0.0
  %2747 = vmatpush2.msra.mxu0 0.0
  %2748 = vmatprep.subr.mxu0 0.0
  %2749 = vmatpush2.msra.mxu0 0.0
  %2750 = vmatprep.subr.mxu0 0.0
  %2751 = vmatpush2.msra.mxu0 0.0
  %2752 = vmatprep.subr.mxu0 0.0
  %2753 = vmatpush2.msra.mxu0 0.0
  %2754 = vmatprep.subr.mxu0 0.0
  %2755 = vmatpush2.msra.mxu0 0.0
  %2756 = vmatprep.subr.mxu0 0.0
  %2757 = vmatpush2.msra.mxu0 0.0
  %2758 = vmatprep.subr.mxu0 0.0
  %2759 = vmatpush2.msra.mxu0 0.0
  %2760 = vmatprep.subr.mxu0 0.0
  %2761 = vmatpush2.msra.mxu0 0.0
  %2762 = vmatprep.subr.mxu0 0.0
  %2763 = vmatpush2.msra.mxu0 0.0
  %2764 = vmatprep.subr.mxu0 0.0
  %2765 = vmatpush2.msra.mxu0 0.0
  %2766 = vmatprep.subr.mxu0 0.0
  %2767 = vmatpush2.msra.mxu0 0.0
  %2768 = vmatprep.mubr.f32.mxu0 0.0
  %2769 = vmatmul.mubr.f32.gmra.mxu0 %v1380
  %v2770 = vpop.f32.mrf.mxu0
  %v2771 = vadd.f32 0.0, %v2770
  %v2772 = vpop.f32.mrf.mxu0
  %2773 = vmatprep.mubr.f32.mxu0 0.0
  %2774 = vmatmul.mubr.f32.gmra.mxu0 %v1383
  %v2775 = vpop.f32.mrf.mxu0
  %v2776 = vadd.f32 0.0, %v2775
  %v2777 = vpop.f32.mrf.mxu0
  %2778 = vmatprep.mubr.f32.mxu0 0.0
  %2779 = vmatmul.mubr.f32.gmra.mxu0 %v1386
  %v2780 = vpop.f32.mrf.mxu0
  %v2781 = vadd.f32 0.0, %v2780
  %v2782 = vpop.f32.mrf.mxu0
  %2783 = vmatprep.mubr.f32.mxu0 0.0
  %2784 = vmatmul.mubr.f32.gmra.mxu0 %v1389
  %v2785 = vpop.f32.mrf.mxu0
  %v2786 = vadd.f32 0.0, %v2785
  %v2787 = vpop.f32.mrf.mxu0
  %2788 = vmatprep.mubr.f32.mxu0 0.0
  %2789 = vmatmul.mubr.f32.gmra.mxu0 %v1392
  %v2790 = vpop.f32.mrf.mxu0
  %v2791 = vadd.f32 0.0, %v2790
  %v2792 = vpop.f32.mrf.mxu0
  %2793 = vmatprep.mubr.f32.mxu0 0.0
  %2794 = vmatmul.mubr.f32.gmra.mxu0 %v1395
  %v2795 = vpop.f32.mrf.mxu0
  %v2796 = vadd.f32 0.0, %v2795
  %v2797 = vpop.f32.mrf.mxu0
  %2798 = vmatprep.mubr.f32.mxu0 0.0
  %2799 = vmatmul.mubr.f32.gmra.mxu0 %v1398
  %v2800 = vpop.f32.mrf.mxu0
  %v2801 = vadd.f32 0.0, %v2800
  %v2802 = vpop.f32.mrf.mxu0
  %2803 = vmatprep.mubr.f32.mxu0 0.0
  %2804 = vmatmul.mubr.f32.gmra.mxu0 %v1401
  %v2805 = vpop.f32.mrf.mxu0
  %v2806 = vadd.f32 0.0, %v2805
  %v2807 = vpop.f32.mrf.mxu0
  %2808 = vdwg.mxu0
  %v2809 = vsub.f32 %v2771, %v2666
  %v2810 = vsub.f32 %v2776, %v2671
  %v2811 = vsub.f32 %v2781, %v2676
  %v2812 = vsub.f32 %v2786, %v2681
  %v2813 = vsub.f32 %v2791, %v2686
  %v2814 = vsub.f32 %v2796, %v2691
  %v2815 = vsub.f32 %v2801, %v2696
  %v2816 = vsub.f32 %v2806, %v2701
  %v2817 = vsub.f32 %v2666, %v2771
  %v2818 = vsub.f32 %v2671, %v2776
  %v2819 = vsub.f32 %v2676, %v2781
  %v2820 = vsub.f32 %v2681, %v2786
  %v2821 = vsub.f32 %v2686, %v2791
  %v2822 = vsub.f32 %v2691, %v2796
  %v2823 = vsub.f32 %v2696, %v2801
  %v2824 = vsub.f32 %v2701, %v2806
  %2841 = vrot.lane.b32.xlu0 %v2809, 16
  %v2842 = vpop.permute.xlu0 %2841
  %2843 = vrot.lane.b32.xlu0 %v2810, 16
  %v2844 = vpop.permute.xlu0 %2843
  %2845 = vrot.lane.b32.xlu0 %v2811, 16
  %v2846 = vpop.permute.xlu0 %2845
  %2847 = vrot.lane.b32.xlu0 %v2812, 16
  %v2848 = vpop.permute.xlu0 %2847
  %2849 = vrot.lane.b32.xlu0 %v2813, 16
  %v2850 = vpop.permute.xlu0 %2849
  %2851 = vrot.lane.b32.xlu0 %v2814, 16
  %v2852 = vpop.permute.xlu0 %2851
  %2853 = vrot.lane.b32.xlu0 %v2815, 16
  %v2854 = vpop.permute.xlu0 %2853
  %2855 = vrot.lane.b32.xlu0 %v2816, 16
  %v2856 = vpop.permute.xlu0 %2855
  %2857 = vrot.lane.b32.xlu0 %v2817, 16
  %v2858 = vpop.permute.xlu0 %2857
  %2859 = vrot.lane.b32.xlu0 %v2818, 16
  %v2860 = vpop.permute.xlu0 %2859
  %2861 = vrot.lane.b32.xlu0 %v2819, 16
  %v2862 = vpop.permute.xlu0 %2861
  %2863 = vrot.lane.b32.xlu0 %v2820, 16
  %v2864 = vpop.permute.xlu0 %2863
  %2865 = vrot.lane.b32.xlu0 %v2821, 16
  %v2866 = vpop.permute.xlu0 %2865
  %2867 = vrot.lane.b32.xlu0 %v2822, 16
  %v2868 = vpop.permute.xlu0 %2867
  %2869 = vrot.lane.b32.xlu0 %v2823, 16
  %v2870 = vpop.permute.xlu0 %2869
  %2871 = vrot.lane.b32.xlu0 %v2824, 16
  %v2872 = vpop.permute.xlu0 %2871
  %v2889 = vsel %vm333, %v2585, %v1542
  %v2890 = vsel %vm333, %v2586, %v1542
  %v2891 = vsel %vm333, %v2587, %v1542
  %v2892 = vsel %vm333, %v2588, %v1542
  %v2893 = vsel %vm333, %v2666, %v2842
  %v2894 = vsel %vm333, %v2671, %v2844
  %v2895 = vsel %vm333, %v2676, %v2846
  %v2896 = vsel %vm333, %v2681, %v2848
  %v2897 = vsel %vm333, %v2686, %v2850
  %v2898 = vsel %vm333, %v2691, %v2852
  %v2899 = vsel %vm333, %v2696, %v2854
  %v2900 = vsel %vm333, %v2701, %v2856
  %v2901 = vsel %vm333, %v2771, %v2858
  %v2902 = vsel %vm333, %v2776, %v2860
  %v2903 = vsel %vm333, %v2781, %v2862
  %v2904 = vsel %vm333, %v2786, %v2864
  %v2905 = vsel %vm333, %v2791, %v2866
  %v2906 = vsel %vm333, %v2796, %v2868
  %v2907 = vsel %vm333, %v2801, %v2870
  %v2908 = vsel %vm333, %v2806, %v2872
  %v2909 = vlaneseq
  %v2910 = vshrl.u32 %v2909, 7
  %v2911 = vsub.s32 0, %v2910
  %v2912 = vrot.slane %v2593, %v2911
  %v2914 = vsel %vm656, %v2889, 0
  %v2917 = vsel %vm656, %v2890, 0
  %v2920 = vsel %vm656, %v2891, 0
  %v2923 = vsel %vm656, %v2892, 0
  %v2926 = vsel %vm656, %v2893, 0
  %v2929 = vsel %vm656, %v2894, 0
  %v2932 = vsel %vm656, %v2895, 0
  %v2935 = vsel %vm656, %v2896, 0
  %v2938 = vsel %vm656, %v2897, 0
  %v2941 = vsel %vm656, %v2898, 0
  %v2944 = vsel %vm656, %v2899, 0
  %v2947 = vsel %vm656, %v2900, 0
  %v2950 = vsel %vm656, %v2901, 0
  %v2953 = vsel %vm656, %v2902, 0
  %v2956 = vsel %vm656, %v2903, 0
  %v2959 = vsel %vm656, %v2904, 0
  %v2962 = vsel %vm656, %v2905, 0
  %v2965 = vsel %vm656, %v2906, 0
  %v2968 = vsel %vm656, %v2907, 0
  %v2971 = vsel %vm656, %v2908, 0
  %2973 = vmatprep.subr.mxu0 0.0
  %2974 = vmatpush1.msra.mxu0 0.0
  %2975 = vmatprep.subr.mxu0 0.0
  %2976 = vmatpush1.msra.mxu0 0.0
  %2977 = vmatprep.subr.mxu0 0.0
  %2978 = vmatpush1.msra.mxu0 0.0
  %2979 = vmatprep.subr.mxu0 0.0
  %2980 = vmatpush1.msra.mxu0 0.0
  %2981 = vmatprep.subr.mxu0 0.0
  %2982 = vmatpush1.msra.mxu0 0.0
  %2983 = vmatprep.subr.mxu0 0.0
  %2984 = vmatpush1.msra.mxu0 0.0
  %2985 = vmatprep.subr.mxu0 0.0
  %2986 = vmatpush1.msra.mxu0 0.0
  %2987 = vmatprep.subr.mxu0 0.0
  %2988 = vmatpush1.msra.mxu0 0.0
  %2989 = vmatprep.subr.mxu0 0.0
  %2990 = vmatpush1.msra.mxu0 0.0
  %2991 = vmatprep.subr.mxu0 0.0
  %2992 = vmatpush1.msra.mxu0 0.0
  %2993 = vmatprep.subr.mxu0 0.0
  %2994 = vmatpush1.msra.mxu0 0.0
  %2995 = vmatprep.subr.mxu0 0.0
  %2996 = vmatpush1.msra.mxu0 0.0
  %2997 = vmatprep.subr.mxu0 0.0
  %2998 = vmatpush1.msra.mxu0 %v2592
  %2999 = vmatprep.subr.mxu0 0.0
  %3000 = vmatpush1.msra.mxu0 %v2591
  %3001 = vmatprep.subr.mxu0 0.0
  %3002 = vmatpush1.msra.mxu0 %v2590
  %3003 = vmatprep.subr.mxu0 0.0
  %3004 = vmatpush1.msra.mxu0 %v2589
  %3005 = vmatprep.subr.mxu0 0.0
  %3006 = vmatpush2.msra.mxu0 0.0
  %3007 = vmatprep.subr.mxu0 0.0
  %3008 = vmatpush2.msra.mxu0 0.0
  %3009 = vmatprep.subr.mxu0 0.0
  %3010 = vmatpush2.msra.mxu0 0.0
  %3011 = vmatprep.subr.mxu0 0.0
  %3012 = vmatpush2.msra.mxu0 0.0
  %3013 = vmatprep.subr.mxu0 0.0
  %3014 = vmatpush2.msra.mxu0 0.0
  %3015 = vmatprep.subr.mxu0 0.0
  %3016 = vmatpush2.msra.mxu0 0.0
  %3017 = vmatprep.subr.mxu0 0.0
  %3018 = vmatpush2.msra.mxu0 0.0
  %3019 = vmatprep.subr.mxu0 0.0
  %3020 = vmatpush2.msra.mxu0 0.0
  %3021 = vmatprep.subr.mxu0 0.0
  %3022 = vmatpush2.msra.mxu0 0.0
  %3023 = vmatprep.subr.mxu0 0.0
  %3024 = vmatpush2.msra.mxu0 0.0
  %3025 = vmatprep.subr.mxu0 0.0
  %3026 = vmatpush2.msra.mxu0 0.0
  %3027 = vmatprep.subr.mxu0 0.0
  %3028 = vmatpush2.msra.mxu0 0.0
  %3029 = vmatprep.subr.mxu0 0.0
  %3030 = vmatpush2.msra.mxu0 0.0
  %3031 = vmatprep.subr.mxu0 0.0
  %3032 = vmatpush2.msra.mxu0 0.0
  %3033 = vmatprep.subr.mxu0 0.0
  %3034 = vmatpush2.msra.mxu0 0.0
  %3035 = vmatprep.subr.mxu0 0.0
  %3036 = vmatpush2.msra.mxu0 0.0
  %3037 = vmatprep.mubr.f32.mxu0 0.0
  %3038 = vmatmul.mubr.f32.gmra.mxu0 %v2914
  %v3039 = vpop.f32.mrf.mxu0
  %v3040 = vadd.f32 %v2912, %v3039
  %v3041 = vpop.f32.mrf.mxu0
  %3042 = vmatprep.mubr.f32.mxu0 0.0
  %3043 = vmatmul.mubr.f32.gmra.mxu0 %v2917
  %v3044 = vpop.f32.mrf.mxu0
  %v3045 = vadd.f32 %v2912, %v3044
  %v3046 = vpop.f32.mrf.mxu0
  %3047 = vmatprep.mubr.f32.mxu0 0.0
  %3048 = vmatmul.mubr.f32.gmra.mxu0 %v2920
  %v3049 = vpop.f32.mrf.mxu0
  %v3050 = vadd.f32 %v2912, %v3049
  %v3051 = vpop.f32.mrf.mxu0
  %3052 = vmatprep.mubr.f32.mxu0 0.0
  %3053 = vmatmul.mubr.f32.gmra.mxu0 %v2923
  %v3054 = vpop.f32.mrf.mxu0
  %v3055 = vadd.f32 %v2912, %v3054
  %v3056 = vpop.f32.mrf.mxu0
  %3057 = vmatprep.mubr.f32.mxu0 0.0
  %3058 = vmatmul.mubr.f32.gmra.mxu0 %v2926
  %v3059 = vpop.f32.mrf.mxu0
  %v3060 = vadd.f32 %v2912, %v3059
  %v3061 = vpop.f32.mrf.mxu0
  %3062 = vmatprep.mubr.f32.mxu0 0.0
  %3063 = vmatmul.mubr.f32.gmra.mxu0 %v2929
  %v3064 = vpop.f32.mrf.mxu0
  %v3065 = vadd.f32 %v2912, %v3064
  %v3066 = vpop.f32.mrf.mxu0
  %3067 = vmatprep.mubr.f32.mxu0 0.0
  %3068 = vmatmul.mubr.f32.gmra.mxu0 %v2932
  %v3069 = vpop.f32.mrf.mxu0
  %v3070 = vadd.f32 %v2912, %v3069
  %v3071 = vpop.f32.mrf.mxu0
  %3072 = vmatprep.mubr.f32.mxu0 0.0
  %3073 = vmatmul.mubr.f32.gmra.mxu0 %v2935
  %v3074 = vpop.f32.mrf.mxu0
  %v3075 = vadd.f32 %v2912, %v3074
  %v3076 = vpop.f32.mrf.mxu0
  %3077 = vmatprep.mubr.f32.mxu0 0.0
  %3078 = vmatmul.mubr.f32.gmra.mxu0 %v2938
  %v3079 = vpop.f32.mrf.mxu0
  %v3080 = vadd.f32 %v2912, %v3079
  %v3081 = vpop.f32.mrf.mxu0
  %3082 = vmatprep.mubr.f32.mxu0 0.0
  %3083 = vmatmul.mubr.f32.gmra.mxu0 %v2941
  %v3084 = vpop.f32.mrf.mxu0
  %v3085 = vadd.f32 %v2912, %v3084
  %v3086 = vpop.f32.mrf.mxu0
  %3087 = vmatprep.mubr.f32.mxu0 0.0
  %3088 = vmatmul.mubr.f32.gmra.mxu0 %v2944
  %v3089 = vpop.f32.mrf.mxu0
  %v3090 = vadd.f32 %v2912, %v3089
  %v3091 = vpop.f32.mrf.mxu0
  %3092 = vmatprep.mubr.f32.mxu0 0.0
  %3093 = vmatmul.mubr.f32.gmra.mxu0 %v2947
  %v3094 = vpop.f32.mrf.mxu0
  %v3095 = vadd.f32 %v2912, %v3094
  %v3096 = vpop.f32.mrf.mxu0
  %3097 = vmatprep.mubr.f32.mxu0 0.0
  %3098 = vmatmul.mubr.f32.gmra.mxu0 %v2950
  %v3099 = vpop.f32.mrf.mxu0
  %v3100 = vadd.f32 %v2912, %v3099
  %v3101 = vpop.f32.mrf.mxu0
  %3102 = vmatprep.mubr.f32.mxu0 0.0
  %3103 = vmatmul.mubr.f32.gmra.mxu0 %v2953
  %v3104 = vpop.f32.mrf.mxu0
  %v3105 = vadd.f32 %v2912, %v3104
  %v3106 = vpop.f32.mrf.mxu0
  %3107 = vmatprep.mubr.f32.mxu0 0.0
  %3108 = vmatmul.mubr.f32.gmra.mxu0 %v2956
  %v3109 = vpop.f32.mrf.mxu0
  %v3110 = vadd.f32 %v2912, %v3109
  %v3111 = vpop.f32.mrf.mxu0
  %3112 = vmatprep.mubr.f32.mxu0 0.0
  %3113 = vmatmul.mubr.f32.gmra.mxu0 %v2959
  %v3114 = vpop.f32.mrf.mxu0
  %v3115 = vadd.f32 %v2912, %v3114
  %v3116 = vpop.f32.mrf.mxu0
  %3117 = vmatprep.mubr.f32.mxu0 0.0
  %3118 = vmatmul.mubr.f32.gmra.mxu0 %v2962
  %v3119 = vpop.f32.mrf.mxu0
  %v3120 = vadd.f32 %v2912, %v3119
  %v3121 = vpop.f32.mrf.mxu0
  %3122 = vmatprep.mubr.f32.mxu0 0.0
  %3123 = vmatmul.mubr.f32.gmra.mxu0 %v2965
  %v3124 = vpop.f32.mrf.mxu0
  %v3125 = vadd.f32 %v2912, %v3124
  %v3126 = vpop.f32.mrf.mxu0
  %3127 = vmatprep.mubr.f32.mxu0 0.0
  %3128 = vmatmul.mubr.f32.gmra.mxu0 %v2968
  %v3129 = vpop.f32.mrf.mxu0
  %v3130 = vadd.f32 %v2912, %v3129
  %v3131 = vpop.f32.mrf.mxu0
  %3132 = vmatprep.mubr.f32.mxu0 0.0
  %3133 = vmatmul.mubr.f32.gmra.mxu0 %v2971
  %v3134 = vpop.f32.mrf.mxu0
  %v3135 = vadd.f32 %v2912, %v3134
  %v3136 = vpop.f32.mrf.mxu0
  %3137 = vdwg.mxu0
  %vm3138 = vcmp.ge.f32.partialorder %v3040, 0.0
  %vm3139 = vcmp.ge.f32.partialorder %v3045, 0.0
  %vm3140 = vcmp.ge.f32.partialorder %v3050, 0.0
  %vm3141 = vcmp.ge.f32.partialorder %v3055, 0.0
  %vm3142 = vcmp.ge.f32.partialorder %v3060, 0.0
  %vm3143 = vcmp.ge.f32.partialorder %v3065, 0.0
  %vm3144 = vcmp.ge.f32.partialorder %v3070, 0.0
  %vm3145 = vcmp.ge.f32.partialorder %v3075, 0.0
  %vm3146 = vcmp.ge.f32.partialorder %v3080, 0.0
  %vm3147 = vcmp.ge.f32.partialorder %v3085, 0.0
  %vm3148 = vcmp.ge.f32.partialorder %v3090, 0.0
  %vm3149 = vcmp.ge.f32.partialorder %v3095, 0.0
  %vm3150 = vcmp.ge.f32.partialorder %v3100, 0.0
  %vm3151 = vcmp.ge.f32.partialorder %v3105, 0.0
  %vm3152 = vcmp.ge.f32.partialorder %v3110, 0.0
  %vm3153 = vcmp.ge.f32.partialorder %v3115, 0.0
  %vm3154 = vcmp.ge.f32.partialorder %v3120, 0.0
  %vm3155 = vcmp.ge.f32.partialorder %v3125, 0.0
  %vm3156 = vcmp.ge.f32.partialorder %v3130, 0.0
  %vm3157 = vcmp.ge.f32.partialorder %v3135, 0.0
  %v3158 = vmul.f32 %v3040, 0.01
  %v3159 = vmul.f32 %v3045, 0.01
  %v3160 = vmul.f32 %v3050, 0.01
  %v3161 = vmul.f32 %v3055, 0.01
  %v3162 = vmul.f32 %v3060, 0.01
  %v3163 = vmul.f32 %v3065, 0.01
  %v3164 = vmul.f32 %v3070, 0.01
  %v3165 = vmul.f32 %v3075, 0.01
  %v3166 = vmul.f32 %v3080, 0.01
  %v3167 = vmul.f32 %v3085, 0.01
  %v3168 = vmul.f32 %v3090, 0.01
  %v3169 = vmul.f32 %v3095, 0.01
  %v3170 = vmul.f32 %v3100, 0.01
  %v3171 = vmul.f32 %v3105, 0.01
  %v3172 = vmul.f32 %v3110, 0.01
  %v3173 = vmul.f32 %v3115, 0.01
  %v3174 = vmul.f32 %v3120, 0.01
  %v3175 = vmul.f32 %v3125, 0.01
  %v3176 = vmul.f32 %v3130, 0.01
  %v3177 = vmul.f32 %v3135, 0.01
  %v3178 = vsel %vm3138, %v3040, %v3158
  %v3179 = vsel %vm3139, %v3045, %v3159
  %v3180 = vsel %vm3140, %v3050, %v3160
  %v3181 = vsel %vm3141, %v3055, %v3161
  %v3182 = vsel %vm3142, %v3060, %v3162
  %v3183 = vsel %vm3143, %v3065, %v3163
  %v3184 = vsel %vm3144, %v3070, %v3164
  %v3185 = vsel %vm3145, %v3075, %v3165
  %v3186 = vsel %vm3146, %v3080, %v3166
  %v3187 = vsel %vm3147, %v3085, %v3167
  %v3188 = vsel %vm3148, %v3090, %v3168
  %v3189 = vsel %vm3149, %v3095, %v3169
  %v3190 = vsel %vm3150, %v3100, %v3170
  %v3191 = vsel %vm3151, %v3105, %v3171
  %v3192 = vsel %vm3152, %v3110, %v3172
  %v3193 = vsel %vm3153, %v3115, %v3173
  %v3194 = vsel %vm3154, %v3120, %v3174
  %v3195 = vsel %vm3155, %v3125, %v3175
  %v3196 = vsel %vm3156, %v3130, %v3176
  %v3197 = vsel %vm3157, %v3135, %v3177
  %v3198 = vlaneseq
  %v3199 = vshrl.u32 %v3198, 7
  %v3200 = vsub.s32 0, %v3199
  %v3201 = vrot.slane %v2598, %v3200
  %v3203 = vsel %vm656, %v3178, 0
  %v3206 = vsel %vm656, %v3179, 0
  %v3209 = vsel %vm656, %v3180, 0
  %v3212 = vsel %vm656, %v3181, 0
  %v3215 = vsel %vm656, %v3182, 0
  %v3218 = vsel %vm656, %v3183, 0
  %v3221 = vsel %vm656, %v3184, 0
  %v3224 = vsel %vm656, %v3185, 0
  %v3227 = vsel %vm656, %v3186, 0
  %v3230 = vsel %vm656, %v3187, 0
  %v3233 = vsel %vm656, %v3188, 0
  %v3236 = vsel %vm656, %v3189, 0
  %v3239 = vsel %vm656, %v3190, 0
  %v3242 = vsel %vm656, %v3191, 0
  %v3245 = vsel %vm656, %v3192, 0
  %v3248 = vsel %vm656, %v3193, 0
  %v3251 = vsel %vm656, %v3194, 0
  %v3254 = vsel %vm656, %v3195, 0
  %v3257 = vsel %vm656, %v3196, 0
  %v3260 = vsel %vm656, %v3197, 0
  %3262 = vmatprep.subr.mxu0 0.0
  %3263 = vmatpush1.msra.mxu0 0.0
  %3264 = vmatprep.subr.mxu0 0.0
  %3265 = vmatpush1.msra.mxu0 0.0
  %3266 = vmatprep.subr.mxu0 0.0
  %3267 = vmatpush1.msra.mxu0 0.0
  %3268 = vmatprep.subr.mxu0 0.0
  %3269 = vmatpush1.msra.mxu0 0.0
  %3270 = vmatprep.subr.mxu0 0.0
  %3271 = vmatpush1.msra.mxu0 0.0
  %3272 = vmatprep.subr.mxu0 0.0
  %3273 = vmatpush1.msra.mxu0 0.0
  %3274 = vmatprep.subr.mxu0 0.0
  %3275 = vmatpush1.msra.mxu0 0.0
  %3276 = vmatprep.subr.mxu0 0.0
  %3277 = vmatpush1.msra.mxu0 0.0
  %3278 = vmatprep.subr.mxu0 0.0
  %3279 = vmatpush1.msra.mxu0 0.0
  %3280 = vmatprep.subr.mxu0 0.0
  %3281 = vmatpush1.msra.mxu0 0.0
  %3282 = vmatprep.subr.mxu0 0.0
  %3283 = vmatpush1.msra.mxu0 0.0
  %3284 = vmatprep.subr.mxu0 0.0
  %3285 = vmatpush1.msra.mxu0 0.0
  %3286 = vmatprep.subr.mxu0 0.0
  %3287 = vmatpush1.msra.mxu0 %v2597
  %3288 = vmatprep.subr.mxu0 0.0
  %3289 = vmatpush1.msra.mxu0 %v2596
  %3290 = vmatprep.subr.mxu0 0.0
  %3291 = vmatpush1.msra.mxu0 %v2595
  %3292 = vmatprep.subr.mxu0 0.0
  %3293 = vmatpush1.msra.mxu0 %v2594
  %3294 = vmatprep.subr.mxu0 0.0
  %3295 = vmatpush2.msra.mxu0 0.0
  %3296 = vmatprep.subr.mxu0 0.0
  %3297 = vmatpush2.msra.mxu0 0.0
  %3298 = vmatprep.subr.mxu0 0.0
  %3299 = vmatpush2.msra.mxu0 0.0
  %3300 = vmatprep.subr.mxu0 0.0
  %3301 = vmatpush2.msra.mxu0 0.0
  %3302 = vmatprep.subr.mxu0 0.0
  %3303 = vmatpush2.msra.mxu0 0.0
  %3304 = vmatprep.subr.mxu0 0.0
  %3305 = vmatpush2.msra.mxu0 0.0
  %3306 = vmatprep.subr.mxu0 0.0
  %3307 = vmatpush2.msra.mxu0 0.0
  %3308 = vmatprep.subr.mxu0 0.0
  %3309 = vmatpush2.msra.mxu0 0.0
  %3310 = vmatprep.subr.mxu0 0.0
  %3311 = vmatpush2.msra.mxu0 0.0
  %3312 = vmatprep.subr.mxu0 0.0
  %3313 = vmatpush2.msra.mxu0 0.0
  %3314 = vmatprep.subr.mxu0 0.0
  %3315 = vmatpush2.msra.mxu0 0.0
  %3316 = vmatprep.subr.mxu0 0.0
  %3317 = vmatpush2.msra.mxu0 0.0
  %3318 = vmatprep.subr.mxu0 0.0
  %3319 = vmatpush2.msra.mxu0 0.0
  %3320 = vmatprep.subr.mxu0 0.0
  %3321 = vmatpush2.msra.mxu0 0.0
  %3322 = vmatprep.subr.mxu0 0.0
  %3323 = vmatpush2.msra.mxu0 0.0
  %3324 = vmatprep.subr.mxu0 0.0
  %3325 = vmatpush2.msra.mxu0 0.0
  %3326 = vmatprep.mubr.f32.mxu0 0.0
  %3327 = vmatmul.mubr.f32.gmra.mxu0 %v3203
  %v3328 = vpop.f32.mrf.mxu0
  %v3329 = vadd.f32 %v3201, %v3328
  %v3330 = vpop.f32.mrf.mxu0
  %3331 = vmatprep.mubr.f32.mxu0 0.0
  %3332 = vmatmul.mubr.f32.gmra.mxu0 %v3206
  %v3333 = vpop.f32.mrf.mxu0
  %v3334 = vadd.f32 %v3201, %v3333
  %v3335 = vpop.f32.mrf.mxu0
  %3336 = vmatprep.mubr.f32.mxu0 0.0
  %3337 = vmatmul.mubr.f32.gmra.mxu0 %v3209
  %v3338 = vpop.f32.mrf.mxu0
  %v3339 = vadd.f32 %v3201, %v3338
  %v3340 = vpop.f32.mrf.mxu0
  %3341 = vmatprep.mubr.f32.mxu0 0.0
  %3342 = vmatmul.mubr.f32.gmra.mxu0 %v3212
  %v3343 = vpop.f32.mrf.mxu0
  %v3344 = vadd.f32 %v3201, %v3343
  %v3345 = vpop.f32.mrf.mxu0
  %3346 = vmatprep.mubr.f32.mxu0 0.0
  %3347 = vmatmul.mubr.f32.gmra.mxu0 %v3215
  %v3348 = vpop.f32.mrf.mxu0
  %v3349 = vadd.f32 %v3201, %v3348
  %v3350 = vpop.f32.mrf.mxu0
  %3351 = vmatprep.mubr.f32.mxu0 0.0
  %3352 = vmatmul.mubr.f32.gmra.mxu0 %v3218
  %v3353 = vpop.f32.mrf.mxu0
  %v3354 = vadd.f32 %v3201, %v3353
  %v3355 = vpop.f32.mrf.mxu0
  %3356 = vmatprep.mubr.f32.mxu0 0.0
  %3357 = vmatmul.mubr.f32.gmra.mxu0 %v3221
  %v3358 = vpop.f32.mrf.mxu0
  %v3359 = vadd.f32 %v3201, %v3358
  %v3360 = vpop.f32.mrf.mxu0
  %3361 = vmatprep.mubr.f32.mxu0 0.0
  %3362 = vmatmul.mubr.f32.gmra.mxu0 %v3224
  %v3363 = vpop.f32.mrf.mxu0
  %v3364 = vadd.f32 %v3201, %v3363
  %v3365 = vpop.f32.mrf.mxu0
  %3366 = vmatprep.mubr.f32.mxu0 0.0
  %3367 = vmatmul.mubr.f32.gmra.mxu0 %v3227
  %v3368 = vpop.f32.mrf.mxu0
  %v3369 = vadd.f32 %v3201, %v3368
  %v3370 = vpop.f32.mrf.mxu0
  %3371 = vmatprep.mubr.f32.mxu0 0.0
  %3372 = vmatmul.mubr.f32.gmra.mxu0 %v3230
  %v3373 = vpop.f32.mrf.mxu0
  %v3374 = vadd.f32 %v3201, %v3373
  %v3375 = vpop.f32.mrf.mxu0
  %3376 = vmatprep.mubr.f32.mxu0 0.0
  %3377 = vmatmul.mubr.f32.gmra.mxu0 %v3233
  %v3378 = vpop.f32.mrf.mxu0
  %v3379 = vadd.f32 %v3201, %v3378
  %v3380 = vpop.f32.mrf.mxu0
  %3381 = vmatprep.mubr.f32.mxu0 0.0
  %3382 = vmatmul.mubr.f32.gmra.mxu0 %v3236
  %v3383 = vpop.f32.mrf.mxu0
  %v3384 = vadd.f32 %v3201, %v3383
  %v3385 = vpop.f32.mrf.mxu0
  %3386 = vmatprep.mubr.f32.mxu0 0.0
  %3387 = vmatmul.mubr.f32.gmra.mxu0 %v3239
  %v3388 = vpop.f32.mrf.mxu0
  %v3389 = vadd.f32 %v3201, %v3388
  %v3390 = vpop.f32.mrf.mxu0
  %3391 = vmatprep.mubr.f32.mxu0 0.0
  %3392 = vmatmul.mubr.f32.gmra.mxu0 %v3242
  %v3393 = vpop.f32.mrf.mxu0
  %v3394 = vadd.f32 %v3201, %v3393
  %v3395 = vpop.f32.mrf.mxu0
  %3396 = vmatprep.mubr.f32.mxu0 0.0
  %3397 = vmatmul.mubr.f32.gmra.mxu0 %v3245
  %v3398 = vpop.f32.mrf.mxu0
  %v3399 = vadd.f32 %v3201, %v3398
  %v3400 = vpop.f32.mrf.mxu0
  %3401 = vmatprep.mubr.f32.mxu0 0.0
  %3402 = vmatmul.mubr.f32.gmra.mxu0 %v3248
  %v3403 = vpop.f32.mrf.mxu0
  %v3404 = vadd.f32 %v3201, %v3403
  %v3405 = vpop.f32.mrf.mxu0
  %3406 = vmatprep.mubr.f32.mxu0 0.0
  %3407 = vmatmul.mubr.f32.gmra.mxu0 %v3251
  %v3408 = vpop.f32.mrf.mxu0
  %v3409 = vadd.f32 %v3201, %v3408
  %v3410 = vpop.f32.mrf.mxu0
  %3411 = vmatprep.mubr.f32.mxu0 0.0
  %3412 = vmatmul.mubr.f32.gmra.mxu0 %v3254
  %v3413 = vpop.f32.mrf.mxu0
  %v3414 = vadd.f32 %v3201, %v3413
  %v3415 = vpop.f32.mrf.mxu0
  %3416 = vmatprep.mubr.f32.mxu0 0.0
  %3417 = vmatmul.mubr.f32.gmra.mxu0 %v3257
  %v3418 = vpop.f32.mrf.mxu0
  %v3419 = vadd.f32 %v3201, %v3418
  %v3420 = vpop.f32.mrf.mxu0
  %3421 = vmatprep.mubr.f32.mxu0 0.0
  %3422 = vmatmul.mubr.f32.gmra.mxu0 %v3260
  %v3423 = vpop.f32.mrf.mxu0
  %v3424 = vadd.f32 %v3201, %v3423
  %v3425 = vpop.f32.mrf.mxu0
  %3426 = vdwg.mxu0
  %vm3427 = vcmp.ge.f32.partialorder %v3329, 0.0
  %vm3428 = vcmp.ge.f32.partialorder %v3334, 0.0
  %vm3429 = vcmp.ge.f32.partialorder %v3339, 0.0
  %vm3430 = vcmp.ge.f32.partialorder %v3344, 0.0
  %vm3431 = vcmp.ge.f32.partialorder %v3349, 0.0
  %vm3432 = vcmp.ge.f32.partialorder %v3354, 0.0
  %vm3433 = vcmp.ge.f32.partialorder %v3359, 0.0
  %vm3434 = vcmp.ge.f32.partialorder %v3364, 0.0
  %vm3435 = vcmp.ge.f32.partialorder %v3369, 0.0
  %vm3436 = vcmp.ge.f32.partialorder %v3374, 0.0
  %vm3437 = vcmp.ge.f32.partialorder %v3379, 0.0
  %vm3438 = vcmp.ge.f32.partialorder %v3384, 0.0
  %vm3439 = vcmp.ge.f32.partialorder %v3389, 0.0
  %vm3440 = vcmp.ge.f32.partialorder %v3394, 0.0
  %vm3441 = vcmp.ge.f32.partialorder %v3399, 0.0
  %vm3442 = vcmp.ge.f32.partialorder %v3404, 0.0
  %vm3443 = vcmp.ge.f32.partialorder %v3409, 0.0
  %vm3444 = vcmp.ge.f32.partialorder %v3414, 0.0
  %vm3445 = vcmp.ge.f32.partialorder %v3419, 0.0
  %vm3446 = vcmp.ge.f32.partialorder %v3424, 0.0
  %v3447 = vmul.f32 %v3329, 0.01
  %v3448 = vmul.f32 %v3334, 0.01
  %v3449 = vmul.f32 %v3339, 0.01
  %v3450 = vmul.f32 %v3344, 0.01
  %v3451 = vmul.f32 %v3349, 0.01
  %v3452 = vmul.f32 %v3354, 0.01
  %v3453 = vmul.f32 %v3359, 0.01
  %v3454 = vmul.f32 %v3364, 0.01
  %v3455 = vmul.f32 %v3369, 0.01
  %v3456 = vmul.f32 %v3374, 0.01
  %v3457 = vmul.f32 %v3379, 0.01
  %v3458 = vmul.f32 %v3384, 0.01
  %v3459 = vmul.f32 %v3389, 0.01
  %v3460 = vmul.f32 %v3394, 0.01
  %v3461 = vmul.f32 %v3399, 0.01
  %v3462 = vmul.f32 %v3404, 0.01
  %v3463 = vmul.f32 %v3409, 0.01
  %v3464 = vmul.f32 %v3414, 0.01
  %v3465 = vmul.f32 %v3419, 0.01
  %v3466 = vmul.f32 %v3424, 0.01
  %v3467 = vsel %vm3427, %v3329, %v3447
  %v3468 = vsel %vm3428, %v3334, %v3448
  %v3469 = vsel %vm3429, %v3339, %v3449
  %v3470 = vsel %vm3430, %v3344, %v3450
  %v3471 = vsel %vm3431, %v3349, %v3451
  %v3472 = vsel %vm3432, %v3354, %v3452
  %v3473 = vsel %vm3433, %v3359, %v3453
  %v3474 = vsel %vm3434, %v3364, %v3454
  %v3475 = vsel %vm3435, %v3369, %v3455
  %v3476 = vsel %vm3436, %v3374, %v3456
  %v3477 = vsel %vm3437, %v3379, %v3457
  %v3478 = vsel %vm3438, %v3384, %v3458
  %v3479 = vsel %vm3439, %v3389, %v3459
  %v3480 = vsel %vm3440, %v3394, %v3460
  %v3481 = vsel %vm3441, %v3399, %v3461
  %v3482 = vsel %vm3442, %v3404, %v3462
  %v3483 = vsel %vm3443, %v3409, %v3463
  %v3484 = vsel %vm3444, %v3414, %v3464
  %v3485 = vsel %vm3445, %v3419, %v3465
  %v3486 = vsel %vm3446, %v3424, %v3466
  %v3487 = vmul.f32 %v2193, %v3471
  %v3488 = vmul.f32 %v2198, %v3472
  %v3489 = vmul.f32 %v2203, %v3473
  %v3490 = vmul.f32 %v2208, %v3474
  %v3491 = vmul.f32 %v2213, %v3475
  %v3492 = vmul.f32 %v2218, %v3476
  %v3493 = vmul.f32 %v2223, %v3477
  %v3494 = vmul.f32 %v2228, %v3478
  %v3495 = vsel %vm333, %v3487, %v2239
  %v3496 = vsel %vm333, %v3488, %v2241
  %v3497 = vsel %vm333, %v3489, %v2243
  %v3498 = vsel %vm333, %v3490, %v2245
  %v3499 = vsel %vm333, %v3491, %v2247
  %v3500 = vsel %vm333, %v3492, %v2249
  %v3501 = vsel %vm333, %v3493, %v2251
  %v3502 = vsel %vm333, %v3494, %v2253
  %v3503 = vmul.f32 %v2272, %v3479
  %v3504 = vmul.f32 %v2276, %v3480
  %v3505 = vmul.f32 %v2280, %v3481
  %v3506 = vmul.f32 %v2284, %v3482
  %v3507 = vmul.f32 %v2288, %v3483
  %v3508 = vmul.f32 %v2292, %v3484
  %v3509 = vmul.f32 %v2296, %v3485
  %v3510 = vmul.f32 %v2300, %v3486
  %v3511 = vsel %vm333, %v3503, %v2311
  %v3512 = vsel %vm333, %v3504, %v2313
  %v3513 = vsel %vm333, %v3505, %v2315
  %v3514 = vsel %vm333, %v3506, %v2317
  %v3515 = vsel %vm333, %v3507, %v2319
  %v3516 = vsel %vm333, %v3508, %v2321
  %v3517 = vsel %vm333, %v3509, %v2323
  %v3518 = vsel %vm333, %v3510, %v2325
  %3519 = vmatprep.subr.mxu0 0.0
  %3520 = vmatpush1.msra.mxu0 0.0
  %3521 = vmatprep.subr.mxu0 0.0
  %3522 = vmatpush1.msra.mxu0 0.0
  %3523 = vmatprep.subr.mxu0 0.0
  %3524 = vmatpush1.msra.mxu0 0.0
  %3525 = vmatprep.subr.mxu0 0.0
  %3526 = vmatpush1.msra.mxu0 0.0
  %3527 = vmatprep.subr.mxu0 0.0
  %3528 = vmatpush1.msra.mxu0 0.0
  %3529 = vmatprep.subr.mxu0 0.0
  %3530 = vmatpush1.msra.mxu0 0.0
  %3531 = vmatprep.subr.mxu0 0.0
  %3532 = vmatpush1.msra.mxu0 0.0
  %3533 = vmatprep.subr.mxu0 0.0
  %3534 = vmatpush1.msra.mxu0 0.0
  %3535 = vmatprep.subr.mxu0 0.0
  %3536 = vmatpush1.msra.mxu0 %v3518
  %3537 = vmatprep.subr.mxu0 0.0
  %3538 = vmatpush1.msra.mxu0 %v3517
  %3539 = vmatprep.subr.mxu0 0.0
  %3540 = vmatpush1.msra.mxu0 %v3516
  %3541 = vmatprep.subr.mxu0 0.0
  %3542 = vmatpush1.msra.mxu0 %v3515
  %3543 = vmatprep.subr.mxu0 0.0
  %3544 = vmatpush1.msra.mxu0 %v3514
  %3545 = vmatprep.subr.mxu0 0.0
  %3546 = vmatpush1.msra.mxu0 %v3513
  %3547 = vmatprep.subr.mxu0 0.0
  %3548 = vmatpush1.msra.mxu0 %v3512
  %3549 = vmatprep.subr.mxu0 0.0
  %3550 = vmatpush1.msra.mxu0 %v3511
  %3551 = vmatprep.subr.mxu0 0.0
  %3552 = vmatpush2.msra.mxu0 0.0
  %3553 = vmatprep.subr.mxu0 0.0
  %3554 = vmatpush2.msra.mxu0 0.0
  %3555 = vmatprep.subr.mxu0 0.0
  %3556 = vmatpush2.msra.mxu0 0.0
  %3557 = vmatprep.subr.mxu0 0.0
  %3558 = vmatpush2.msra.mxu0 0.0
  %3559 = vmatprep.subr.mxu0 0.0
  %3560 = vmatpush2.msra.mxu0 0.0
  %3561 = vmatprep.subr.mxu0 0.0
  %3562 = vmatpush2.msra.mxu0 0.0
  %3563 = vmatprep.subr.mxu0 0.0
  %3564 = vmatpush2.msra.mxu0 0.0
  %3565 = vmatprep.subr.mxu0 0.0
  %3566 = vmatpush2.msra.mxu0 0.0
  %3567 = vmatprep.subr.mxu0 0.0
  %3568 = vmatpush2.msra.mxu0 0.0
  %3569 = vmatprep.subr.mxu0 0.0
  %3570 = vmatpush2.msra.mxu0 0.0
  %3571 = vmatprep.subr.mxu0 0.0
  %3572 = vmatpush2.msra.mxu0 0.0
  %3573 = vmatprep.subr.mxu0 0.0
  %3574 = vmatpush2.msra.mxu0 0.0
  %3575 = vmatprep.subr.mxu0 0.0
  %3576 = vmatpush2.msra.mxu0 0.0
  %3577 = vmatprep.subr.mxu0 0.0
  %3578 = vmatpush2.msra.mxu0 0.0
  %3579 = vmatprep.subr.mxu0 0.0
  %3580 = vmatpush2.msra.mxu0 0.0
  %3581 = vmatprep.subr.mxu0 0.0
  %3582 = vmatpush2.msra.mxu0 0.0
  %3583 = vmatprep.mubr.f32.mxu0 0.0
  %3584 = vmatmul.mubr.f32.gmra.mxu0 %v2344
  %v3585 = vpop.f32.mrf.mxu0
  %v3586 = vadd.f32 0.0, %v3585
  %v3587 = vpop.f32.mrf.mxu0
  %3588 = vmatprep.mubr.f32.mxu0 0.0
  %3589 = vmatmul.mubr.f32.gmra.mxu0 %v2347
  %v3590 = vpop.f32.mrf.mxu0
  %v3591 = vadd.f32 0.0, %v3590
  %v3592 = vpop.f32.mrf.mxu0
  %3593 = vmatprep.mubr.f32.mxu0 0.0
  %3594 = vmatmul.mubr.f32.gmra.mxu0 %v2350
  %v3595 = vpop.f32.mrf.mxu0
  %v3596 = vadd.f32 0.0, %v3595
  %v3597 = vpop.f32.mrf.mxu0
  %3598 = vmatprep.mubr.f32.mxu0 0.0
  %3599 = vmatmul.mubr.f32.gmra.mxu0 %v2353
  %v3600 = vpop.f32.mrf.mxu0
  %v3601 = vadd.f32 0.0, %v3600
  %v3602 = vpop.f32.mrf.mxu0
  %3603 = vdwg.mxu0
  %3604 = vmatprep.subr.mxu0 0.0
  %3605 = vmatpush1.msra.mxu0 0.0
  %3606 = vmatprep.subr.mxu0 0.0
  %3607 = vmatpush1.msra.mxu0 0.0
  %3608 = vmatprep.subr.mxu0 0.0
  %3609 = vmatpush1.msra.mxu0 0.0
  %3610 = vmatprep.subr.mxu0 0.0
  %3611 = vmatpush1.msra.mxu0 0.0
  %3612 = vmatprep.subr.mxu0 0.0
  %3613 = vmatpush1.msra.mxu0 0.0
  %3614 = vmatprep.subr.mxu0 0.0
  %3615 = vmatpush1.msra.mxu0 0.0
  %3616 = vmatprep.subr.mxu0 0.0
  %3617 = vmatpush1.msra.mxu0 0.0
  %3618 = vmatprep.subr.mxu0 0.0
  %3619 = vmatpush1.msra.mxu0 0.0
  %3620 = vmatprep.subr.mxu0 0.0
  %3621 = vmatpush1.msra.mxu0 %v3502
  %3622 = vmatprep.subr.mxu0 0.0
  %3623 = vmatpush1.msra.mxu0 %v3501
  %3624 = vmatprep.subr.mxu0 0.0
  %3625 = vmatpush1.msra.mxu0 %v3500
  %3626 = vmatprep.subr.mxu0 0.0
  %3627 = vmatpush1.msra.mxu0 %v3499
  %3628 = vmatprep.subr.mxu0 0.0
  %3629 = vmatpush1.msra.mxu0 %v3498
  %3630 = vmatprep.subr.mxu0 0.0
  %3631 = vmatpush1.msra.mxu0 %v3497
  %3632 = vmatprep.subr.mxu0 0.0
  %3633 = vmatpush1.msra.mxu0 %v3496
  %3634 = vmatprep.subr.mxu0 0.0
  %3635 = vmatpush1.msra.mxu0 %v3495
  %3636 = vmatprep.subr.mxu0 0.0
  %3637 = vmatpush2.msra.mxu0 0.0
  %3638 = vmatprep.subr.mxu0 0.0
  %3639 = vmatpush2.msra.mxu0 0.0
  %3640 = vmatprep.subr.mxu0 0.0
  %3641 = vmatpush2.msra.mxu0 0.0
  %3642 = vmatprep.subr.mxu0 0.0
  %3643 = vmatpush2.msra.mxu0 0.0
  %3644 = vmatprep.subr.mxu0 0.0
  %3645 = vmatpush2.msra.mxu0 0.0
  %3646 = vmatprep.subr.mxu0 0.0
  %3647 = vmatpush2.msra.mxu0 0.0
  %3648 = vmatprep.subr.mxu0 0.0
  %3649 = vmatpush2.msra.mxu0 0.0
  %3650 = vmatprep.subr.mxu0 0.0
  %3651 = vmatpush2.msra.mxu0 0.0
  %3652 = vmatprep.subr.mxu0 0.0
  %3653 = vmatpush2.msra.mxu0 0.0
  %3654 = vmatprep.subr.mxu0 0.0
  %3655 = vmatpush2.msra.mxu0 0.0
  %3656 = vmatprep.subr.mxu0 0.0
  %3657 = vmatpush2.msra.mxu0 0.0
  %3658 = vmatprep.subr.mxu0 0.0
  %3659 = vmatpush2.msra.mxu0 0.0
  %3660 = vmatprep.subr.mxu0 0.0
  %3661 = vmatpush2.msra.mxu0 0.0
  %3662 = vmatprep.subr.mxu0 0.0
  %3663 = vmatpush2.msra.mxu0 0.0
  %3664 = vmatprep.subr.mxu0 0.0
  %3665 = vmatpush2.msra.mxu0 0.0
  %3666 = vmatprep.subr.mxu0 0.0
  %3667 = vmatpush2.msra.mxu0 0.0
  %3668 = vmatprep.mubr.f32.mxu0 0.0
  %3669 = vmatmul.mubr.f32.gmra.mxu0 %v2441
  %v3670 = vpop.f32.mrf.mxu0
  %v3671 = vadd.f32 %v3586, %v3670
  %v3672 = vpop.f32.mrf.mxu0
  %3673 = vmatprep.mubr.f32.mxu0 0.0
  %3674 = vmatmul.mubr.f32.gmra.mxu0 %v2444
  %v3675 = vpop.f32.mrf.mxu0
  %v3676 = vadd.f32 %v3591, %v3675
  %v3677 = vpop.f32.mrf.mxu0
  %3678 = vmatprep.mubr.f32.mxu0 0.0
  %3679 = vmatmul.mubr.f32.gmra.mxu0 %v2447
  %v3680 = vpop.f32.mrf.mxu0
  %v3681 = vadd.f32 %v3596, %v3680
  %v3682 = vpop.f32.mrf.mxu0
  %3683 = vmatprep.mubr.f32.mxu0 0.0
  %3684 = vmatmul.mubr.f32.gmra.mxu0 %v2450
  %v3685 = vpop.f32.mrf.mxu0
  %v3686 = vadd.f32 %v3601, %v3685
  %v3687 = vpop.f32.mrf.mxu0
  %3688 = vdwg.mxu0
  %v3689 = vadd.f32 %v3467, %v3671
  %v3690 = vadd.f32 %v3468, %v3676
  %v3691 = vadd.f32 %v3469, %v3681
  %v3692 = vadd.f32 %v3470, %v3686
  %v3693 = vadd.f32 %v3671, 1.0
  %v3694 = vadd.f32 %v3676, 1.0
  %v3695 = vadd.f32 %v3681, 1.0
  %v3696 = vadd.f32 %v3686, 1.0
  %v3697 = vrcp.pop %v3693
  %v3698 = vrcp.pop %v3694
  %v3699 = vrcp.pop %v3695
  %v3700 = vrcp.pop %v3696
  %3702 = vset.pattern.permute.xlu0 16
  %3703 = vperm.xlu0 %3702, %v3697
  %v3704 = vpop.permute.xlu0 %3703
  %3707 = vset.pattern.permute.xlu0 16
  %3708 = vperm.xlu0 %3707, %v3698
  %v3709 = vpop.permute.xlu0 %3708
  %3712 = vset.pattern.permute.xlu0 16
  %3713 = vperm.xlu0 %3712, %v3699
  %v3714 = vpop.permute.xlu0 %3713
  %3717 = vset.pattern.permute.xlu0 16
  %3718 = vperm.xlu0 %3717, %v3700
  %v3719 = vpop.permute.xlu0 %3718
  %v3721 = vmul.f32 %v3689, %v3704
  %v3722 = vmul.f32 %v3690, %v3709
  %v3723 = vmul.f32 %v3691, %v3714
  %v3724 = vmul.f32 %v3692, %v3719
  %v3725 = vadd.f32 %v3721, %v2585
  %v3726 = vadd.f32 %v3722, %v2586
  %v3727 = vadd.f32 %v3723, %v2587
  %v3728 = vadd.f32 %v3724, %v2588
  %vm3729 = vcmp.ge.f32.partialorder %v3725, 0.0
  %vm3730 = vcmp.ge.f32.partialorder %v3726, 0.0
  %vm3731 = vcmp.ge.f32.partialorder %v3727, 0.0
  %vm3732 = vcmp.ge.f32.partialorder %v3728, 0.0
  %v3733 = vmul.f32 %v3725, 0.01
  %v3734 = vmul.f32 %v3726, 0.01
  %v3735 = vmul.f32 %v3727, 0.01
  %v3736 = vmul.f32 %v3728, 0.01
  %v3737 = vsel %vm3729, %v3725, %v3733
  %v3738 = vsel %vm3730, %v3726, %v3734
  %v3739 = vsel %vm3731, %v3727, %v3735
  %v3740 = vsel %vm3732, %v3728, %v3736
  %3741 = vmatprep.subr.mxu0 0.0
  %3742 = vmatpush1.msra.mxu0 0.0
  %3743 = vmatprep.subr.mxu0 0.0
  %3744 = vmatpush1.msra.mxu0 0.0
  %3745 = vmatprep.subr.mxu0 0.0
  %3746 = vmatpush1.msra.mxu0 0.0
  %3747 = vmatprep.subr.mxu0 0.0
  %3748 = vmatpush1.msra.mxu0 0.0
  %3749 = vmatprep.subr.mxu0 0.0
  %3750 = vmatpush1.msra.mxu0 0.0
  %3751 = vmatprep.subr.mxu0 0.0
  %3752 = vmatpush1.msra.mxu0 0.0
  %3753 = vmatprep.subr.mxu0 0.0
  %3754 = vmatpush1.msra.mxu0 0.0
  %3755 = vmatprep.subr.mxu0 0.0
  %3756 = vmatpush1.msra.mxu0 0.0
  %3757 = vmatprep.subr.mxu0 0.0
  %3758 = vmatpush1.msra.mxu0 0.0
  %3759 = vmatprep.subr.mxu0 0.0
  %3760 = vmatpush1.msra.mxu0 0.0
  %3761 = vmatprep.subr.mxu0 0.0
  %3762 = vmatpush1.msra.mxu0 0.0
  %3763 = vmatprep.subr.mxu0 0.0
  %3764 = vmatpush1.msra.mxu0 0.0
  %3765 = vmatprep.subr.mxu0 0.0
  %3766 = vmatpush1.msra.mxu0 %v3740
  %3767 = vmatprep.subr.mxu0 0.0
  %3768 = vmatpush1.msra.mxu0 %v3739
  %3769 = vmatprep.subr.mxu0 0.0
  %3770 = vmatpush1.msra.mxu0 %v3738
  %3771 = vmatprep.subr.mxu0 0.0
  %3772 = vmatpush1.msra.mxu0 %v3737
  %3773 = vmatprep.subr.mxu0 0.0
  %3774 = vmatpush2.msra.mxu0 0.0
  %3775 = vmatprep.subr.mxu0 0.0
  %3776 = vmatpush2.msra.mxu0 0.0
  %3777 = vmatprep.subr.mxu0 0.0
  %3778 = vmatpush2.msra.mxu0 0.0
  %3779 = vmatprep.subr.mxu0 0.0
  %3780 = vmatpush2.msra.mxu0 0.0
  %3781 = vmatprep.subr.mxu0 0.0
  %3782 = vmatpush2.msra.mxu0 0.0
  %3783 = vmatprep.subr.mxu0 0.0
  %3784 = vmatpush2.msra.mxu0 0.0
  %3785 = vmatprep.subr.mxu0 0.0
  %3786 = vmatpush2.msra.mxu0 0.0
  %3787 = vmatprep.subr.mxu0 0.0
  %3788 = vmatpush2.msra.mxu0 0.0
  %3789 = vmatprep.subr.mxu0 0.0
  %3790 = vmatpush2.msra.mxu0 0.0
  %3791 = vmatprep.subr.mxu0 0.0
  %3792 = vmatpush2.msra.mxu0 0.0
  %3793 = vmatprep.subr.mxu0 0.0
  %3794 = vmatpush2.msra.mxu0 0.0
  %3795 = vmatprep.subr.mxu0 0.0
  %3796 = vmatpush2.msra.mxu0 0.0
  %3797 = vmatprep.subr.mxu0 0.0
  %3798 = vmatpush2.msra.mxu0 0.0
  %3799 = vmatprep.subr.mxu0 0.0
  %3800 = vmatpush2.msra.mxu0 0.0
  %3801 = vmatprep.subr.mxu0 0.0
  %3802 = vmatpush2.msra.mxu0 0.0
  %3803 = vmatprep.subr.mxu0 0.0
  %3804 = vmatpush2.msra.mxu0 0.0
  %3805 = vmatprep.mubr.f32.mxu0 0.0
  %3806 = vmatmul.mubr.f32.gmra.mxu0 %v1251
  %v3807 = vpop.f32.mrf.mxu0
  %v3808 = vadd.f32 0.0, %v3807
  %v3809 = vpop.f32.mrf.mxu0
  %3810 = vmatprep.mubr.f32.mxu0 0.0
  %3811 = vmatmul.mubr.f32.gmra.mxu0 %v1254
  %v3812 = vpop.f32.mrf.mxu0
  %v3813 = vadd.f32 0.0, %v3812
  %v3814 = vpop.f32.mrf.mxu0
  %3815 = vmatprep.mubr.f32.mxu0 0.0
  %3816 = vmatmul.mubr.f32.gmra.mxu0 %v1257
  %v3817 = vpop.f32.mrf.mxu0
  %v3818 = vadd.f32 0.0, %v3817
  %v3819 = vpop.f32.mrf.mxu0
  %3820 = vmatprep.mubr.f32.mxu0 0.0
  %3821 = vmatmul.mubr.f32.gmra.mxu0 %v1260
  %v3822 = vpop.f32.mrf.mxu0
  %v3823 = vadd.f32 0.0, %v3822
  %v3824 = vpop.f32.mrf.mxu0
  %3825 = vmatprep.mubr.f32.mxu0 0.0
  %3826 = vmatmul.mubr.f32.gmra.mxu0 %v1263
  %v3827 = vpop.f32.mrf.mxu0
  %v3828 = vadd.f32 0.0, %v3827
  %v3829 = vpop.f32.mrf.mxu0
  %3830 = vmatprep.mubr.f32.mxu0 0.0
  %3831 = vmatmul.mubr.f32.gmra.mxu0 %v1266
  %v3832 = vpop.f32.mrf.mxu0
  %v3833 = vadd.f32 0.0, %v3832
  %v3834 = vpop.f32.mrf.mxu0
  %3835 = vmatprep.mubr.f32.mxu0 0.0
  %3836 = vmatmul.mubr.f32.gmra.mxu0 %v1269
  %v3837 = vpop.f32.mrf.mxu0
  %v3838 = vadd.f32 0.0, %v3837
  %v3839 = vpop.f32.mrf.mxu0
  %3840 = vmatprep.mubr.f32.mxu0 0.0
  %3841 = vmatmul.mubr.f32.gmra.mxu0 %v1272
  %v3842 = vpop.f32.mrf.mxu0
  %v3843 = vadd.f32 0.0, %v3842
  %v3844 = vpop.f32.mrf.mxu0
  %3845 = vdwg.mxu0
  %3846 = vmatprep.subr.mxu0 0.0
  %3847 = vmatpush1.msra.mxu0 0.0
  %3848 = vmatprep.subr.mxu0 0.0
  %3849 = vmatpush1.msra.mxu0 0.0
  %3850 = vmatprep.subr.mxu0 0.0
  %3851 = vmatpush1.msra.mxu0 0.0
  %3852 = vmatprep.subr.mxu0 0.0
  %3853 = vmatpush1.msra.mxu0 0.0
  %3854 = vmatprep.subr.mxu0 0.0
  %3855 = vmatpush1.msra.mxu0 0.0
  %3856 = vmatprep.subr.mxu0 0.0
  %3857 = vmatpush1.msra.mxu0 0.0
  %3858 = vmatprep.subr.mxu0 0.0
  %3859 = vmatpush1.msra.mxu0 0.0
  %3860 = vmatprep.subr.mxu0 0.0
  %3861 = vmatpush1.msra.mxu0 0.0
  %3862 = vmatprep.subr.mxu0 0.0
  %3863 = vmatpush1.msra.mxu0 0.0
  %3864 = vmatprep.subr.mxu0 0.0
  %3865 = vmatpush1.msra.mxu0 0.0
  %3866 = vmatprep.subr.mxu0 0.0
  %3867 = vmatpush1.msra.mxu0 0.0
  %3868 = vmatprep.subr.mxu0 0.0
  %3869 = vmatpush1.msra.mxu0 0.0
  %3870 = vmatprep.subr.mxu0 0.0
  %3871 = vmatpush1.msra.mxu0 %v3740
  %3872 = vmatprep.subr.mxu0 0.0
  %3873 = vmatpush1.msra.mxu0 %v3739
  %3874 = vmatprep.subr.mxu0 0.0
  %3875 = vmatpush1.msra.mxu0 %v3738
  %3876 = vmatprep.subr.mxu0 0.0
  %3877 = vmatpush1.msra.mxu0 %v3737
  %3878 = vmatprep.subr.mxu0 0.0
  %3879 = vmatpush2.msra.mxu0 0.0
  %3880 = vmatprep.subr.mxu0 0.0
  %3881 = vmatpush2.msra.mxu0 0.0
  %3882 = vmatprep.subr.mxu0 0.0
  %3883 = vmatpush2.msra.mxu0 0.0
  %3884 = vmatprep.subr.mxu0 0.0
  %3885 = vmatpush2.msra.mxu0 0.0
  %3886 = vmatprep.subr.mxu0 0.0
  %3887 = vmatpush2.msra.mxu0 0.0
  %3888 = vmatprep.subr.mxu0 0.0
  %3889 = vmatpush2.msra.mxu0 0.0
  %3890 = vmatprep.subr.mxu0 0.0
  %3891 = vmatpush2.msra.mxu0 0.0
  %3892 = vmatprep.subr.mxu0 0.0
  %3893 = vmatpush2.msra.mxu0 0.0
  %3894 = vmatprep.subr.mxu0 0.0
  %3895 = vmatpush2.msra.mxu0 0.0
  %3896 = vmatprep.subr.mxu0 0.0
  %3897 = vmatpush2.msra.mxu0 0.0
  %3898 = vmatprep.subr.mxu0 0.0
  %3899 = vmatpush2.msra.mxu0 0.0
  %3900 = vmatprep.subr.mxu0 0.0
  %3901 = vmatpush2.msra.mxu0 0.0
  %3902 = vmatprep.subr.mxu0 0.0
  %3903 = vmatpush2.msra.mxu0 0.0
  %3904 = vmatprep.subr.mxu0 0.0
  %3905 = vmatpush2.msra.mxu0 0.0
  %3906 = vmatprep.subr.mxu0 0.0
  %3907 = vmatpush2.msra.mxu0 0.0
  %3908 = vmatprep.subr.mxu0 0.0
  %3909 = vmatpush2.msra.mxu0 0.0
  %3910 = vmatprep.mubr.f32.mxu0 0.0
  %3911 = vmatmul.mubr.f32.gmra.mxu0 %v1380
  %v3912 = vpop.f32.mrf.mxu0
  %v3913 = vadd.f32 0.0, %v3912
  %v3914 = vpop.f32.mrf.mxu0
  %3915 = vmatprep.mubr.f32.mxu0 0.0
  %3916 = vmatmul.mubr.f32.gmra.mxu0 %v1383
  %v3917 = vpop.f32.mrf.mxu0
  %v3918 = vadd.f32 0.0, %v3917
  %v3919 = vpop.f32.mrf.mxu0
  %3920 = vmatprep.mubr.f32.mxu0 0.0
  %3921 = vmatmul.mubr.f32.gmra.mxu0 %v1386
  %v3922 = vpop.f32.mrf.mxu0
  %v3923 = vadd.f32 0.0, %v3922
  %v3924 = vpop.f32.mrf.mxu0
  %3925 = vmatprep.mubr.f32.mxu0 0.0
  %3926 = vmatmul.mubr.f32.gmra.mxu0 %v1389
  %v3927 = vpop.f32.mrf.mxu0
  %v3928 = vadd.f32 0.0, %v3927
  %v3929 = vpop.f32.mrf.mxu0
  %3930 = vmatprep.mubr.f32.mxu0 0.0
  %3931 = vmatmul.mubr.f32.gmra.mxu0 %v1392
  %v3932 = vpop.f32.mrf.mxu0
  %v3933 = vadd.f32 0.0, %v3932
  %v3934 = vpop.f32.mrf.mxu0
  %3935 = vmatprep.mubr.f32.mxu0 0.0
  %3936 = vmatmul.mubr.f32.gmra.mxu0 %v1395
  %v3937 = vpop.f32.mrf.mxu0
  %v3938 = vadd.f32 0.0, %v3937
  %v3939 = vpop.f32.mrf.mxu0
  %3940 = vmatprep.mubr.f32.mxu0 0.0
  %3941 = vmatmul.mubr.f32.gmra.mxu0 %v1398
  %v3942 = vpop.f32.mrf.mxu0
  %v3943 = vadd.f32 0.0, %v3942
  %v3944 = vpop.f32.mrf.mxu0
  %3945 = vmatprep.mubr.f32.mxu0 0.0
  %3946 = vmatmul.mubr.f32.gmra.mxu0 %v1401
  %v3947 = vpop.f32.mrf.mxu0
  %v3948 = vadd.f32 0.0, %v3947
  %v3949 = vpop.f32.mrf.mxu0
  %3950 = vdwg.mxu0
  %3959 = vrot.lane.b32.xlu0 %v3913, 16
  %v3960 = vpop.permute.xlu0 %3959
  %3961 = vrot.lane.b32.xlu0 %v3918, 16
  %v3962 = vpop.permute.xlu0 %3961
  %3963 = vrot.lane.b32.xlu0 %v3923, 16
  %v3964 = vpop.permute.xlu0 %3963
  %3965 = vrot.lane.b32.xlu0 %v3928, 16
  %v3966 = vpop.permute.xlu0 %3965
  %3967 = vrot.lane.b32.xlu0 %v3933, 16
  %v3968 = vpop.permute.xlu0 %3967
  %3969 = vrot.lane.b32.xlu0 %v3938, 16
  %v3970 = vpop.permute.xlu0 %3969
  %3971 = vrot.lane.b32.xlu0 %v3943, 16
  %v3972 = vpop.permute.xlu0 %3971
  %3973 = vrot.lane.b32.xlu0 %v3948, 16
  %v3974 = vpop.permute.xlu0 %3973
  %3983 = vrot.lane.b32.xlu0 %v479, 32
  %v3984 = vpop.permute.xlu0 %3983
  %3985 = vrot.lane.b32.xlu0 %v480, 32
  %v3986 = vpop.permute.xlu0 %3985
  %3987 = vrot.lane.b32.xlu0 %v481, 32
  %v3988 = vpop.permute.xlu0 %3987
  %3989 = vrot.lane.b32.xlu0 %v482, 32
  %v3990 = vpop.permute.xlu0 %3989
  %3991 = vrot.lane.b32.xlu0 %v483, 32
  %v3992 = vpop.permute.xlu0 %3991
  %3993 = vrot.lane.b32.xlu0 %v484, 32
  %v3994 = vpop.permute.xlu0 %3993
  %3995 = vrot.lane.b32.xlu0 %v485, 32
  %v3996 = vpop.permute.xlu0 %3995
  %3997 = vrot.lane.b32.xlu0 %v486, 32
  %v3998 = vpop.permute.xlu0 %3997
  %4007 = vrot.lane.b32.xlu0 %v154, 48
  %v4008 = vpop.permute.xlu0 %4007
  %4009 = vrot.lane.b32.xlu0 %v155, 48
  %v4010 = vpop.permute.xlu0 %4009
  %4011 = vrot.lane.b32.xlu0 %v156, 48
  %v4012 = vpop.permute.xlu0 %4011
  %4013 = vrot.lane.b32.xlu0 %v157, 48
  %v4014 = vpop.permute.xlu0 %4013
  %4015 = vrot.lane.b32.xlu0 %v158, 48
  %v4016 = vpop.permute.xlu0 %4015
  %4017 = vrot.lane.b32.xlu0 %v159, 48
  %v4018 = vpop.permute.xlu0 %4017
  %4019 = vrot.lane.b32.xlu0 %v160, 48
  %v4020 = vpop.permute.xlu0 %4019
  %4021 = vrot.lane.b32.xlu0 %v161, 48
  %v4022 = vpop.permute.xlu0 %4021
  %v4031 = vsel %vm333, %v3808, %v3960
  %v4032 = vsel %vm333, %v3813, %v3962
  %v4033 = vsel %vm333, %v3818, %v3964
  %v4034 = vsel %vm333, %v3823, %v3966
  %v4035 = vsel %vm333, %v3828, %v3968
  %v4036 = vsel %vm333, %v3833, %v3970
  %v4037 = vsel %vm333, %v3838, %v3972
  %v4038 = vsel %vm333, %v3843, %v3974
  %v4039 = vsel %vm656, %v4031, %v3984
  %v4040 = vsel %vm656, %v4032, %v3986
  %v4041 = vsel %vm656, %v4033, %v3988
  %v4042 = vsel %vm656, %v4034, %v3990
  %v4043 = vsel %vm656, %v4035, %v3992
  %v4044 = vsel %vm656, %v4036, %v3994
  %v4045 = vsel %vm656, %v4037, %v3996
  %v4046 = vsel %vm656, %v4038, %v3998
  %vm4047 = vcmask 392192
  %v4048 = vsel %vm4047, %v4039, %v4008
  %v4049 = vsel %vm4047, %v4040, %v4010
  %v4050 = vsel %vm4047, %v4041, %v4012
  %v4051 = vsel %vm4047, %v4042, %v4014
  %v4052 = vsel %vm4047, %v4043, %v4016
  %v4053 = vsel %vm4047, %v4044, %v4018
  %v4054 = vsel %vm4047, %v4045, %v4020
  %v4055 = vsel %vm4047, %v4046, %v4022
  %v4056 = vld [vmem:[%s4 + $0x148] sm:$0xff]
  %v4057 = vld [vmem:[%s4 + $0x150] sm:$0xff]
  %v4058 = vld [vmem:[%s4 + $0x158] sm:$0xff]
  %v4059 = vld [vmem:[%s4 + $0x160] sm:$0xff]
  %v4060 = vld [vmem:[%s4 + $0x168] sm:$0xff]
  %v4061 = vld [vmem:[%s4 + $0x170] sm:$0xff]
  %v4062 = vld [vmem:[%s4 + $0x178] sm:$0xff]
  %v4063 = vld [vmem:[%s4 + $0x180] sm:$0xf]
  %v4064 = vld [vmem:[%s4 + $0x188] sm:$0x1]
  %v4065 = vlaneseq
  %v4066 = vshrl.u32 %v4065, 7
  %v4067 = vsub.s32 0, %v4066
  %v4068 = vrot.slane %v4064, %v4067
  %vm4069 = vcmask 490496
  %v4071 = vsel %vm4069, %v4048, 0
  %v4074 = vsel %vm4069, %v4049, 0
  %v4077 = vsel %vm4069, %v4050, 0
  %v4080 = vsel %vm4069, %v4051, 0
  %v4083 = vsel %vm4069, %v4052, 0
  %v4086 = vsel %vm4069, %v4053, 0
  %v4089 = vsel %vm4069, %v4054, 0
  %v4092 = vsel %vm4069, %v4055, 0
  %v4095 = vsel %vm193, %v4063, 0
  %4097 = vmatprep.subr.mxu0 0.0
  %4098 = vmatpush1.msra.mxu0 0.0
  %4099 = vmatprep.subr.mxu0 0.0
  %4100 = vmatpush1.msra.mxu0 0.0
  %4101 = vmatprep.subr.mxu0 0.0
  %4102 = vmatpush1.msra.mxu0 0.0
  %4103 = vmatprep.subr.mxu0 0.0
  %4104 = vmatpush1.msra.mxu0 0.0
  %4105 = vmatprep.subr.mxu0 0.0
  %4106 = vmatpush1.msra.mxu0 0.0
  %4107 = vmatprep.subr.mxu0 0.0
  %4108 = vmatpush1.msra.mxu0 0.0
  %4109 = vmatprep.subr.mxu0 0.0
  %4110 = vmatpush1.msra.mxu0 0.0
  %4111 = vmatprep.subr.mxu0 0.0
  %4112 = vmatpush1.msra.mxu0 0.0
  %4113 = vmatprep.subr.mxu0 0.0
  %4114 = vmatpush1.msra.mxu0 %v4095
  %4115 = vmatprep.subr.mxu0 0.0
  %4116 = vmatpush1.msra.mxu0 %v4062
  %4117 = vmatprep.subr.mxu0 0.0
  %4118 = vmatpush1.msra.mxu0 %v4061
  %4119 = vmatprep.subr.mxu0 0.0
  %4120 = vmatpush1.msra.mxu0 %v4060
  %4121 = vmatprep.subr.mxu0 0.0
  %4122 = vmatpush1.msra.mxu0 %v4059
  %4123 = vmatprep.subr.mxu0 0.0
  %4124 = vmatpush1.msra.mxu0 %v4058
  %4125 = vmatprep.subr.mxu0 0.0
  %4126 = vmatpush1.msra.mxu0 %v4057
  %4127 = vmatprep.subr.mxu0 0.0
  %4128 = vmatpush1.msra.mxu0 %v4056
  %4129 = vmatprep.subr.mxu0 0.0
  %4130 = vmatpush2.msra.mxu0 0.0
  %4131 = vmatprep.subr.mxu0 0.0
  %4132 = vmatpush2.msra.mxu0 0.0
  %4133 = vmatprep.subr.mxu0 0.0
  %4134 = vmatpush2.msra.mxu0 0.0
  %4135 = vmatprep.subr.mxu0 0.0
  %4136 = vmatpush2.msra.mxu0 0.0
  %4137 = vmatprep.subr.mxu0 0.0
  %4138 = vmatpush2.msra.mxu0 0.0
  %4139 = vmatprep.subr.mxu0 0.0
  %4140 = vmatpush2.msra.mxu0 0.0
  %4141 = vmatprep.subr.mxu0 0.0
  %4142 = vmatpush2.msra.mxu0 0.0
  %4143 = vmatprep.subr.mxu0 0.0
  %4144 = vmatpush2.msra.mxu0 0.0
  %4145 = vmatprep.subr.mxu0 0.0
  %4146 = vmatpush2.msra.mxu0 0.0
  %4147 = vmatprep.subr.mxu0 0.0
  %4148 = vmatpush2.msra.mxu0 0.0
  %4149 = vmatprep.subr.mxu0 0.0
  %4150 = vmatpush2.msra.mxu0 0.0
  %4151 = vmatprep.subr.mxu0 0.0
  %4152 = vmatpush2.msra.mxu0 0.0
  %4153 = vmatprep.subr.mxu0 0.0
  %4154 = vmatpush2.msra.mxu0 0.0
  %4155 = vmatprep.subr.mxu0 0.0
  %4156 = vmatpush2.msra.mxu0 0.0
  %4157 = vmatprep.subr.mxu0 0.0
  %4158 = vmatpush2.msra.mxu0 0.0
  %4159 = vmatprep.subr.mxu0 0.0
  %4160 = vmatpush2.msra.mxu0 0.0
  %4161 = vmatprep.mubr.f32.mxu0 0.0
  %4162 = vmatmul.mubr.f32.gmra.mxu0 %v4071
  %v4163 = vpop.f32.mrf.mxu0
  %v4164 = vadd.f32 %v4068, %v4163
  %v4165 = vpop.f32.mrf.mxu0
  %4166 = vmatprep.mubr.f32.mxu0 0.0
  %4167 = vmatmul.mubr.f32.gmra.mxu0 %v4074
  %v4168 = vpop.f32.mrf.mxu0
  %v4169 = vadd.f32 %v4068, %v4168
  %v4170 = vpop.f32.mrf.mxu0
  %4171 = vmatprep.mubr.f32.mxu0 0.0
  %4172 = vmatmul.mubr.f32.gmra.mxu0 %v4077
  %v4173 = vpop.f32.mrf.mxu0
  %v4174 = vadd.f32 %v4068, %v4173
  %v4175 = vpop.f32.mrf.mxu0
  %4176 = vmatprep.mubr.f32.mxu0 0.0
  %4177 = vmatmul.mubr.f32.gmra.mxu0 %v4080
  %v4178 = vpop.f32.mrf.mxu0
  %v4179 = vadd.f32 %v4068, %v4178
  %v4180 = vpop.f32.mrf.mxu0
  %4181 = vmatprep.mubr.f32.mxu0 0.0
  %4182 = vmatmul.mubr.f32.gmra.mxu0 %v4083
  %v4183 = vpop.f32.mrf.mxu0
  %v4184 = vadd.f32 %v4068, %v4183
  %v4185 = vpop.f32.mrf.mxu0
  %4186 = vmatprep.mubr.f32.mxu0 0.0
  %4187 = vmatmul.mubr.f32.gmra.mxu0 %v4086
  %v4188 = vpop.f32.mrf.mxu0
  %v4189 = vadd.f32 %v4068, %v4188
  %v4190 = vpop.f32.mrf.mxu0
  %4191 = vmatprep.mubr.f32.mxu0 0.0
  %4192 = vmatmul.mubr.f32.gmra.mxu0 %v4089
  %v4193 = vpop.f32.mrf.mxu0
  %v4194 = vadd.f32 %v4068, %v4193
  %v4195 = vpop.f32.mrf.mxu0
  %4196 = vmatprep.mubr.f32.mxu0 0.0
  %4197 = vmatmul.mubr.f32.gmra.mxu0 %v4092
  %v4198 = vpop.f32.mrf.mxu0
  %v4199 = vadd.f32 %v4068, %v4198
  %v4200 = vpop.f32.mrf.mxu0
  %4201 = vdwg.mxu0
  %vm4202 = vcmp.ge.f32.partialorder %v4164, 0.0
  %vm4203 = vcmp.ge.f32.partialorder %v4169, 0.0
  %vm4204 = vcmp.ge.f32.partialorder %v4174, 0.0
  %vm4205 = vcmp.ge.f32.partialorder %v4179, 0.0
  %vm4206 = vcmp.ge.f32.partialorder %v4184, 0.0
  %vm4207 = vcmp.ge.f32.partialorder %v4189, 0.0
  %vm4208 = vcmp.ge.f32.partialorder %v4194, 0.0
  %vm4209 = vcmp.ge.f32.partialorder %v4199, 0.0
  %v4210 = vmul.f32 %v4164, 0.01
  %v4211 = vmul.f32 %v4169, 0.01
  %v4212 = vmul.f32 %v4174, 0.01
  %v4213 = vmul.f32 %v4179, 0.01
  %v4214 = vmul.f32 %v4184, 0.01
  %v4215 = vmul.f32 %v4189, 0.01
  %v4216 = vmul.f32 %v4194, 0.01
  %v4217 = vmul.f32 %v4199, 0.01
  %v4218 = vsel %vm4202, %v4164, %v4210
  %v4219 = vsel %vm4203, %v4169, %v4211
  %v4220 = vsel %vm4204, %v4174, %v4212
  %v4221 = vsel %vm4205, %v4179, %v4213
  %v4222 = vsel %vm4206, %v4184, %v4214
  %v4223 = vsel %vm4207, %v4189, %v4215
  %v4224 = vsel %vm4208, %v4194, %v4216
  %v4225 = vsel %vm4209, %v4199, %v4217
  %v4226 = vld [vmem:[%s4 + $0x190] sm:$0xff]
  %v4227 = vld [vmem:[%s4 + $0x198] sm:$0xff]
  %v4228 = vld [vmem:[%s4 + $0x1a0] sm:$0x1]
  %v4229 = vlaneseq
  %v4230 = vshrl.u32 %v4229, 7
  %v4231 = vsub.s32 0, %v4230
  %v4232 = vrot.slane %v4228, %v4231
  %v4234 = vsel %vm333, %v4218, 0
  %v4237 = vsel %vm333, %v4219, 0
  %v4240 = vsel %vm333, %v4220, 0
  %v4243 = vsel %vm333, %v4221, 0
  %v4246 = vsel %vm333, %v4222, 0
  %v4249 = vsel %vm333, %v4223, 0
  %v4252 = vsel %vm333, %v4224, 0
  %v4255 = vsel %vm333, %v4225, 0
  %4257 = vmatprep.subr.mxu0 0.0
  %4258 = vmatpush1.msra.mxu0 0.0
  %4259 = vmatprep.subr.mxu0 0.0
  %4260 = vmatpush1.msra.mxu0 0.0
  %4261 = vmatprep.subr.mxu0 0.0
  %4262 = vmatpush1.msra.mxu0 0.0
  %4263 = vmatprep.subr.mxu0 0.0
  %4264 = vmatpush1.msra.mxu0 0.0
  %4265 = vmatprep.subr.mxu0 0.0
  %4266 = vmatpush1.msra.mxu0 0.0
  %4267 = vmatprep.subr.mxu0 0.0
  %4268 = vmatpush1.msra.mxu0 0.0
  %4269 = vmatprep.subr.mxu0 0.0
  %4270 = vmatpush1.msra.mxu0 0.0
  %4271 = vmatprep.subr.mxu0 0.0
  %4272 = vmatpush1.msra.mxu0 0.0
  %4273 = vmatprep.subr.mxu0 0.0
  %4274 = vmatpush1.msra.mxu0 0.0
  %4275 = vmatprep.subr.mxu0 0.0
  %4276 = vmatpush1.msra.mxu0 0.0
  %4277 = vmatprep.subr.mxu0 0.0
  %4278 = vmatpush1.msra.mxu0 0.0
  %4279 = vmatprep.subr.mxu0 0.0
  %4280 = vmatpush1.msra.mxu0 0.0
  %4281 = vmatprep.subr.mxu0 0.0
  %4282 = vmatpush1.msra.mxu0 0.0
  %4283 = vmatprep.subr.mxu0 0.0
  %4284 = vmatpush1.msra.mxu0 0.0
  %4285 = vmatprep.subr.mxu0 0.0
  %4286 = vmatpush1.msra.mxu0 %v4227
  %4287 = vmatprep.subr.mxu0 0.0
  %4288 = vmatpush1.msra.mxu0 %v4226
  %4289 = vmatprep.subr.mxu0 0.0
  %4290 = vmatpush2.msra.mxu0 0.0
  %4291 = vmatprep.subr.mxu0 0.0
  %4292 = vmatpush2.msra.mxu0 0.0
  %4293 = vmatprep.subr.mxu0 0.0
  %4294 = vmatpush2.msra.mxu0 0.0
  %4295 = vmatprep.subr.mxu0 0.0
  %4296 = vmatpush2.msra.mxu0 0.0
  %4297 = vmatprep.subr.mxu0 0.0
  %4298 = vmatpush2.msra.mxu0 0.0
  %4299 = vmatprep.subr.mxu0 0.0
  %4300 = vmatpush2.msra.mxu0 0.0
  %4301 = vmatprep.subr.mxu0 0.0
  %4302 = vmatpush2.msra.mxu0 0.0
  %4303 = vmatprep.subr.mxu0 0.0
  %4304 = vmatpush2.msra.mxu0 0.0
  %4305 = vmatprep.subr.mxu0 0.0
  %4306 = vmatpush2.msra.mxu0 0.0
  %4307 = vmatprep.subr.mxu0 0.0
  %4308 = vmatpush2.msra.mxu0 0.0
  %4309 = vmatprep.subr.mxu0 0.0
  %4310 = vmatpush2.msra.mxu0 0.0
  %4311 = vmatprep.subr.mxu0 0.0
  %4312 = vmatpush2.msra.mxu0 0.0
  %4313 = vmatprep.subr.mxu0 0.0
  %4314 = vmatpush2.msra.mxu0 0.0
  %4315 = vmatprep.subr.mxu0 0.0
  %4316 = vmatpush2.msra.mxu0 0.0
  %4317 = vmatprep.subr.mxu0 0.0
  %4318 = vmatpush2.msra.mxu0 0.0
  %4319 = vmatprep.subr.mxu0 0.0
  %4320 = vmatpush2.msra.mxu0 0.0
  %4321 = vmatprep.mubr.f32.mxu0 0.0
  %4322 = vmatmul.mubr.f32.gmra.mxu0 %v4234
  %v4323 = vpop.f32.mrf.mxu0
  %v4324 = vadd.f32 %v4232, %v4323
  %v4325 = vpop.f32.mrf.mxu0
  %4326 = vmatprep.mubr.f32.mxu0 0.0
  %4327 = vmatmul.mubr.f32.gmra.mxu0 %v4237
  %v4328 = vpop.f32.mrf.mxu0
  %v4329 = vadd.f32 %v4232, %v4328
  %v4330 = vpop.f32.mrf.mxu0
  %4331 = vmatprep.mubr.f32.mxu0 0.0
  %4332 = vmatmul.mubr.f32.gmra.mxu0 %v4240
  %v4333 = vpop.f32.mrf.mxu0
  %v4334 = vadd.f32 %v4232, %v4333
  %v4335 = vpop.f32.mrf.mxu0
  %4336 = vmatprep.mubr.f32.mxu0 0.0
  %4337 = vmatmul.mubr.f32.gmra.mxu0 %v4243
  %v4338 = vpop.f32.mrf.mxu0
  %v4339 = vadd.f32 %v4232, %v4338
  %v4340 = vpop.f32.mrf.mxu0
  %4341 = vmatprep.mubr.f32.mxu0 0.0
  %4342 = vmatmul.mubr.f32.gmra.mxu0 %v4246
  %v4343 = vpop.f32.mrf.mxu0
  %v4344 = vadd.f32 %v4232, %v4343
  %v4345 = vpop.f32.mrf.mxu0
  %4346 = vmatprep.mubr.f32.mxu0 0.0
  %4347 = vmatmul.mubr.f32.gmra.mxu0 %v4249
  %v4348 = vpop.f32.mrf.mxu0
  %v4349 = vadd.f32 %v4232, %v4348
  %v4350 = vpop.f32.mrf.mxu0
  %4351 = vmatprep.mubr.f32.mxu0 0.0
  %4352 = vmatmul.mubr.f32.gmra.mxu0 %v4252
  %v4353 = vpop.f32.mrf.mxu0
  %v4354 = vadd.f32 %v4232, %v4353
  %v4355 = vpop.f32.mrf.mxu0
  %4356 = vmatprep.mubr.f32.mxu0 0.0
  %4357 = vmatmul.mubr.f32.gmra.mxu0 %v4255
  %v4358 = vpop.f32.mrf.mxu0
  %v4359 = vadd.f32 %v4232, %v4358
  %v4360 = vpop.f32.mrf.mxu0
  %4361 = vdwg.mxu0
  %v4362 = vand.u32 2147483647, %v4324
  %v4363 = vand.u32 2147483647, %v4329
  %v4364 = vand.u32 2147483647, %v4334
  %v4365 = vand.u32 2147483647, %v4339
  %v4366 = vand.u32 2147483647, %v4344
  %v4367 = vand.u32 2147483647, %v4349
  %v4368 = vand.u32 2147483647, %v4354
  %v4369 = vand.u32 2147483647, %v4359
  %v4370 = vsub.f32 0.0, %v4362
  %v4371 = vsub.f32 0.0, %v4363
  %v4372 = vsub.f32 0.0, %v4364
  %v4373 = vsub.f32 0.0, %v4365
  %v4374 = vsub.f32 0.0, %v4366
  %v4375 = vsub.f32 0.0, %v4367
  %v4376 = vsub.f32 0.0, %v4368
  %v4377 = vsub.f32 0.0, %v4369
  %v4378 = vmul.f32 %v4370, 1.442695
  %v4379 = vpow.pop %v4378
  %v4380 = vmul.f32 %v4371, 1.442695
  %v4381 = vpow.pop %v4380
  %v4382 = vmul.f32 %v4372, 1.442695
  %v4383 = vpow.pop %v4382
  %v4384 = vmul.f32 %v4373, 1.442695
  %v4385 = vpow.pop %v4384
  %v4386 = vmul.f32 %v4374, 1.442695
  %v4387 = vpow.pop %v4386
  %v4388 = vmul.f32 %v4375, 1.442695
  %v4389 = vpow.pop %v4388
  %v4390 = vmul.f32 %v4376, 1.442695
  %v4391 = vpow.pop %v4390
  %v4392 = vmul.f32 %v4377, 1.442695
  %v4393 = vpow.pop %v4392
  %vm4394 = vcmp.ge.f32.partialorder %v4324, 0.0
  %vm4395 = vcmp.ge.f32.partialorder %v4329, 0.0
  %vm4396 = vcmp.ge.f32.partialorder %v4334, 0.0
  %vm4397 = vcmp.ge.f32.partialorder %v4339, 0.0
  %vm4398 = vcmp.ge.f32.partialorder %v4344, 0.0
  %vm4399 = vcmp.ge.f32.partialorder %v4349, 0.0
  %vm4400 = vcmp.ge.f32.partialorder %v4354, 0.0
  %vm4401 = vcmp.ge.f32.partialorder %v4359, 0.0
  %v4402 = vsel %vm4394, 1.0, %v4379
  %v4403 = vsel %vm4395, 1.0, %v4381
  %v4404 = vsel %vm4396, 1.0, %v4383
  %v4405 = vsel %vm4397, 1.0, %v4385
  %v4406 = vsel %vm4398, 1.0, %v4387
  %v4407 = vsel %vm4399, 1.0, %v4389
  %v4408 = vsel %vm4400, 1.0, %v4391
  %v4409 = vsel %vm4401, 1.0, %v4393
  %v4410 = vadd.f32 %v4379, 1.0
  %v4411 = vadd.f32 %v4381, 1.0
  %v4412 = vadd.f32 %v4383, 1.0
  %v4413 = vadd.f32 %v4385, 1.0
  %v4414 = vadd.f32 %v4387, 1.0
  %v4415 = vadd.f32 %v4389, 1.0
  %v4416 = vadd.f32 %v4391, 1.0
  %v4417 = vadd.f32 %v4393, 1.0
  %v4418 = vrcp.pop %v4410
  %v4419 = vmul.f32 %v4402, %v4418
  %v4420 = vrcp.pop %v4411
  %v4421 = vmul.f32 %v4403, %v4420
  %v4422 = vrcp.pop %v4412
  %v4423 = vmul.f32 %v4404, %v4422
  %v4424 = vrcp.pop %v4413
  %v4425 = vmul.f32 %v4405, %v4424
  %v4426 = vrcp.pop %v4414
  %v4427 = vmul.f32 %v4406, %v4426
  %v4428 = vrcp.pop %v4415
  %v4429 = vmul.f32 %v4407, %v4428
  %v4430 = vrcp.pop %v4416
  %v4431 = vmul.f32 %v4408, %v4430
  %v4432 = vrcp.pop %v4417
  %v4433 = vmul.f32 %v4409, %v4432
  %vm4434 = vcmask 7168
  %4435 = vst.msk [vmem:[%s5] sm:$0xff] %vm4434, %v4419
  %4436 = vst.msk [vmem:[%s5 + $0x8] sm:$0xff] %vm4434, %v4421
  %4437 = vst.msk [vmem:[%s5 + $0x10] sm:$0xff] %vm4434, %v4423
  %4438 = vst.msk [vmem:[%s5 + $0x18] sm:$0xff] %vm4434, %v4425
  %4439 = vst.msk [vmem:[%s5 + $0x20] sm:$0xff] %vm4434, %v4427
  %4440 = vst.msk [vmem:[%s5 + $0x28] sm:$0xff] %vm4434, %v4429
  %4441 = vst.msk [vmem:[%s5 + $0x30] sm:$0xff] %vm4434, %v4431
  %4442 = vst.msk [vmem:[%s5 + $0x38] sm:$0xff] %vm4434, %v4433
  // Predicated region
  $region22: #{tpu_custom_call.1} parent=0 // pred_check
    _
  $region23: #{tpu_custom_call.1} parent=0 // pred_check_branch
    %4444 = sbr.rel (0) target = $region25
  $region24: #{tpu_custom_call.1} parent=0 // pred_region
    _
  $region25: #{tpu_custom_call.1} parent=0 // pred_fallthru
    _
  // Predicated region
  $region26: #{tpu_custom_call.1} parent=0 // pred_check
    _
  $region27: #{tpu_custom_call.1} parent=0 // pred_check_branch
    %4446 = sbr.rel (0) target = $region29
  $region28: #{tpu_custom_call.1} parent=0 // pred_region
    _
  $region29: #{tpu_custom_call.1} parent=0 // pred_fallthru
    _

</llo_original>
